<compile_context>
chip_gen: v7x
topology: tpu7x:2x2x1
jax: 0.10.0
libtpu: 0.0.40
codegen_flags: <defaults>
</compile_context>

<pallas_src>
import math
from types import SimpleNamespace

import jax
import jax.numpy as jnp
from jax import lax
from jax.experimental import pallas as pl
from jax.experimental.pallas import tpu as pltpu

TEMB_DIM = 128   # sinusoidal time-embedding width (lane aligned)
HIDDEN = 128     # GCN hidden width (lane aligned)


def _gcn_policy_kernel(t_ref, x_ref, lap_ref, w1t_ref, wtt_ref, b1_ref,
                       w2t_ref, b2_ref, o_ref):
    """One chunk of diffusion steps, transposed (lane-dense) dataflow.

    Kernel-view shapes:
      t_ref   : SMEM [S, B]              f32  (full array, indexed by pid)
      x_ref   : VMEM [S_CHUNK, B, F, N]  f32  (x transposed: features x nodes)
      lap_ref : VMEM [N, N]              bf16 (symmetric propagation matrix)
      w1t_ref : VMEM [H, F]              bf16 (W1^T)
      wtt_ref : VMEM [H, TEMB]           bf16 (Wt^T)
      b1_ref  : VMEM [H, 1]              f32
      w2t_ref : VMEM [F, H]              bf16 (W2^T)
      b2_ref  : VMEM [F, 1]              f32
      o_ref   : VMEM [S_CHUNK, B, F, N]  f32
    """
    s_chunk, B, F, N = x_ref.shape
    SB = s_chunk * B
    half = TEMB_DIM // 2
    step0 = pl.program_id(0) * s_chunk

    # ---- time conditioning, hoisted for the whole chunk: tcond [H, SB] -----
    krow = lax.broadcasted_iota(jnp.int32, (TEMB_DIM, SB), 0)
    kf = krow.astype(jnp.float32)
    k = jnp.where(krow < half, kf, kf - half)
    freqs = jnp.exp((-math.log(10000.0) / half) * k)              # [TEMB, SB]
    col = lax.broadcasted_iota(jnp.int32, (TEMB_DIM, SB), 1)
    t_mat = jnp.zeros((TEMB_DIM, SB), jnp.float32)
    for si in range(s_chunk):                                     # static unroll
        for bi in range(B):
            t_sb = t_ref[step0 + si, bi]                          # SMEM scalar
            t_mat = jnp.where(col == si * B + bi, t_sb, t_mat)
    args = t_mat * freqs
    tembT = jnp.where(krow < half, jnp.sin(args), jnp.cos(args))  # [TEMB, SB]
    tcond = (jnp.dot(wtt_ref[...], tembT.astype(jnp.bfloat16),
                     preferred_element_type=jnp.float32)
             + b1_ref[...])                                       # [H, SB] f32

    lap = lap_ref[...]                                            # [N, N] bf16
    w1t = w1t_ref[...]                                            # [H, F] bf16
    w2t = w2t_ref[...]                                            # [F, H] bf16

    # ---- propagation 1, folded over steps & batch: P = X @ lap -------------
    # x^T @ lap == (lap @ x)^T because lap is symmetric.
    x_stack = x_ref[...].reshape(SB * F, N).astype(jnp.bfloat16)  # [SB*F, N]
    p_stack = jnp.dot(x_stack, lap, preferred_element_type=jnp.float32)

    # ---- per-(step, batch) feature mixing (shared small weights) -----------
    r_parts = []
    for c in range(SB):                                           # static unroll
        p_c = p_stack[c * F:(c + 1) * F, :].astype(jnp.bfloat16)  # [F, N]
        h = (jnp.dot(w1t, p_c, preferred_element_type=jnp.float32)
             + tcond[:, c:c + 1])                                 # [H, N] f32
        sig = 0.5 * (jnp.tanh(0.5 * h) + 1.0)                     # EUP, stable
        h = h * sig                                               # SiLU
        r_parts.append(jnp.dot(w2t, h.astype(jnp.bfloat16),
                               preferred_element_type=jnp.float32)
                       .astype(jnp.bfloat16))                     # [F, N]
    r_stack = jnp.concatenate(r_parts, axis=0)                    # [SB*F, N]

    # ---- propagation 2, folded: out = R @ lap + b2 --------------------------
    out_stack = jnp.dot(r_stack, lap, preferred_element_type=jnp.float32)
    out = out_stack.reshape(s_chunk, B, F, N) + b2_ref[...]       # bcast [F,1]
    o_ref[...] = out.astype(o_ref.dtype)


def _pick_chunk(S):
    # Keep >= 2 grid points when possible so the "parallel" step axis can
    # still shard across v7x's two TensorCores; otherwise one chunk per step.
    if S >= 2 and S % 2 == 0:
        return S // 2
    return 1


def policy_net_pallas(x_steps_T, t_steps, lap, params, s_chunk=None):
    """Run S diffusion steps in one pallas_call; weights stay VMEM-resident.

    x_steps_T: [S, B, F, N] f32 (node-transposed), t_steps: [S, B] f32.
    Returns [S, B, F, N] f32.
    """
    S, B, F, N = x_steps_T.shape
    w1t, wtt, b1, w2t, b2 = params
    H = w1t.shape[0]
    if s_chunk is None:
        s_chunk = _pick_chunk(S)
    assert S % s_chunk == 0
    const = lambda s: (0, 0)   # lap/weights: same block every chunk (1 DMA)

    grid_spec = pltpu.PrefetchScalarGridSpec(
        num_scalar_prefetch=0,
        grid=(S // s_chunk,),
        in_specs=[
            pl.BlockSpec(memory_space=pltpu.MemorySpace.SMEM),          # t
            pl.BlockSpec((s_chunk, B, F, N), lambda s: (s, 0, 0, 0)),   # x^T
            pl.BlockSpec((N, N), const),                                # lap
            pl.BlockSpec((H, F), const),                                # W1^T
            pl.BlockSpec((H, TEMB_DIM), const),                         # Wt^T
            pl.BlockSpec((H, 1), const),                                # b1
            pl.BlockSpec((F, H), const),                                # W2^T
            pl.BlockSpec((F, 1), const),                                # b2
        ],
        out_specs=pl.BlockSpec((s_chunk, B, F, N), lambda s: (s, 0, 0, 0)),
    )
    return pl.pallas_call(
        _gcn_policy_kernel,
        out_shape=jax.ShapeDtypeStruct((S, B, F, N), jnp.float32),
        grid_spec=grid_spec,
        compiler_params=pltpu.CompilerParams(
            dimension_semantics=("parallel",)),
    )(t_steps, x_steps_T, lap, w1t, wtt, b1, w2t, b2)


def _ref_net(x, t, lap, params):
    """Pure-JAX reference of the injected net (same bf16/f32 mix as kernel)."""
    w1t, wtt, b1, w2t, b2 = params
    w1, wt, w2 = w1t.T, wtt.T, w2t.T
    b1r, b2r = b1[:, 0], b2[:, 0]
    half = TEMB_DIM // 2
    j = jnp.arange(TEMB_DIM, dtype=jnp.float32)
    k = jnp.where(j < half, j, j - half)
    freqs = jnp.exp((-math.log(10000.0) / half) * k)
    args = t[:, None].astype(jnp.float32) * freqs[None, :]
    temb = jnp.where(j[None, :] < half, jnp.sin(args), jnp.cos(args))
    tproj = jnp.dot(temb.astype(jnp.bfloat16), wt,
                    preferred_element_type=jnp.float32) + b1r          # [B, H]
    xb = x.astype(jnp.bfloat16)
    p = jnp.einsum('nm,bmf->bnf', lap, xb,
                   preferred_element_type=jnp.float32)
    h = jnp.einsum('bnf,fh->bnh', p.astype(jnp.bfloat16), w1,
                   preferred_element_type=jnp.float32) + tproj[:, None, :]
    h = jax.nn.silu(h)
    r = jnp.einsum('bnh,hf->bnf', h.astype(jnp.bfloat16), w2,
                   preferred_element_type=jnp.float32)
    out = jnp.einsum('nm,bmf->bnf', lap, r.astype(jnp.bfloat16),
                     preferred_element_type=jnp.float32) + b2r
    return out


class GCNSchrodingerBridgePolicyPallas:
    """JAX/Pallas re-implementation of GCNSchrodingerBridgePolicy.forward."""

    def __init__(self, opt, direction, params, lap, use_t_idx=False):
        self.opt = opt
        self.direction = direction
        self.params = params     # (W1^T, Wt^T, b1, W2^T, b2) of injected net
        self.lap = lap           # [N, N] bf16 graph propagation matrix
        self.use_t_idx = use_t_idx
        # Transposed dataflow in the kernel relies on lap being symmetric
        # (true for the GCN symmetric-normalized propagation matrix).
        assert bool(jnp.all(lap == lap.T))

    def _rescale_t(self, t):
        # Mirrors the PyTorch module exactly: t = t / opt.T * opt.interval.
        return t / self.opt.T * self.opt.interval if self.use_t_idx else t

    def __call__(self, x, t):
        # --- exact wrapper semantics from the PyTorch module ---
        t = jnp.squeeze(t)
        if t.ndim == 0:
            t = jnp.broadcast_to(t, (x.shape[0],))
        assert t.ndim == 1 and t.shape[0] == x.shape[0]
        t = self._rescale_t(t)
        # --- self.net(x, t, self.lap): Pallas kernel (single step, S=1) ---
        # NOTE: production sampling loops should go through forward_steps();
        # a single step is launch/DMA-latency bound.
        x32 = x.astype(jnp.float32)
        xT = jnp.swapaxes(x32, -1, -2)[None]                 # [1, B, F, N]
        tS = t.astype(jnp.float32)[None]                     # [1, B]
        outT = policy_net_pallas(xT, tS, self.lap, self.params)
        return jnp.swapaxes(outT[0], -1, -2).reshape(x.shape)

    def forward_steps(self, x_steps, t_steps):
        """Amortized path: S diffusion steps in one kernel launch.

        x_steps: [S, B, N, F], t_steps: [S, B].
        """
        t_steps = self._rescale_t(t_steps.astype(jnp.float32))
        xT = jnp.swapaxes(x_steps.astype(jnp.float32), -1, -2)   # [S, B, F, N]
        outT = policy_net_pallas(xT, t_steps, self.lap, self.params)
        return jnp.swapaxes(outT, -1, -2)                        # [S, B, N, F]


def _make_lap(key, n):
    """Exactly-symmetric normalized adjacency with self loops (GCN)."""
    a = (jax.random.uniform(key, (n, n)) < 0.1).astype(jnp.float32)
    a = jnp.maximum(a, a.T) + jnp.eye(n, dtype=jnp.float32)
    d = jnp.sum(a, axis=1, keepdims=True)
    lap = a / jnp.sqrt(d * d.T)            # d*d.T keeps exact symmetry
    return lap.astype(jnp.bfloat16)        # bf16: native MXU operand dtype


def _init_params(key, feat):
    k1, k2, k3, k4, k5 = jax.random.split(key, 5)
    w1t = (0.02 * jax.random.normal(k1, (HIDDEN, feat))).astype(jnp.bfloat16)
    wtt = (0.02 * jax.random.normal(k2, (HIDDEN, TEMB_DIM))).astype(jnp.bfloat16)
    b1 = (0.01 * jax.random.normal(k3, (HIDDEN, 1))).astype(jnp.float32)
    w2t = (0.02 * jax.random.normal(k4, (feat, HIDDEN))).astype(jnp.bfloat16)
    b2 = (0.01 * jax.random.normal(k5, (feat, 1))).astype(jnp.float32)
    return (w1t, wtt, b1, w2t, b2)


if __name__ == "__main__":
    B, N, F = 2, 128, 32        # batch, graph nodes, node features

    key = jax.random.PRNGKey(0)
    kl, kp, kx, kt, ks = jax.random.split(key, 5)

    lap = _make_lap(kl, N)
    params = _init_params(kp, F)
    x = jax.random.normal(kx, (B, N, F), jnp.float32)
    # t with trailing singleton dims to exercise the squeeze path.
    t = jax.random.uniform(kt, (B, 1, 1, 1), jnp.float32)

    opt = SimpleNamespace(T=1.0, interval=100)
    policy = GCNSchrodingerBridgePolicyPallas(opt, direction="forward",
                                              params=params, lap=lap,
                                              use_t_idx=True)

    # Single forward (exact module semantics).
    out = policy(x, t)
    jax.block_until_ready(out)
    assert out.shape == x.shape and out.dtype == jnp.float32

    # Pure-JAX reference with the same bf16 operand / f32 accumulate mix.
    t_resc = jnp.squeeze(t) / opt.T * opt.interval
    ref = _ref_net(x, t_resc, lap, params)
    assert jnp.allclose(out, ref, atol=5e-3, rtol=5e-2), (
        float(jnp.max(jnp.abs(out - ref))))

    # Amortized multi-step path: 2 chunks of 2 steps (>= 2 grid points so both
    # v7x TensorCores stay busy); weights/lap DMA'd to VMEM once.
    S = 4
    kxs, kts = jax.random.split(ks)
    x_steps = jax.random.normal(kxs, (S, B, N, F), jnp.float32)
    t_steps = jax.random.uniform(kts, (S, B), jnp.float32)
    out_steps = policy.forward_steps(x_steps, t_steps)
    jax.block_until_ready(out_steps)
    assert out_steps.shape == (S, B, N, F)

    # Consistency: step 0 of the chunked call == single-step forward.
    out0 = policy(x_steps[0], t_steps[0])
    assert jnp.allclose(out_steps[0], out0, atol=1e-4, rtol=1e-4)

    print("KERNEL_OK")
</pallas_src>

<mosaic_0001>
module attributes {stable_mosaic.version = 11 : i64} {
  func.func @_gcn_policy_kernel(%arg0: i32, %arg1: memref<1x2xf32, #tpu.memory_space<smem>>, %arg2: memref<1x2x32x128xf32, #tpu.memory_space<vmem>>, %arg3: memref<128x128xbf16, #tpu.memory_space<vmem>>, %arg4: memref<128x32xbf16, #tpu.memory_space<vmem>>, %arg5: memref<128x128xbf16, #tpu.memory_space<vmem>>, %arg6: memref<128x1xf32, #tpu.memory_space<vmem>>, %arg7: memref<32x128xbf16, #tpu.memory_space<vmem>>, %arg8: memref<32x1xf32, #tpu.memory_space<vmem>>, %arg9: memref<1x2x32x128xf32, #tpu.memory_space<vmem>>) attributes {dimension_semantics = [#tpu.dimension_semantics<parallel>], iteration_bounds = array<i64: 1>, scalar_prefetch = 0 : i64, scratch_operands = 0 : i64, tpu.core_type = #tpu.core_type<tc>, window_params = [{transform_indices = @transform_0, window_bounds = array<i64: 1, 2>}, {transform_indices = @transform_1, window_bounds = array<i64: 1, 2, 32, 128>}, {pipeline_mode = #tpu.pipeline_mode<synchronous>, transform_indices = @transform_2, window_bounds = array<i64: 128, 128>}, {pipeline_mode = #tpu.pipeline_mode<synchronous>, transform_indices = @transform_3, window_bounds = array<i64: 128, 32>}, {pipeline_mode = #tpu.pipeline_mode<synchronous>, transform_indices = @transform_4, window_bounds = array<i64: 128, 128>}, {pipeline_mode = #tpu.pipeline_mode<synchronous>, transform_indices = @transform_5, window_bounds = array<i64: 128, 1>}, {pipeline_mode = #tpu.pipeline_mode<synchronous>, transform_indices = @transform_6, window_bounds = array<i64: 32, 128>}, {pipeline_mode = #tpu.pipeline_mode<synchronous>, transform_indices = @transform_7, window_bounds = array<i64: 32, 1>}, {transform_indices = @transform_8, window_bounds = array<i64: 1, 2, 32, 128>}]} {
    %c1_i32 = arith.constant 1 : i32
    %0 = arith.muli %arg0, %c1_i32 : i32
    %1 = tpu.iota {dimensions = array<i32: 0>} : vector<128x2xi32>
    %2 = arith.sitofp %1 : vector<128x2xi32> to vector<128x2xf32>
    %c64_i32 = arith.constant 64 : i32
    %3 = vector.broadcast %c64_i32 : i32 to vector<128x2xi32>
    %4 = arith.cmpi slt, %1, %3 : vector<128x2xi32>
    %cst = arith.constant 6.400000e+01 : f32
    %5 = vector.broadcast %cst : f32 to vector<128x2xf32>
    %6 = arith.subf %2, %5 : vector<128x2xf32>
    %7 = arith.select %4, %2, %6 : vector<128x2xi1>, vector<128x2xf32>
    %cst_0 = arith.constant -0.14391157 : f32
    %8 = vector.broadcast %cst_0 : f32 to vector<128x2xf32>
    %9 = arith.mulf %8, %7 : vector<128x2xf32>
    %10 = math.exp %9 : vector<128x2xf32>
    %11 = tpu.iota {dimensions = array<i32: 1>} : vector<128x2xi32>
    %cst_1 = arith.constant 0.000000e+00 : f32
    %12 = vector.broadcast %cst_1 : f32 to vector<128x2xf32>
    %c0_i32 = arith.constant 0 : i32
    %13 = arith.addi %0, %c0_i32 : i32
    %14 = arith.index_cast %13 : i32 to index
    %c0 = arith.constant 0 : index
    %15 = memref.load %arg1[%14, %c0] : memref<1x2xf32, #tpu.memory_space<smem>>
    %c0_i32_2 = arith.constant 0 : i32
    %16 = vector.broadcast %c0_i32_2 : i32 to vector<128x2xi32>
    %17 = arith.cmpi eq, %11, %16 : vector<128x2xi32>
    %18 = vector.broadcast %15 : f32 to vector<128x2xf32>
    %19 = arith.select %17, %18, %12 : vector<128x2xi1>, vector<128x2xf32>
    %c0_i32_3 = arith.constant 0 : i32
    %20 = arith.addi %0, %c0_i32_3 : i32
    %21 = arith.index_cast %20 : i32 to index
    %c1 = arith.constant 1 : index
    %22 = memref.load %arg1[%21, %c1] : memref<1x2xf32, #tpu.memory_space<smem>>
    %c1_i32_4 = arith.constant 1 : i32
    %23 = vector.broadcast %c1_i32_4 : i32 to vector<128x2xi32>
    %24 = arith.cmpi eq, %11, %23 : vector<128x2xi32>
    %25 = vector.broadcast %22 : f32 to vector<128x2xf32>
    %26 = arith.select %24, %25, %19 : vector<128x2xi1>, vector<128x2xf32>
    %27 = arith.mulf %26, %10 : vector<128x2xf32>
    %c64_i32_5 = arith.constant 64 : i32
    %28 = vector.broadcast %c64_i32_5 : i32 to vector<128x2xi32>
    %29 = arith.cmpi slt, %1, %28 : vector<128x2xi32>
    %30 = math.sin %27 : vector<128x2xf32>
    %31 = math.cos %27 : vector<128x2xf32>
    %32 = arith.select %29, %30, %31 : vector<128x2xi1>, vector<128x2xf32>
    %c0_6 = arith.constant 0 : index
    %c0_7 = arith.constant 0 : index
    %33 = vector.load %arg5[%c0_6, %c0_7] : memref<128x128xbf16, #tpu.memory_space<vmem>>, vector<128x128xbf16>
    %34 = arith.truncf %32 : vector<128x2xf32> to vector<128x2xbf16>
    %cst_8 = arith.constant dense<0.000000e+00> : vector<128x2xf32>
    %35 = tpu.matmul %33, %34, %cst_8 {dimension_numbers = #tpu.dot_dimension_numbers<[1], [0], [0], [1], [0, 0, 1, 1], [], []>} : vector<128x128xbf16>, vector<128x2xbf16>, vector<128x2xf32> -> vector<128x2xf32>
    %c0_9 = arith.constant 0 : index
    %c0_10 = arith.constant 0 : index
    %36 = vector.load %arg6[%c0_9, %c0_10] : memref<128x1xf32, #tpu.memory_space<vmem>>, vector<128x1xf32>
    %37 = vector.broadcast %36 : vector<128x1xf32> to vector<128x2xf32>
    %38 = arith.addf %35, %37 : vector<128x2xf32>
    %c0_11 = arith.constant 0 : index
    %c0_12 = arith.constant 0 : index
    %39 = vector.load %arg3[%c0_11, %c0_12] : memref<128x128xbf16, #tpu.memory_space<vmem>>, vector<128x128xbf16>
    %c0_13 = arith.constant 0 : index
    %c0_14 = arith.constant 0 : index
    %40 = vector.load %arg4[%c0_13, %c0_14] : memref<128x32xbf16, #tpu.memory_space<vmem>>, vector<128x32xbf16>
    %c0_15 = arith.constant 0 : index
    %c0_16 = arith.constant 0 : index
    %41 = vector.load %arg7[%c0_15, %c0_16] : memref<32x128xbf16, #tpu.memory_space<vmem>>, vector<32x128xbf16>
    %c0_17 = arith.constant 0 : index
    %c0_18 = arith.constant 0 : index
    %c0_19 = arith.constant 0 : index
    %c0_20 = arith.constant 0 : index
    %42 = vector.load %arg2[%c0_17, %c0_18, %c0_19, %c0_20] : memref<1x2x32x128xf32, #tpu.memory_space<vmem>>, vector<1x2x32x128xf32>
    %43 = vector.shape_cast %42 : vector<1x2x32x128xf32> to vector<64x128xf32>
    %44 = arith.truncf %43 : vector<64x128xf32> to vector<64x128xbf16>
    %cst_21 = arith.constant dense<0.000000e+00> : vector<64x128xf32>
    %45 = tpu.matmul %44, %39, %cst_21 {dimension_numbers = #tpu.dot_dimension_numbers<[1], [0], [0], [1], [0, 0, 1, 1], [], []>} : vector<64x128xbf16>, vector<128x128xbf16>, vector<64x128xf32> -> vector<64x128xf32>
    %46 = vector.extract_strided_slice %45 {offsets = [0, 0], sizes = [32, 128], strides = [1, 1]} : vector<64x128xf32> to vector<32x128xf32>
    %47 = arith.truncf %46 : vector<32x128xf32> to vector<32x128xbf16>
    %cst_22 = arith.constant dense<0.000000e+00> : vector<128x128xf32>
    %48 = tpu.matmul %40, %47, %cst_22 {dimension_numbers = #tpu.dot_dimension_numbers<[1], [0], [0], [1], [0, 0, 1, 1], [], []>} : vector<128x32xbf16>, vector<32x128xbf16>, vector<128x128xf32> -> vector<128x128xf32>
    %49 = vector.extract_strided_slice %38 {offsets = [0, 0], sizes = [128, 1], strides = [1, 1]} : vector<128x2xf32> to vector<128x1xf32>
    %50 = vector.broadcast %49 : vector<128x1xf32> to vector<128x128xf32>
    %51 = arith.addf %48, %50 : vector<128x128xf32>
    %cst_23 = arith.constant 5.000000e-01 : f32
    %52 = vector.broadcast %cst_23 : f32 to vector<128x128xf32>
    %53 = arith.mulf %52, %51 : vector<128x128xf32>
    %54 = math.tanh %53 : vector<128x128xf32>
    %cst_24 = arith.constant 1.000000e+00 : f32
    %55 = vector.broadcast %cst_24 : f32 to vector<128x128xf32>
    %56 = arith.addf %54, %55 : vector<128x128xf32>
    %cst_25 = arith.constant 5.000000e-01 : f32
    %57 = vector.broadcast %cst_25 : f32 to vector<128x128xf32>
    %58 = arith.mulf %57, %56 : vector<128x128xf32>
    %59 = arith.mulf %51, %58 : vector<128x128xf32>
    %60 = arith.truncf %59 : vector<128x128xf32> to vector<128x128xbf16>
    %cst_26 = arith.constant dense<0.000000e+00> : vector<32x128xf32>
    %61 = tpu.matmul %41, %60, %cst_26 {dimension_numbers = #tpu.dot_dimension_numbers<[1], [0], [0], [1], [0, 0, 1, 1], [], []>} : vector<32x128xbf16>, vector<128x128xbf16>, vector<32x128xf32> -> vector<32x128xf32>
    %62 = arith.truncf %61 : vector<32x128xf32> to vector<32x128xbf16>
    %63 = vector.extract_strided_slice %45 {offsets = [32, 0], sizes = [32, 128], strides = [1, 1]} : vector<64x128xf32> to vector<32x128xf32>
    %64 = arith.truncf %63 : vector<32x128xf32> to vector<32x128xbf16>
    %cst_27 = arith.constant dense<0.000000e+00> : vector<128x128xf32>
    %65 = tpu.matmul %40, %64, %cst_27 {dimension_numbers = #tpu.dot_dimension_numbers<[1], [0], [0], [1], [0, 0, 1, 1], [], []>} : vector<128x32xbf16>, vector<32x128xbf16>, vector<128x128xf32> -> vector<128x128xf32>
    %66 = vector.extract_strided_slice %38 {offsets = [0, 1], sizes = [128, 1], strides = [1, 1]} : vector<128x2xf32> to vector<128x1xf32>
    %67 = vector.broadcast %66 : vector<128x1xf32> to vector<128x128xf32>
    %68 = arith.addf %65, %67 : vector<128x128xf32>
    %cst_28 = arith.constant 5.000000e-01 : f32
    %69 = vector.broadcast %cst_28 : f32 to vector<128x128xf32>
    %70 = arith.mulf %69, %68 : vector<128x128xf32>
    %71 = math.tanh %70 : vector<128x128xf32>
    %cst_29 = arith.constant 1.000000e+00 : f32
    %72 = vector.broadcast %cst_29 : f32 to vector<128x128xf32>
    %73 = arith.addf %71, %72 : vector<128x128xf32>
    %cst_30 = arith.constant 5.000000e-01 : f32
    %74 = vector.broadcast %cst_30 : f32 to vector<128x128xf32>
    %75 = arith.mulf %74, %73 : vector<128x128xf32>
    %76 = arith.mulf %68, %75 : vector<128x128xf32>
    %77 = arith.truncf %76 : vector<128x128xf32> to vector<128x128xbf16>
    %cst_31 = arith.constant dense<0.000000e+00> : vector<32x128xf32>
    %78 = tpu.matmul %41, %77, %cst_31 {dimension_numbers = #tpu.dot_dimension_numbers<[1], [0], [0], [1], [0, 0, 1, 1], [], []>} : vector<32x128xbf16>, vector<128x128xbf16>, vector<32x128xf32> -> vector<32x128xf32>
    %79 = arith.truncf %78 : vector<32x128xf32> to vector<32x128xbf16>
    %80 = tpu.concatenate %62, %79 in 0 : vector<32x128xbf16>, vector<32x128xbf16> -> vector<64x128xbf16>
    %cst_32 = arith.constant dense<0.000000e+00> : vector<64x128xf32>
    %81 = tpu.matmul %80, %39, %cst_32 {dimension_numbers = #tpu.dot_dimension_numbers<[1], [0], [0], [1], [0, 0, 1, 1], [], []>} : vector<64x128xbf16>, vector<128x128xbf16>, vector<64x128xf32> -> vector<64x128xf32>
    %82 = vector.shape_cast %81 : vector<64x128xf32> to vector<1x2x32x128xf32>
    %c0_33 = arith.constant 0 : index
    %c0_34 = arith.constant 0 : index
    %83 = vector.load %arg8[%c0_33, %c0_34] : memref<32x1xf32, #tpu.memory_space<vmem>>, vector<32x1xf32>
    %84 = vector.shape_cast %83 : vector<32x1xf32> to vector<1x1x32x1xf32>
    %85 = vector.broadcast %84 : vector<1x1x32x1xf32> to vector<1x2x32x128xf32>
    %86 = arith.addf %82, %85 : vector<1x2x32x128xf32>
    %c0_35 = arith.constant 0 : index
    %c0_36 = arith.constant 0 : index
    %c0_37 = arith.constant 0 : index
    %c0_38 = arith.constant 0 : index
    %87 = vector.load %arg9[%c0_35, %c0_36, %c0_37, %c0_38] : memref<1x2x32x128xf32, #tpu.memory_space<vmem>>, vector<1x2x32x128xf32>
    tpu.vector_store %arg9[%c0_35, %c0_36, %c0_37, %c0_38], %86 {strides = array<i32>} : memref<1x2x32x128xf32, #tpu.memory_space<vmem>>, vector<1x2x32x128xf32>,
    return
  }
  func.func @transform_0(%arg0: i32) -> (i32, i32) {
    %c0_i32 = arith.constant 0 : i32
    %c0_i32_0 = arith.constant 0 : i32
    %c0_i32_1 = arith.constant 0 : i32
    return %c0_i32, %c0_i32_0 : i32, i32
  }
  func.func @transform_1(%arg0: i32) -> (i32, i32, i32, i32) {
    %c0_i32 = arith.constant 0 : i32
    %c0_i32_0 = arith.constant 0 : i32
    %c0_i32_1 = arith.constant 0 : i32
    %c0_i32_2 = arith.constant 0 : i32
    return %arg0, %c0_i32, %c0_i32_0, %c0_i32_1 : i32, i32, i32, i32
  }
  func.func @transform_2(%arg0: i32) -> (i32, i32) {
    %c0_i32 = arith.constant 0 : i32
    %c0_i32_0 = arith.constant 0 : i32
    %c0_i32_1 = arith.constant 0 : i32
    return %c0_i32, %c0_i32_0 : i32, i32
  }
  func.func @transform_3(%arg0: i32) -> (i32, i32) {
    %c0_i32 = arith.constant 0 : i32
    %c0_i32_0 = arith.constant 0 : i32
    %c0_i32_1 = arith.constant 0 : i32
    return %c0_i32, %c0_i32_0 : i32, i32
  }
  func.func @transform_4(%arg0: i32) -> (i32, i32) {
    %c0_i32 = arith.constant 0 : i32
    %c0_i32_0 = arith.constant 0 : i32
    %c0_i32_1 = arith.constant 0 : i32
    return %c0_i32, %c0_i32_0 : i32, i32
  }
  func.func @transform_5(%arg0: i32) -> (i32, i32) {
    %c0_i32 = arith.constant 0 : i32
    %c0_i32_0 = arith.constant 0 : i32
    %c0_i32_1 = arith.constant 0 : i32
    return %c0_i32, %c0_i32_0 : i32, i32
  }
  func.func @transform_6(%arg0: i32) -> (i32, i32) {
    %c0_i32 = arith.constant 0 : i32
    %c0_i32_0 = arith.constant 0 : i32
    %c0_i32_1 = arith.constant 0 : i32
    return %c0_i32, %c0_i32_0 : i32, i32
  }
  func.func @transform_7(%arg0: i32) -> (i32, i32) {
    %c0_i32 = arith.constant 0 : i32
    %c0_i32_0 = arith.constant 0 : i32
    %c0_i32_1 = arith.constant 0 : i32
    return %c0_i32, %c0_i32_0 : i32, i32
  }
  func.func @transform_8(%arg0: i32) -> (i32, i32, i32, i32) {
    %c0_i32 = arith.constant 0 : i32
    %c0_i32_0 = arith.constant 0 : i32
    %c0_i32_1 = arith.constant 0 : i32
    %c0_i32_2 = arith.constant 0 : i32
    return %arg0, %c0_i32, %c0_i32_0, %c0_i32_1 : i32, i32, i32, i32
  }
}

</mosaic_0001>

<llo_original>
// kernel: tpu_custom_call.1
$region0: #{tpu_custom_call.1}
  #allocation0 [shape = 'u32[]', space=smem, size = 0x4, offset = 0x4, fixed_abs, tag = 'smem constant byte address 0x4 - core index']
  #allocation1 [shape = 'u32[144,128]{1,0:T(1,128)}', space=vmem, size = 0x12000, scoped, tag = 'internal scratch']
  %s0 = inlined_call_operand.vmem [shape: f32[1,2], index: 0, kind: input, shape index: {}]
  %s1 = inlined_call_operand.vmem [shape: f32[1,2,32,128], index: 1, kind: input, shape index: {}]
  %s2 = inlined_call_operand.vmem [shape: bf16[128,128], index: 2, kind: input, shape index: {}]
  %s3 = inlined_call_operand.vmem [shape: bf16[128,32], index: 3, kind: input, shape index: {}]
  %s4 = inlined_call_operand.vmem [shape: bf16[128,128], index: 4, kind: input, shape index: {}]
  %s5 = inlined_call_operand.vmem [shape: f32[128,1], index: 5, kind: input, shape index: {}]
  %s6 = inlined_call_operand.vmem [shape: bf16[32,128], index: 6, kind: input, shape index: {}]
  %s7 = inlined_call_operand.vmem [shape: f32[32,1], index: 7, kind: input, shape index: {}]
  %s8 = inlined_call_operand.hbm [shape: f32[1,2,32,128], index: 8, kind: output, shape index: {}]
  %s9 = sld [smem:[#allocation0]]
  $region46: #{tpu_custom_call.1} parent=0
    _
  %s11 = ssub.s32 1, %s9
  %s12 = scalar_select 0, %s11, %s9
  $region1: #{tpu_custom_call.1} parent=0
    #allocation2 [shape = 'u8[512]{0}', space=smem, size = 0x200, scoped, tag = 'input window, operand 0, single buffered']
    #allocation3 [shape = 's32[1]{0}', space=sflag, size = 0x4, scoped, tag = 'scoped memory for tpu_custom_call.1']
    #allocation4 [shape = 's32[1]{0}', space=sflag, size = 0x4, scoped, tag = 'scoped memory for tpu_custom_call.1']
    #allocation5 [shape = 'u8[32768]{0}', space=vmem, size = 0x8000, scoped, tag = 'output window, operand 0, single buffered']
    %13 = vsyncpa [#allocation4], 0
    %14 = vsyncpa [#allocation3], 0
    // Predicated region
    $region2: #{tpu_custom_call.1} parent=1 // pred_check
      _
    $region3: #{tpu_custom_call.1} parent=1 // pred_check_branch
      %16 = sbr.rel (0) target = $region5
    $region4: #{tpu_custom_call.1} parent=1 // pred_region
      %s18 = ssub.s32 16, 16
      %19 = vsyncadd [#allocation4], %s18
      %s21 = sshll.u32 %s0, 4
      %s22 = int_to_ptr.vmem [resolvable:$true] %s21
      %24 = dma.vmem_to_smem %s22, 16, [#allocation2], [#allocation4]
    $region5: #{tpu_custom_call.1} parent=1 // pred_fallthru
      _
    // Predicated region
    $region6: #{tpu_custom_call.1} parent=1 // pred_check
      _
    $region7: #{tpu_custom_call.1} parent=1 // pred_check_branch
      %26 = sbr.rel (0) target = $region9
    $region8: #{tpu_custom_call.1} parent=1 // pred_region
      _
    $region9: #{tpu_custom_call.1} parent=1 // pred_fallthru
      _
    // Predicated region
    $region10: #{tpu_custom_call.1} parent=1 // pred_check
      _
    $region11: #{tpu_custom_call.1} parent=1 // pred_check_branch
      %28 = sbr.rel (0) target = $region13
    $region12: #{tpu_custom_call.1} parent=1 // pred_region
      _
    $region13: #{tpu_custom_call.1} parent=1 // pred_fallthru
      _
    // Predicated region
    $region14: #{tpu_custom_call.1} parent=1 // pred_check
      _
    $region15: #{tpu_custom_call.1} parent=1 // pred_check_branch
      %30 = sbr.rel (0) target = $region17
    $region16: #{tpu_custom_call.1} parent=1 // pred_region
      _
    $region17: #{tpu_custom_call.1} parent=1 // pred_fallthru
      _
    // Predicated region
    $region18: #{tpu_custom_call.1} parent=1 // pred_check
      _
    $region19: #{tpu_custom_call.1} parent=1 // pred_check_branch
      %32 = sbr.rel (0) target = $region21
    $region20: #{tpu_custom_call.1} parent=1 // pred_region
      _
    $region21: #{tpu_custom_call.1} parent=1 // pred_fallthru
      _
    // Predicated region
    $region22: #{tpu_custom_call.1} parent=1 // pred_check
      _
    $region23: #{tpu_custom_call.1} parent=1 // pred_check_branch
      %34 = sbr.rel (0) target = $region25
    $region24: #{tpu_custom_call.1} parent=1 // pred_region
      _
    $region25: #{tpu_custom_call.1} parent=1 // pred_fallthru
      _
    // Predicated region
    $region26: #{tpu_custom_call.1} parent=1 // pred_check
      _
    $region27: #{tpu_custom_call.1} parent=1 // pred_check_branch
      %36 = sbr.rel (0) target = $region29
    $region28: #{tpu_custom_call.1} parent=1 // pred_region
      _
    $region29: #{tpu_custom_call.1} parent=1 // pred_fallthru
      _
    // Predicated region
    $region30: #{tpu_custom_call.1} parent=1 // pred_check
      _
    $region31: #{tpu_custom_call.1} parent=1 // pred_check_branch
      %38 = sbr.rel (0) target = $region33
    $region32: #{tpu_custom_call.1} parent=1 // pred_region
      _
    $region33: #{tpu_custom_call.1} parent=1 // pred_fallthru
      _
    // Predicated region
    $region34: #{tpu_custom_call.1} parent=1 // pred_check
      _
    $region35: #{tpu_custom_call.1} parent=1 // pred_check_branch
      %40 = sbr.rel (0) target = $region37
    $region36: #{tpu_custom_call.1} parent=1 // pred_region
      %41 = dma.done [#allocation4], 16
    $region37: #{tpu_custom_call.1} parent=1 // pred_fallthru
      _
    %42 = sfence
    %v44 = vlaneseq
    %v45 = vshrl.u32 %v44, 7
    %v46 = vadd.s32 %v45, 8
    %v47 = vadd.s32 %v45, 16
    %v48 = vadd.s32 %v45, 24
    %v49 = vadd.s32 %v45, 32
    %v50 = vadd.s32 %v45, 40
    %v51 = vadd.s32 %v45, 48
    %v52 = vadd.s32 %v45, 56
    %v53 = vadd.s32 %v45, 64
    %v54 = vadd.s32 %v45, 72
    %v55 = vadd.s32 %v45, 80
    %v56 = vadd.s32 %v45, 88
    %v57 = vadd.s32 %v45, 96
    %v58 = vadd.s32 %v45, 104
    %v59 = vadd.s32 %v45, 112
    %v60 = vadd.s32 %v45, 120
    %v61 = vcvt.s32.f32 %v45
    %v62 = vcvt.s32.f32 %v46
    %v63 = vcvt.s32.f32 %v47
    %v64 = vcvt.s32.f32 %v48
    %v65 = vcvt.s32.f32 %v49
    %v66 = vcvt.s32.f32 %v50
    %v67 = vcvt.s32.f32 %v51
    %v68 = vcvt.s32.f32 %v52
    %v69 = vcvt.s32.f32 %v53
    %v70 = vcvt.s32.f32 %v54
    %v71 = vcvt.s32.f32 %v55
    %v72 = vcvt.s32.f32 %v56
    %v73 = vcvt.s32.f32 %v57
    %v74 = vcvt.s32.f32 %v58
    %v75 = vcvt.s32.f32 %v59
    %v76 = vcvt.s32.f32 %v60
    %vm77 = vcmp.lt.s32.totalorder %v45, 64
    %vm78 = vcmp.lt.s32.totalorder %v46, 64
    %vm79 = vcmp.lt.s32.totalorder %v47, 64
    %vm80 = vcmp.lt.s32.totalorder %v48, 64
    %vm81 = vcmp.lt.s32.totalorder %v49, 64
    %vm82 = vcmp.lt.s32.totalorder %v50, 64
    %vm83 = vcmp.lt.s32.totalorder %v51, 64
    %vm84 = vcmp.lt.s32.totalorder %v52, 64
    %vm85 = vcmp.lt.s32.totalorder %v53, 64
    %vm86 = vcmp.lt.s32.totalorder %v54, 64
    %vm87 = vcmp.lt.s32.totalorder %v55, 64
    %vm88 = vcmp.lt.s32.totalorder %v56, 64
    %vm89 = vcmp.lt.s32.totalorder %v57, 64
    %vm90 = vcmp.lt.s32.totalorder %v58, 64
    %vm91 = vcmp.lt.s32.totalorder %v59, 64
    %vm92 = vcmp.lt.s32.totalorder %v60, 64
    %v93 = vsub.f32 %v61, 64.0
    %v94 = vsub.f32 %v62, 64.0
    %v95 = vsub.f32 %v63, 64.0
    %v96 = vsub.f32 %v64, 64.0
    %v97 = vsub.f32 %v65, 64.0
    %v98 = vsub.f32 %v66, 64.0
    %v99 = vsub.f32 %v67, 64.0
    %v100 = vsub.f32 %v68, 64.0
    %v101 = vsub.f32 %v69, 64.0
    %v102 = vsub.f32 %v70, 64.0
    %v103 = vsub.f32 %v71, 64.0
    %v104 = vsub.f32 %v72, 64.0
    %v105 = vsub.f32 %v73, 64.0
    %v106 = vsub.f32 %v74, 64.0
    %v107 = vsub.f32 %v75, 64.0
    %v108 = vsub.f32 %v76, 64.0
    %v109 = vsel %vm77, %v61, %v93
    %v110 = vsel %vm78, %v62, %v94
    %v111 = vsel %vm79, %v63, %v95
    %v112 = vsel %vm80, %v64, %v96
    %v113 = vsel %vm81, %v65, %v97
    %v114 = vsel %vm82, %v66, %v98
    %v115 = vsel %vm83, %v67, %v99
    %v116 = vsel %vm84, %v68, %v100
    %v117 = vsel %vm85, %v69, %v101
    %v118 = vsel %vm86, %v70, %v102
    %v119 = vsel %vm87, %v71, %v103
    %v120 = vsel %vm88, %v72, %v104
    %v121 = vsel %vm89, %v73, %v105
    %v122 = vsel %vm90, %v74, %v106
    %v123 = vsel %vm91, %v75, %v107
    %v124 = vsel %vm92, %v76, %v108
    %v125 = vmul.f32 %v109, -0.14391157
    %v126 = vmul.f32 %v110, -0.14391157
    %v127 = vmul.f32 %v111, -0.14391157
    %v128 = vmul.f32 %v112, -0.14391157
    %v129 = vmul.f32 %v113, -0.14391157
    %v130 = vmul.f32 %v114, -0.14391157
    %v131 = vmul.f32 %v115, -0.14391157
    %v132 = vmul.f32 %v116, -0.14391157
    %v133 = vmul.f32 %v117, -0.14391157
    %v134 = vmul.f32 %v118, -0.14391157
    %v135 = vmul.f32 %v119, -0.14391157
    %v136 = vmul.f32 %v120, -0.14391157
    %v137 = vmul.f32 %v121, -0.14391157
    %v138 = vmul.f32 %v122, -0.14391157
    %v139 = vmul.f32 %v123, -0.14391157
    %v140 = vmul.f32 %v124, -0.14391157
    %v141 = vmul.f32 %v125, 1.442695
    %v142 = vpow.pop %v141
    %v143 = vmul.f32 %v126, 1.442695
    %v144 = vpow.pop %v143
    %v145 = vmul.f32 %v127, 1.442695
    %v146 = vpow.pop %v145
    %v147 = vmul.f32 %v128, 1.442695
    %v148 = vpow.pop %v147
    %v149 = vmul.f32 %v129, 1.442695
    %v150 = vpow.pop %v149
    %v151 = vmul.f32 %v130, 1.442695
    %v152 = vpow.pop %v151
    %v153 = vmul.f32 %v131, 1.442695
    %v154 = vpow.pop %v153
    %v155 = vmul.f32 %v132, 1.442695
    %v156 = vpow.pop %v155
    %v157 = vmul.f32 %v133, 1.442695
    %v158 = vpow.pop %v157
    %v159 = vmul.f32 %v134, 1.442695
    %v160 = vpow.pop %v159
    %v161 = vmul.f32 %v135, 1.442695
    %v162 = vpow.pop %v161
    %v163 = vmul.f32 %v136, 1.442695
    %v164 = vpow.pop %v163
    %v165 = vmul.f32 %v137, 1.442695
    %v166 = vpow.pop %v165
    %v167 = vmul.f32 %v138, 1.442695
    %v168 = vpow.pop %v167
    %v169 = vmul.f32 %v139, 1.442695
    %v170 = vpow.pop %v169
    %v171 = vmul.f32 %v140, 1.442695
    %v172 = vpow.pop %v171
    %v173 = vlaneseq
    %v174 = vand.u32 %v173, 127
    %s175 = smul.u32 0, 128
    %s176 = sld [smem:[#allocation2 + %s175]]
    %vm177 = vcmp.eq.s32.totalorder %v174, 0
    %v178 = vstv %s176
    %v179 = vsel %vm177, %v178, 0.0
    %s180 = sadd.s32 %s175, 1
    %s181 = sld [smem:[#allocation2 + %s180]]
    %vm182 = vcmp.eq.s32.totalorder %v174, 1
    %v183 = vstv %s181
    %v184 = vsel %vm182, %v183, %v179
    %v185 = vmul.f32 %v184, %v142
    %v186 = vmul.f32 %v184, %v144
    %v187 = vmul.f32 %v184, %v146
    %v188 = vmul.f32 %v184, %v148
    %v189 = vmul.f32 %v184, %v150
    %v190 = vmul.f32 %v184, %v152
    %v191 = vmul.f32 %v184, %v154
    %v192 = vmul.f32 %v184, %v156
    %v193 = vmul.f32 %v184, %v158
    %v194 = vmul.f32 %v184, %v160
    %v195 = vmul.f32 %v184, %v162
    %v196 = vmul.f32 %v184, %v164
    %v197 = vmul.f32 %v184, %v166
    %v198 = vmul.f32 %v184, %v168
    %v199 = vmul.f32 %v184, %v170
    %v200 = vmul.f32 %v184, %v172
    %v201 = vand.u32 2147483647, %v185
    %vm202 = vcmp.le.f32.partialorder %v201, 0.7853982
    %vm203 = vcmp.lt.s32.totalorder %v185, 0
    %v204 = vand.u32 %v185, 2139095040
    %v205 = vshrl.u32 %v204, 23
    %v206 = vsub.s32 %v205, 127
    %v207 = vand.u32 2147483647, %v185
    %v208 = vand.u32 %v207, 8388607
    %v209 = vor.u32 %v208, 8388608
    %v210 = vsub.s32 0, %v209
    %v211 = vadd.s32 %v206, 1
    %vm212 = vcmp.gt.s32.totalorder %v211, 0
    %v213 = vsel %vm212, %v211, 0
    %v214 = vshrl.u32 %v213, 5
    %v215 = vand.u32 %v213, 31
    %v216 = vsub.s32 32, %v215
    %v217 = vshrl.u32 683565275, %v216
    %v218 = vshll.u32 683565275, %v215
    %v219 = vshrl.u32 2475754826, %v216
    %v220 = vor.u32 %v218, %v219
    %v221 = vshll.u32 2475754826, %v215
    %v222 = vshrl.u32 2131351028, %v216
    %v223 = vor.u32 %v221, %v222
    %v224 = vshll.u32 2131351028, %v215
    %v225 = vshrl.u32 2102212464, %v216
    %v226 = vor.u32 %v224, %v225
    %v227 = vshll.u32 2102212464, %v215
    %v228 = vshrl.u32 920167782, %v216
    %v229 = vor.u32 %v227, %v228
    %v230 = vshll.u32 920167782, %v215
    %v231 = vshrl.u32 1326507024, %v216
    %v232 = vor.u32 %v230, %v231
    %vm233 = vcmp.lt.s32.totalorder %v214, 1
    %vm234 = vcmp.lt.s32.totalorder %v214, 2
    %vm235 = vcmp.lt.s32.totalorder %v214, 3
    %vm236 = vcmp.lt.s32.totalorder %v214, 4
    %v237 = vsel %vm233, %v217, %v220
    %v238 = vsel %vm236, %v226, 2102212464
    %v239 = vsel %vm235, %v223, %v238
    %v240 = vsel %vm234, %v237, %v239
    %v241 = vsel %vm233, %v220, %v223
    %v242 = vsel %vm236, %v229, 920167782
    %v243 = vsel %vm235, %v226, %v242
    %v244 = vsel %vm234, %v241, %v243
    %v245 = vsel %vm233, %v223, %v226
    %v246 = vsel %vm236, %v232, 1326507024
    %v247 = vsel %vm235, %v229, %v246
    %v248 = vsel %vm234, %v245, %v247
    %v249 = vshll.u32 %v209, 8
    %v250 = vmul.u32.u64.compose %v249, %v248
    %v251 = vextract.low.u32 %v250
    %v252 = vextract.high.u32 %v250
    %v253 = vmul.u32.u64.compose %v249, %v244
    %v254 = vextract.low.u32 %v253
    %v255 = vextract.high.u32 %v253
    %v256 = vmul.u32 %v249, %v240
    %v257 = vadd.s32 %v252, %v254
    %vm258 = vc.u32 %v252, %v254
    %v259 = vadd.s32 %v255, 1
    %v260 = vsel %vm258, %v259, %v255
    %v261 = vadd.s32 %v256, %v260
    %v262 = vadd.s32 %v261, 536870912
    %v263 = vshrl.u32 %v262, 30
    %v264 = vshll.u32 %v263, 30
    %v265 = vsub.s32 %v261, %v264
    %vm266 = vcmp.lt.s32.totalorder %v265, 0
    %v267 = vsub.s32 0, %v265
    %v268 = vsel %vm266, %v267, %v265
    %v269 = vclz %v268
    %v270 = vsub.s32 %v269, 2
    %vm271 = vcmp.gt.s32.totalorder 0, %v270
    %v272 = vsel %vm271, 0, %v270
    %v273 = vsub.s32 32, %v272
    %v274 = vshll.u32 %v265, %v272
    %v275 = vshrl.u32 %v257, %v273
    %v276 = vor.u32 %v274, %v275
    %v277 = vsub.s32 4294967266, %v272
    %v278 = vadd.s32 %v277, 127
    %v279 = vshll.u32 %v278, 23
    %v280 = vor.u32 4788187, %v279
    %v281 = vand.u32 2147483647, %v280
    %v283 = vcvt.s32.f32 %v276
    %v284 = vmul.f32 %v283, %v281
    %v285 = vxor.u32 %v284, 2147483648
    %v286 = vsel %vm203, %v285, %v284
    %v287 = vsub.s32 4, %v263
    %v288 = vsel %vm203, %v287, %v263
    %v289 = vsel %vm202, %v185, %v286
    %v290 = vsel %vm202, 0, %v288
    %v291 = vcosq.f32.pop %v289
    %v292 = vsinq.f32.pop %v289
    %vm293 = vweird.f32 %v185
    %v294 = vadd.s32 %v290, 3
    %v295 = vand.u32 %v294, 3
    %vm296 = vcmp.lt.s32.totalorder %v295, 2
    %vm297 = vcmp.eq.s32.totalorder %v295, 0
    %v298 = vxor.u32 %v292, 2147483648
    %v299 = vsel %vm297, %v291, %v298
    %vm300 = vcmp.eq.s32.totalorder %v295, 2
    %v301 = vxor.u32 %v291, 2147483648
    %v302 = vsel %vm300, %v301, %v292
    %v303 = vsel %vm296, %v299, %v302
    %v304 = vsel %vm293, nan, %v303
    %v305 = vand.u32 2147483647, %v186
    %vm306 = vcmp.le.f32.partialorder %v305, 0.7853982
    %vm307 = vcmp.lt.s32.totalorder %v186, 0
    %v308 = vand.u32 %v186, 2139095040
    %v309 = vshrl.u32 %v308, 23
    %v310 = vsub.s32 %v309, 127
    %v311 = vand.u32 2147483647, %v186
    %v312 = vand.u32 %v311, 8388607
    %v313 = vor.u32 %v312, 8388608
    %v314 = vsub.s32 0, %v313
    %v315 = vadd.s32 %v310, 1
    %vm316 = vcmp.gt.s32.totalorder %v315, 0
    %v317 = vsel %vm316, %v315, 0
    %v318 = vshrl.u32 %v317, 5
    %v319 = vand.u32 %v317, 31
    %v320 = vsub.s32 32, %v319
    %v321 = vshrl.u32 683565275, %v320
    %v322 = vshll.u32 683565275, %v319
    %v323 = vshrl.u32 2475754826, %v320
    %v324 = vor.u32 %v322, %v323
    %v325 = vshll.u32 2475754826, %v319
    %v326 = vshrl.u32 2131351028, %v320
    %v327 = vor.u32 %v325, %v326
    %v328 = vshll.u32 2131351028, %v319
    %v329 = vshrl.u32 2102212464, %v320
    %v330 = vor.u32 %v328, %v329
    %v331 = vshll.u32 2102212464, %v319
    %v332 = vshrl.u32 920167782, %v320
    %v333 = vor.u32 %v331, %v332
    %v334 = vshll.u32 920167782, %v319
    %v335 = vshrl.u32 1326507024, %v320
    %v336 = vor.u32 %v334, %v335
    %vm337 = vcmp.lt.s32.totalorder %v318, 1
    %vm338 = vcmp.lt.s32.totalorder %v318, 2
    %vm339 = vcmp.lt.s32.totalorder %v318, 3
    %vm340 = vcmp.lt.s32.totalorder %v318, 4
    %v341 = vsel %vm337, %v321, %v324
    %v342 = vsel %vm340, %v330, 2102212464
    %v343 = vsel %vm339, %v327, %v342
    %v344 = vsel %vm338, %v341, %v343
    %v345 = vsel %vm337, %v324, %v327
    %v346 = vsel %vm340, %v333, 920167782
    %v347 = vsel %vm339, %v330, %v346
    %v348 = vsel %vm338, %v345, %v347
    %v349 = vsel %vm337, %v327, %v330
    %v350 = vsel %vm340, %v336, 1326507024
    %v351 = vsel %vm339, %v333, %v350
    %v352 = vsel %vm338, %v349, %v351
    %v353 = vshll.u32 %v313, 8
    %v354 = vmul.u32.u64.compose %v353, %v352
    %v355 = vextract.low.u32 %v354
    %v356 = vextract.high.u32 %v354
    %v357 = vmul.u32.u64.compose %v353, %v348
    %v358 = vextract.low.u32 %v357
    %v359 = vextract.high.u32 %v357
    %v360 = vmul.u32 %v353, %v344
    %v361 = vadd.s32 %v356, %v358
    %vm362 = vc.u32 %v356, %v358
    %v363 = vadd.s32 %v359, 1
    %v364 = vsel %vm362, %v363, %v359
    %v365 = vadd.s32 %v360, %v364
    %v366 = vadd.s32 %v365, 536870912
    %v367 = vshrl.u32 %v366, 30
    %v368 = vshll.u32 %v367, 30
    %v369 = vsub.s32 %v365, %v368
    %vm370 = vcmp.lt.s32.totalorder %v369, 0
    %v371 = vsub.s32 0, %v369
    %v372 = vsel %vm370, %v371, %v369
    %v373 = vclz %v372
    %v374 = vsub.s32 %v373, 2
    %vm375 = vcmp.gt.s32.totalorder 0, %v374
    %v376 = vsel %vm375, 0, %v374
    %v377 = vsub.s32 32, %v376
    %v378 = vshll.u32 %v369, %v376
    %v379 = vshrl.u32 %v361, %v377
    %v380 = vor.u32 %v378, %v379
    %v381 = vsub.s32 4294967266, %v376
    %v382 = vadd.s32 %v381, 127
    %v383 = vshll.u32 %v382, 23
    %v384 = vor.u32 4788187, %v383
    %v385 = vand.u32 2147483647, %v384
    %v387 = vcvt.s32.f32 %v380
    %v388 = vmul.f32 %v387, %v385
    %v389 = vxor.u32 %v388, 2147483648
    %v390 = vsel %vm307, %v389, %v388
    %v391 = vsub.s32 4, %v367
    %v392 = vsel %vm307, %v391, %v367
    %v393 = vsel %vm306, %v186, %v390
    %v394 = vsel %vm306, 0, %v392
    %v395 = vcosq.f32.pop %v393
    %v396 = vsinq.f32.pop %v393
    %vm397 = vweird.f32 %v186
    %v398 = vadd.s32 %v394, 3
    %v399 = vand.u32 %v398, 3
    %vm400 = vcmp.lt.s32.totalorder %v399, 2
    %vm401 = vcmp.eq.s32.totalorder %v399, 0
    %v402 = vxor.u32 %v396, 2147483648
    %v403 = vsel %vm401, %v395, %v402
    %vm404 = vcmp.eq.s32.totalorder %v399, 2
    %v405 = vxor.u32 %v395, 2147483648
    %v406 = vsel %vm404, %v405, %v396
    %v407 = vsel %vm400, %v403, %v406
    %v408 = vsel %vm397, nan, %v407
    %v409 = vand.u32 2147483647, %v187
    %vm410 = vcmp.le.f32.partialorder %v409, 0.7853982
    %vm411 = vcmp.lt.s32.totalorder %v187, 0
    %v412 = vand.u32 %v187, 2139095040
    %v413 = vshrl.u32 %v412, 23
    %v414 = vsub.s32 %v413, 127
    %v415 = vand.u32 2147483647, %v187
    %v416 = vand.u32 %v415, 8388607
    %v417 = vor.u32 %v416, 8388608
    %v418 = vsub.s32 0, %v417
    %v419 = vadd.s32 %v414, 1
    %vm420 = vcmp.gt.s32.totalorder %v419, 0
    %v421 = vsel %vm420, %v419, 0
    %v422 = vshrl.u32 %v421, 5
    %v423 = vand.u32 %v421, 31
    %v424 = vsub.s32 32, %v423
    %v425 = vshrl.u32 683565275, %v424
    %v426 = vshll.u32 683565275, %v423
    %v427 = vshrl.u32 2475754826, %v424
    %v428 = vor.u32 %v426, %v427
    %v429 = vshll.u32 2475754826, %v423
    %v430 = vshrl.u32 2131351028, %v424
    %v431 = vor.u32 %v429, %v430
    %v432 = vshll.u32 2131351028, %v423
    %v433 = vshrl.u32 2102212464, %v424
    %v434 = vor.u32 %v432, %v433
    %v435 = vshll.u32 2102212464, %v423
    %v436 = vshrl.u32 920167782, %v424
    %v437 = vor.u32 %v435, %v436
    %v438 = vshll.u32 920167782, %v423
    %v439 = vshrl.u32 1326507024, %v424
    %v440 = vor.u32 %v438, %v439
    %vm441 = vcmp.lt.s32.totalorder %v422, 1
    %vm442 = vcmp.lt.s32.totalorder %v422, 2
    %vm443 = vcmp.lt.s32.totalorder %v422, 3
    %vm444 = vcmp.lt.s32.totalorder %v422, 4
    %v445 = vsel %vm441, %v425, %v428
    %v446 = vsel %vm444, %v434, 2102212464
    %v447 = vsel %vm443, %v431, %v446
    %v448 = vsel %vm442, %v445, %v447
    %v449 = vsel %vm441, %v428, %v431
    %v450 = vsel %vm444, %v437, 920167782
    %v451 = vsel %vm443, %v434, %v450
    %v452 = vsel %vm442, %v449, %v451
    %v453 = vsel %vm441, %v431, %v434
    %v454 = vsel %vm444, %v440, 1326507024
    %v455 = vsel %vm443, %v437, %v454
    %v456 = vsel %vm442, %v453, %v455
    %v457 = vshll.u32 %v417, 8
    %v458 = vmul.u32.u64.compose %v457, %v456
    %v459 = vextract.low.u32 %v458
    %v460 = vextract.high.u32 %v458
    %v461 = vmul.u32.u64.compose %v457, %v452
    %v462 = vextract.low.u32 %v461
    %v463 = vextract.high.u32 %v461
    %v464 = vmul.u32 %v457, %v448
    %v465 = vadd.s32 %v460, %v462
    %vm466 = vc.u32 %v460, %v462
    %v467 = vadd.s32 %v463, 1
    %v468 = vsel %vm466, %v467, %v463
    %v469 = vadd.s32 %v464, %v468
    %v470 = vadd.s32 %v469, 536870912
    %v471 = vshrl.u32 %v470, 30
    %v472 = vshll.u32 %v471, 30
    %v473 = vsub.s32 %v469, %v472
    %vm474 = vcmp.lt.s32.totalorder %v473, 0
    %v475 = vsub.s32 0, %v473
    %v476 = vsel %vm474, %v475, %v473
    %v477 = vclz %v476
    %v478 = vsub.s32 %v477, 2
    %vm479 = vcmp.gt.s32.totalorder 0, %v478
    %v480 = vsel %vm479, 0, %v478
    %v481 = vsub.s32 32, %v480
    %v482 = vshll.u32 %v473, %v480
    %v483 = vshrl.u32 %v465, %v481
    %v484 = vor.u32 %v482, %v483
    %v485 = vsub.s32 4294967266, %v480
    %v486 = vadd.s32 %v485, 127
    %v487 = vshll.u32 %v486, 23
    %v488 = vor.u32 4788187, %v487
    %v489 = vand.u32 2147483647, %v488
    %v491 = vcvt.s32.f32 %v484
    %v492 = vmul.f32 %v491, %v489
    %v493 = vxor.u32 %v492, 2147483648
    %v494 = vsel %vm411, %v493, %v492
    %v495 = vsub.s32 4, %v471
    %v496 = vsel %vm411, %v495, %v471
    %v497 = vsel %vm410, %v187, %v494
    %v498 = vsel %vm410, 0, %v496
    %v499 = vcosq.f32.pop %v497
    %v500 = vsinq.f32.pop %v497
    %vm501 = vweird.f32 %v187
    %v502 = vadd.s32 %v498, 3
    %v503 = vand.u32 %v502, 3
    %vm504 = vcmp.lt.s32.totalorder %v503, 2
    %vm505 = vcmp.eq.s32.totalorder %v503, 0
    %v506 = vxor.u32 %v500, 2147483648
    %v507 = vsel %vm505, %v499, %v506
    %vm508 = vcmp.eq.s32.totalorder %v503, 2
    %v509 = vxor.u32 %v499, 2147483648
    %v510 = vsel %vm508, %v509, %v500
    %v511 = vsel %vm504, %v507, %v510
    %v512 = vsel %vm501, nan, %v511
    %v513 = vand.u32 2147483647, %v188
    %vm514 = vcmp.le.f32.partialorder %v513, 0.7853982
    %vm515 = vcmp.lt.s32.totalorder %v188, 0
    %v516 = vand.u32 %v188, 2139095040
    %v517 = vshrl.u32 %v516, 23
    %v518 = vsub.s32 %v517, 127
    %v519 = vand.u32 2147483647, %v188
    %v520 = vand.u32 %v519, 8388607
    %v521 = vor.u32 %v520, 8388608
    %v522 = vsub.s32 0, %v521
    %v523 = vadd.s32 %v518, 1
    %vm524 = vcmp.gt.s32.totalorder %v523, 0
    %v525 = vsel %vm524, %v523, 0
    %v526 = vshrl.u32 %v525, 5
    %v527 = vand.u32 %v525, 31
    %v528 = vsub.s32 32, %v527
    %v529 = vshrl.u32 683565275, %v528
    %v530 = vshll.u32 683565275, %v527
    %v531 = vshrl.u32 2475754826, %v528
    %v532 = vor.u32 %v530, %v531
    %v533 = vshll.u32 2475754826, %v527
    %v534 = vshrl.u32 2131351028, %v528
    %v535 = vor.u32 %v533, %v534
    %v536 = vshll.u32 2131351028, %v527
    %v537 = vshrl.u32 2102212464, %v528
    %v538 = vor.u32 %v536, %v537
    %v539 = vshll.u32 2102212464, %v527
    %v540 = vshrl.u32 920167782, %v528
    %v541 = vor.u32 %v539, %v540
    %v542 = vshll.u32 920167782, %v527
    %v543 = vshrl.u32 1326507024, %v528
    %v544 = vor.u32 %v542, %v543
    %vm545 = vcmp.lt.s32.totalorder %v526, 1
    %vm546 = vcmp.lt.s32.totalorder %v526, 2
    %vm547 = vcmp.lt.s32.totalorder %v526, 3
    %vm548 = vcmp.lt.s32.totalorder %v526, 4
    %v549 = vsel %vm545, %v529, %v532
    %v550 = vsel %vm548, %v538, 2102212464
    %v551 = vsel %vm547, %v535, %v550
    %v552 = vsel %vm546, %v549, %v551
    %v553 = vsel %vm545, %v532, %v535
    %v554 = vsel %vm548, %v541, 920167782
    %v555 = vsel %vm547, %v538, %v554
    %v556 = vsel %vm546, %v553, %v555
    %v557 = vsel %vm545, %v535, %v538
    %v558 = vsel %vm548, %v544, 1326507024
    %v559 = vsel %vm547, %v541, %v558
    %v560 = vsel %vm546, %v557, %v559
    %v561 = vshll.u32 %v521, 8
    %v562 = vmul.u32.u64.compose %v561, %v560
    %v563 = vextract.low.u32 %v562
    %v564 = vextract.high.u32 %v562
    %v565 = vmul.u32.u64.compose %v561, %v556
    %v566 = vextract.low.u32 %v565
    %v567 = vextract.high.u32 %v565
    %v568 = vmul.u32 %v561, %v552
    %v569 = vadd.s32 %v564, %v566
    %vm570 = vc.u32 %v564, %v566
    %v571 = vadd.s32 %v567, 1
    %v572 = vsel %vm570, %v571, %v567
    %v573 = vadd.s32 %v568, %v572
    %v574 = vadd.s32 %v573, 536870912
    %v575 = vshrl.u32 %v574, 30
    %v576 = vshll.u32 %v575, 30
    %v577 = vsub.s32 %v573, %v576
    %vm578 = vcmp.lt.s32.totalorder %v577, 0
    %v579 = vsub.s32 0, %v577
    %v580 = vsel %vm578, %v579, %v577
    %v581 = vclz %v580
    %v582 = vsub.s32 %v581, 2
    %vm583 = vcmp.gt.s32.totalorder 0, %v582
    %v584 = vsel %vm583, 0, %v582
    %v585 = vsub.s32 32, %v584
    %v586 = vshll.u32 %v577, %v584
    %v587 = vshrl.u32 %v569, %v585
    %v588 = vor.u32 %v586, %v587
    %v589 = vsub.s32 4294967266, %v584
    %v590 = vadd.s32 %v589, 127
    %v591 = vshll.u32 %v590, 23
    %v592 = vor.u32 4788187, %v591
    %v593 = vand.u32 2147483647, %v592
    %v595 = vcvt.s32.f32 %v588
    %v596 = vmul.f32 %v595, %v593
    %v597 = vxor.u32 %v596, 2147483648
    %v598 = vsel %vm515, %v597, %v596
    %v599 = vsub.s32 4, %v575
    %v600 = vsel %vm515, %v599, %v575
    %v601 = vsel %vm514, %v188, %v598
    %v602 = vsel %vm514, 0, %v600
    %v603 = vcosq.f32.pop %v601
    %v604 = vsinq.f32.pop %v601
    %vm605 = vweird.f32 %v188
    %v606 = vadd.s32 %v602, 3
    %v607 = vand.u32 %v606, 3
    %vm608 = vcmp.lt.s32.totalorder %v607, 2
    %vm609 = vcmp.eq.s32.totalorder %v607, 0
    %v610 = vxor.u32 %v604, 2147483648
    %v611 = vsel %vm609, %v603, %v610
    %vm612 = vcmp.eq.s32.totalorder %v607, 2
    %v613 = vxor.u32 %v603, 2147483648
    %v614 = vsel %vm612, %v613, %v604
    %v615 = vsel %vm608, %v611, %v614
    %v616 = vsel %vm605, nan, %v615
    %v617 = vand.u32 2147483647, %v189
    %vm618 = vcmp.le.f32.partialorder %v617, 0.7853982
    %vm619 = vcmp.lt.s32.totalorder %v189, 0
    %v620 = vand.u32 %v189, 2139095040
    %v621 = vshrl.u32 %v620, 23
    %v622 = vsub.s32 %v621, 127
    %v623 = vand.u32 2147483647, %v189
    %v624 = vand.u32 %v623, 8388607
    %v625 = vor.u32 %v624, 8388608
    %v626 = vsub.s32 0, %v625
    %v627 = vadd.s32 %v622, 1
    %vm628 = vcmp.gt.s32.totalorder %v627, 0
    %v629 = vsel %vm628, %v627, 0
    %v630 = vshrl.u32 %v629, 5
    %v631 = vand.u32 %v629, 31
    %v632 = vsub.s32 32, %v631
    %v633 = vshrl.u32 683565275, %v632
    %v634 = vshll.u32 683565275, %v631
    %v635 = vshrl.u32 2475754826, %v632
    %v636 = vor.u32 %v634, %v635
    %v637 = vshll.u32 2475754826, %v631
    %v638 = vshrl.u32 2131351028, %v632
    %v639 = vor.u32 %v637, %v638
    %v640 = vshll.u32 2131351028, %v631
    %v641 = vshrl.u32 2102212464, %v632
    %v642 = vor.u32 %v640, %v641
    %v643 = vshll.u32 2102212464, %v631
    %v644 = vshrl.u32 920167782, %v632
    %v645 = vor.u32 %v643, %v644
    %v646 = vshll.u32 920167782, %v631
    %v647 = vshrl.u32 1326507024, %v632
    %v648 = vor.u32 %v646, %v647
    %vm649 = vcmp.lt.s32.totalorder %v630, 1
    %vm650 = vcmp.lt.s32.totalorder %v630, 2
    %vm651 = vcmp.lt.s32.totalorder %v630, 3
    %vm652 = vcmp.lt.s32.totalorder %v630, 4
    %v653 = vsel %vm649, %v633, %v636
    %v654 = vsel %vm652, %v642, 2102212464
    %v655 = vsel %vm651, %v639, %v654
    %v656 = vsel %vm650, %v653, %v655
    %v657 = vsel %vm649, %v636, %v639
    %v658 = vsel %vm652, %v645, 920167782
    %v659 = vsel %vm651, %v642, %v658
    %v660 = vsel %vm650, %v657, %v659
    %v661 = vsel %vm649, %v639, %v642
    %v662 = vsel %vm652, %v648, 1326507024
    %v663 = vsel %vm651, %v645, %v662
    %v664 = vsel %vm650, %v661, %v663
    %v665 = vshll.u32 %v625, 8
    %v666 = vmul.u32.u64.compose %v665, %v664
    %v667 = vextract.low.u32 %v666
    %v668 = vextract.high.u32 %v666
    %v669 = vmul.u32.u64.compose %v665, %v660
    %v670 = vextract.low.u32 %v669
    %v671 = vextract.high.u32 %v669
    %v672 = vmul.u32 %v665, %v656
    %v673 = vadd.s32 %v668, %v670
    %vm674 = vc.u32 %v668, %v670
    %v675 = vadd.s32 %v671, 1
    %v676 = vsel %vm674, %v675, %v671
    %v677 = vadd.s32 %v672, %v676
    %v678 = vadd.s32 %v677, 536870912
    %v679 = vshrl.u32 %v678, 30
    %v680 = vshll.u32 %v679, 30
    %v681 = vsub.s32 %v677, %v680
    %vm682 = vcmp.lt.s32.totalorder %v681, 0
    %v683 = vsub.s32 0, %v681
    %v684 = vsel %vm682, %v683, %v681
    %v685 = vclz %v684
    %v686 = vsub.s32 %v685, 2
    %vm687 = vcmp.gt.s32.totalorder 0, %v686
    %v688 = vsel %vm687, 0, %v686
    %v689 = vsub.s32 32, %v688
    %v690 = vshll.u32 %v681, %v688
    %v691 = vshrl.u32 %v673, %v689
    %v692 = vor.u32 %v690, %v691
    %v693 = vsub.s32 4294967266, %v688
    %v694 = vadd.s32 %v693, 127
    %v695 = vshll.u32 %v694, 23
    %v696 = vor.u32 4788187, %v695
    %v697 = vand.u32 2147483647, %v696
    %v699 = vcvt.s32.f32 %v692
    %v700 = vmul.f32 %v699, %v697
    %v701 = vxor.u32 %v700, 2147483648
    %v702 = vsel %vm619, %v701, %v700
    %v703 = vsub.s32 4, %v679
    %v704 = vsel %vm619, %v703, %v679
    %v705 = vsel %vm618, %v189, %v702
    %v706 = vsel %vm618, 0, %v704
    %v707 = vcosq.f32.pop %v705
    %v708 = vsinq.f32.pop %v705
    %vm709 = vweird.f32 %v189
    %v710 = vadd.s32 %v706, 3
    %v711 = vand.u32 %v710, 3
    %vm712 = vcmp.lt.s32.totalorder %v711, 2
    %vm713 = vcmp.eq.s32.totalorder %v711, 0
    %v714 = vxor.u32 %v708, 2147483648
    %v715 = vsel %vm713, %v707, %v714
    %vm716 = vcmp.eq.s32.totalorder %v711, 2
    %v717 = vxor.u32 %v707, 2147483648
    %v718 = vsel %vm716, %v717, %v708
    %v719 = vsel %vm712, %v715, %v718
    %v720 = vsel %vm709, nan, %v719
    %v721 = vand.u32 2147483647, %v190
    %vm722 = vcmp.le.f32.partialorder %v721, 0.7853982
    %vm723 = vcmp.lt.s32.totalorder %v190, 0
    %v724 = vand.u32 %v190, 2139095040
    %v725 = vshrl.u32 %v724, 23
    %v726 = vsub.s32 %v725, 127
    %v727 = vand.u32 2147483647, %v190
    %v728 = vand.u32 %v727, 8388607
    %v729 = vor.u32 %v728, 8388608
    %v730 = vsub.s32 0, %v729
    %v731 = vadd.s32 %v726, 1
    %vm732 = vcmp.gt.s32.totalorder %v731, 0
    %v733 = vsel %vm732, %v731, 0
    %v734 = vshrl.u32 %v733, 5
    %v735 = vand.u32 %v733, 31
    %v736 = vsub.s32 32, %v735
    %v737 = vshrl.u32 683565275, %v736
    %v738 = vshll.u32 683565275, %v735
    %v739 = vshrl.u32 2475754826, %v736
    %v740 = vor.u32 %v738, %v739
    %v741 = vshll.u32 2475754826, %v735
    %v742 = vshrl.u32 2131351028, %v736
    %v743 = vor.u32 %v741, %v742
    %v744 = vshll.u32 2131351028, %v735
    %v745 = vshrl.u32 2102212464, %v736
    %v746 = vor.u32 %v744, %v745
    %v747 = vshll.u32 2102212464, %v735
    %v748 = vshrl.u32 920167782, %v736
    %v749 = vor.u32 %v747, %v748
    %v750 = vshll.u32 920167782, %v735
    %v751 = vshrl.u32 1326507024, %v736
    %v752 = vor.u32 %v750, %v751
    %vm753 = vcmp.lt.s32.totalorder %v734, 1
    %vm754 = vcmp.lt.s32.totalorder %v734, 2
    %vm755 = vcmp.lt.s32.totalorder %v734, 3
    %vm756 = vcmp.lt.s32.totalorder %v734, 4
    %v757 = vsel %vm753, %v737, %v740
    %v758 = vsel %vm756, %v746, 2102212464
    %v759 = vsel %vm755, %v743, %v758
    %v760 = vsel %vm754, %v757, %v759
    %v761 = vsel %vm753, %v740, %v743
    %v762 = vsel %vm756, %v749, 920167782
    %v763 = vsel %vm755, %v746, %v762
    %v764 = vsel %vm754, %v761, %v763
    %v765 = vsel %vm753, %v743, %v746
    %v766 = vsel %vm756, %v752, 1326507024
    %v767 = vsel %vm755, %v749, %v766
    %v768 = vsel %vm754, %v765, %v767
    %v769 = vshll.u32 %v729, 8
    %v770 = vmul.u32.u64.compose %v769, %v768
    %v771 = vextract.low.u32 %v770
    %v772 = vextract.high.u32 %v770
    %v773 = vmul.u32.u64.compose %v769, %v764
    %v774 = vextract.low.u32 %v773
    %v775 = vextract.high.u32 %v773
    %v776 = vmul.u32 %v769, %v760
    %v777 = vadd.s32 %v772, %v774
    %vm778 = vc.u32 %v772, %v774
    %v779 = vadd.s32 %v775, 1
    %v780 = vsel %vm778, %v779, %v775
    %v781 = vadd.s32 %v776, %v780
    %v782 = vadd.s32 %v781, 536870912
    %v783 = vshrl.u32 %v782, 30
    %v784 = vshll.u32 %v783, 30
    %v785 = vsub.s32 %v781, %v784
    %vm786 = vcmp.lt.s32.totalorder %v785, 0
    %v787 = vsub.s32 0, %v785
    %v788 = vsel %vm786, %v787, %v785
    %v789 = vclz %v788
    %v790 = vsub.s32 %v789, 2
    %vm791 = vcmp.gt.s32.totalorder 0, %v790
    %v792 = vsel %vm791, 0, %v790
    %v793 = vsub.s32 32, %v792
    %v794 = vshll.u32 %v785, %v792
    %v795 = vshrl.u32 %v777, %v793
    %v796 = vor.u32 %v794, %v795
    %v797 = vsub.s32 4294967266, %v792
    %v798 = vadd.s32 %v797, 127
    %v799 = vshll.u32 %v798, 23
    %v800 = vor.u32 4788187, %v799
    %v801 = vand.u32 2147483647, %v800
    %v803 = vcvt.s32.f32 %v796
    %v804 = vmul.f32 %v803, %v801
    %v805 = vxor.u32 %v804, 2147483648
    %v806 = vsel %vm723, %v805, %v804
    %v807 = vsub.s32 4, %v783
    %v808 = vsel %vm723, %v807, %v783
    %v809 = vsel %vm722, %v190, %v806
    %v810 = vsel %vm722, 0, %v808
    %v811 = vcosq.f32.pop %v809
    %v812 = vsinq.f32.pop %v809
    %vm813 = vweird.f32 %v190
    %v814 = vadd.s32 %v810, 3
    %v815 = vand.u32 %v814, 3
    %vm816 = vcmp.lt.s32.totalorder %v815, 2
    %vm817 = vcmp.eq.s32.totalorder %v815, 0
    %v818 = vxor.u32 %v812, 2147483648
    %v819 = vsel %vm817, %v811, %v818
    %vm820 = vcmp.eq.s32.totalorder %v815, 2
    %v821 = vxor.u32 %v811, 2147483648
    %v822 = vsel %vm820, %v821, %v812
    %v823 = vsel %vm816, %v819, %v822
    %v824 = vsel %vm813, nan, %v823
    %v825 = vand.u32 2147483647, %v191
    %vm826 = vcmp.le.f32.partialorder %v825, 0.7853982
    %vm827 = vcmp.lt.s32.totalorder %v191, 0
    %v828 = vand.u32 %v191, 2139095040
    %v829 = vshrl.u32 %v828, 23
    %v830 = vsub.s32 %v829, 127
    %v831 = vand.u32 2147483647, %v191
    %v832 = vand.u32 %v831, 8388607
    %v833 = vor.u32 %v832, 8388608
    %v834 = vsub.s32 0, %v833
    %v835 = vadd.s32 %v830, 1
    %vm836 = vcmp.gt.s32.totalorder %v835, 0
    %v837 = vsel %vm836, %v835, 0
    %v838 = vshrl.u32 %v837, 5
    %v839 = vand.u32 %v837, 31
    %v840 = vsub.s32 32, %v839
    %v841 = vshrl.u32 683565275, %v840
    %v842 = vshll.u32 683565275, %v839
    %v843 = vshrl.u32 2475754826, %v840
    %v844 = vor.u32 %v842, %v843
    %v845 = vshll.u32 2475754826, %v839
    %v846 = vshrl.u32 2131351028, %v840
    %v847 = vor.u32 %v845, %v846
    %v848 = vshll.u32 2131351028, %v839
    %v849 = vshrl.u32 2102212464, %v840
    %v850 = vor.u32 %v848, %v849
    %v851 = vshll.u32 2102212464, %v839
    %v852 = vshrl.u32 920167782, %v840
    %v853 = vor.u32 %v851, %v852
    %v854 = vshll.u32 920167782, %v839
    %v855 = vshrl.u32 1326507024, %v840
    %v856 = vor.u32 %v854, %v855
    %vm857 = vcmp.lt.s32.totalorder %v838, 1
    %vm858 = vcmp.lt.s32.totalorder %v838, 2
    %vm859 = vcmp.lt.s32.totalorder %v838, 3
    %vm860 = vcmp.lt.s32.totalorder %v838, 4
    %v861 = vsel %vm857, %v841, %v844
    %v862 = vsel %vm860, %v850, 2102212464
    %v863 = vsel %vm859, %v847, %v862
    %v864 = vsel %vm858, %v861, %v863
    %v865 = vsel %vm857, %v844, %v847
    %v866 = vsel %vm860, %v853, 920167782
    %v867 = vsel %vm859, %v850, %v866
    %v868 = vsel %vm858, %v865, %v867
    %v869 = vsel %vm857, %v847, %v850
    %v870 = vsel %vm860, %v856, 1326507024
    %v871 = vsel %vm859, %v853, %v870
    %v872 = vsel %vm858, %v869, %v871
    %v873 = vshll.u32 %v833, 8
    %v874 = vmul.u32.u64.compose %v873, %v872
    %v875 = vextract.low.u32 %v874
    %v876 = vextract.high.u32 %v874
    %v877 = vmul.u32.u64.compose %v873, %v868
    %v878 = vextract.low.u32 %v877
    %v879 = vextract.high.u32 %v877
    %v880 = vmul.u32 %v873, %v864
    %v881 = vadd.s32 %v876, %v878
    %vm882 = vc.u32 %v876, %v878
    %v883 = vadd.s32 %v879, 1
    %v884 = vsel %vm882, %v883, %v879
    %v885 = vadd.s32 %v880, %v884
    %v886 = vadd.s32 %v885, 536870912
    %v887 = vshrl.u32 %v886, 30
    %v888 = vshll.u32 %v887, 30
    %v889 = vsub.s32 %v885, %v888
    %vm890 = vcmp.lt.s32.totalorder %v889, 0
    %v891 = vsub.s32 0, %v889
    %v892 = vsel %vm890, %v891, %v889
    %v893 = vclz %v892
    %v894 = vsub.s32 %v893, 2
    %vm895 = vcmp.gt.s32.totalorder 0, %v894
    %v896 = vsel %vm895, 0, %v894
    %v897 = vsub.s32 32, %v896
    %v898 = vshll.u32 %v889, %v896
    %v899 = vshrl.u32 %v881, %v897
    %v900 = vor.u32 %v898, %v899
    %v901 = vsub.s32 4294967266, %v896
    %v902 = vadd.s32 %v901, 127
    %v903 = vshll.u32 %v902, 23
    %v904 = vor.u32 4788187, %v903
    %v905 = vand.u32 2147483647, %v904
    %v907 = vcvt.s32.f32 %v900
    %v908 = vmul.f32 %v907, %v905
    %v909 = vxor.u32 %v908, 2147483648
    %v910 = vsel %vm827, %v909, %v908
    %v911 = vsub.s32 4, %v887
    %v912 = vsel %vm827, %v911, %v887
    %v913 = vsel %vm826, %v191, %v910
    %v914 = vsel %vm826, 0, %v912
    %v915 = vcosq.f32.pop %v913
    %v916 = vsinq.f32.pop %v913
    %vm917 = vweird.f32 %v191
    %v918 = vadd.s32 %v914, 3
    %v919 = vand.u32 %v918, 3
    %vm920 = vcmp.lt.s32.totalorder %v919, 2
    %vm921 = vcmp.eq.s32.totalorder %v919, 0
    %v922 = vxor.u32 %v916, 2147483648
    %v923 = vsel %vm921, %v915, %v922
    %vm924 = vcmp.eq.s32.totalorder %v919, 2
    %v925 = vxor.u32 %v915, 2147483648
    %v926 = vsel %vm924, %v925, %v916
    %v927 = vsel %vm920, %v923, %v926
    %v928 = vsel %vm917, nan, %v927
    %v929 = vand.u32 2147483647, %v192
    %vm930 = vcmp.le.f32.partialorder %v929, 0.7853982
    %vm931 = vcmp.lt.s32.totalorder %v192, 0
    %v932 = vand.u32 %v192, 2139095040
    %v933 = vshrl.u32 %v932, 23
    %v934 = vsub.s32 %v933, 127
    %v935 = vand.u32 2147483647, %v192
    %v936 = vand.u32 %v935, 8388607
    %v937 = vor.u32 %v936, 8388608
    %v938 = vsub.s32 0, %v937
    %v939 = vadd.s32 %v934, 1
    %vm940 = vcmp.gt.s32.totalorder %v939, 0
    %v941 = vsel %vm940, %v939, 0
    %v942 = vshrl.u32 %v941, 5
    %v943 = vand.u32 %v941, 31
    %v944 = vsub.s32 32, %v943
    %v945 = vshrl.u32 683565275, %v944
    %v946 = vshll.u32 683565275, %v943
    %v947 = vshrl.u32 2475754826, %v944
    %v948 = vor.u32 %v946, %v947
    %v949 = vshll.u32 2475754826, %v943
    %v950 = vshrl.u32 2131351028, %v944
    %v951 = vor.u32 %v949, %v950
    %v952 = vshll.u32 2131351028, %v943
    %v953 = vshrl.u32 2102212464, %v944
    %v954 = vor.u32 %v952, %v953
    %v955 = vshll.u32 2102212464, %v943
    %v956 = vshrl.u32 920167782, %v944
    %v957 = vor.u32 %v955, %v956
    %v958 = vshll.u32 920167782, %v943
    %v959 = vshrl.u32 1326507024, %v944
    %v960 = vor.u32 %v958, %v959
    %vm961 = vcmp.lt.s32.totalorder %v942, 1
    %vm962 = vcmp.lt.s32.totalorder %v942, 2
    %vm963 = vcmp.lt.s32.totalorder %v942, 3
    %vm964 = vcmp.lt.s32.totalorder %v942, 4
    %v965 = vsel %vm961, %v945, %v948
    %v966 = vsel %vm964, %v954, 2102212464
    %v967 = vsel %vm963, %v951, %v966
    %v968 = vsel %vm962, %v965, %v967
    %v969 = vsel %vm961, %v948, %v951
    %v970 = vsel %vm964, %v957, 920167782
    %v971 = vsel %vm963, %v954, %v970
    %v972 = vsel %vm962, %v969, %v971
    %v973 = vsel %vm961, %v951, %v954
    %v974 = vsel %vm964, %v960, 1326507024
    %v975 = vsel %vm963, %v957, %v974
    %v976 = vsel %vm962, %v973, %v975
    %v977 = vshll.u32 %v937, 8
    %v978 = vmul.u32.u64.compose %v977, %v976
    %v979 = vextract.low.u32 %v978
    %v980 = vextract.high.u32 %v978
    %v981 = vmul.u32.u64.compose %v977, %v972
    %v982 = vextract.low.u32 %v981
    %v983 = vextract.high.u32 %v981
    %v984 = vmul.u32 %v977, %v968
    %v985 = vadd.s32 %v980, %v982
    %vm986 = vc.u32 %v980, %v982
    %v987 = vadd.s32 %v983, 1
    %v988 = vsel %vm986, %v987, %v983
    %v989 = vadd.s32 %v984, %v988
    %v990 = vadd.s32 %v989, 536870912
    %v991 = vshrl.u32 %v990, 30
    %v992 = vshll.u32 %v991, 30
    %v993 = vsub.s32 %v989, %v992
    %vm994 = vcmp.lt.s32.totalorder %v993, 0
    %v995 = vsub.s32 0, %v993
    %v996 = vsel %vm994, %v995, %v993
    %v997 = vclz %v996
    %v998 = vsub.s32 %v997, 2
    %vm999 = vcmp.gt.s32.totalorder 0, %v998
    %v1000 = vsel %vm999, 0, %v998
    %v1001 = vsub.s32 32, %v1000
    %v1002 = vshll.u32 %v993, %v1000
    %v1003 = vshrl.u32 %v985, %v1001
    %v1004 = vor.u32 %v1002, %v1003
    %v1005 = vsub.s32 4294967266, %v1000
    %v1006 = vadd.s32 %v1005, 127
    %v1007 = vshll.u32 %v1006, 23
    %v1008 = vor.u32 4788187, %v1007
    %v1009 = vand.u32 2147483647, %v1008
    %v1011 = vcvt.s32.f32 %v1004
    %v1012 = vmul.f32 %v1011, %v1009
    %v1013 = vxor.u32 %v1012, 2147483648
    %v1014 = vsel %vm931, %v1013, %v1012
    %v1015 = vsub.s32 4, %v991
    %v1016 = vsel %vm931, %v1015, %v991
    %v1017 = vsel %vm930, %v192, %v1014
    %v1018 = vsel %vm930, 0, %v1016
    %v1019 = vcosq.f32.pop %v1017
    %v1020 = vsinq.f32.pop %v1017
    %vm1021 = vweird.f32 %v192
    %v1022 = vadd.s32 %v1018, 3
    %v1023 = vand.u32 %v1022, 3
    %vm1024 = vcmp.lt.s32.totalorder %v1023, 2
    %vm1025 = vcmp.eq.s32.totalorder %v1023, 0
    %v1026 = vxor.u32 %v1020, 2147483648
    %v1027 = vsel %vm1025, %v1019, %v1026
    %vm1028 = vcmp.eq.s32.totalorder %v1023, 2
    %v1029 = vxor.u32 %v1019, 2147483648
    %v1030 = vsel %vm1028, %v1029, %v1020
    %v1031 = vsel %vm1024, %v1027, %v1030
    %v1032 = vsel %vm1021, nan, %v1031
    %v1033 = vand.u32 2147483647, %v193
    %vm1034 = vcmp.le.f32.partialorder %v1033, 0.7853982
    %vm1035 = vcmp.lt.s32.totalorder %v193, 0
    %v1036 = vand.u32 %v193, 2139095040
    %v1037 = vshrl.u32 %v1036, 23
    %v1038 = vsub.s32 %v1037, 127
    %v1039 = vand.u32 2147483647, %v193
    %v1040 = vand.u32 %v1039, 8388607
    %v1041 = vor.u32 %v1040, 8388608
    %v1042 = vsub.s32 0, %v1041
    %v1043 = vadd.s32 %v1038, 1
    %vm1044 = vcmp.gt.s32.totalorder %v1043, 0
    %v1045 = vsel %vm1044, %v1043, 0
    %v1046 = vshrl.u32 %v1045, 5
    %v1047 = vand.u32 %v1045, 31
    %v1048 = vsub.s32 32, %v1047
    %v1049 = vshrl.u32 683565275, %v1048
    %v1050 = vshll.u32 683565275, %v1047
    %v1051 = vshrl.u32 2475754826, %v1048
    %v1052 = vor.u32 %v1050, %v1051
    %v1053 = vshll.u32 2475754826, %v1047
    %v1054 = vshrl.u32 2131351028, %v1048
    %v1055 = vor.u32 %v1053, %v1054
    %v1056 = vshll.u32 2131351028, %v1047
    %v1057 = vshrl.u32 2102212464, %v1048
    %v1058 = vor.u32 %v1056, %v1057
    %v1059 = vshll.u32 2102212464, %v1047
    %v1060 = vshrl.u32 920167782, %v1048
    %v1061 = vor.u32 %v1059, %v1060
    %v1062 = vshll.u32 920167782, %v1047
    %v1063 = vshrl.u32 1326507024, %v1048
    %v1064 = vor.u32 %v1062, %v1063
    %vm1065 = vcmp.lt.s32.totalorder %v1046, 1
    %vm1066 = vcmp.lt.s32.totalorder %v1046, 2
    %vm1067 = vcmp.lt.s32.totalorder %v1046, 3
    %vm1068 = vcmp.lt.s32.totalorder %v1046, 4
    %v1069 = vsel %vm1065, %v1049, %v1052
    %v1070 = vsel %vm1068, %v1058, 2102212464
    %v1071 = vsel %vm1067, %v1055, %v1070
    %v1072 = vsel %vm1066, %v1069, %v1071
    %v1073 = vsel %vm1065, %v1052, %v1055
    %v1074 = vsel %vm1068, %v1061, 920167782
    %v1075 = vsel %vm1067, %v1058, %v1074
    %v1076 = vsel %vm1066, %v1073, %v1075
    %v1077 = vsel %vm1065, %v1055, %v1058
    %v1078 = vsel %vm1068, %v1064, 1326507024
    %v1079 = vsel %vm1067, %v1061, %v1078
    %v1080 = vsel %vm1066, %v1077, %v1079
    %v1081 = vshll.u32 %v1041, 8
    %v1082 = vmul.u32.u64.compose %v1081, %v1080
    %v1083 = vextract.low.u32 %v1082
    %v1084 = vextract.high.u32 %v1082
    %v1085 = vmul.u32.u64.compose %v1081, %v1076
    %v1086 = vextract.low.u32 %v1085
    %v1087 = vextract.high.u32 %v1085
    %v1088 = vmul.u32 %v1081, %v1072
    %v1089 = vadd.s32 %v1084, %v1086
    %vm1090 = vc.u32 %v1084, %v1086
    %v1091 = vadd.s32 %v1087, 1
    %v1092 = vsel %vm1090, %v1091, %v1087
    %v1093 = vadd.s32 %v1088, %v1092
    %v1094 = vadd.s32 %v1093, 536870912
    %v1095 = vshrl.u32 %v1094, 30
    %v1096 = vshll.u32 %v1095, 30
    %v1097 = vsub.s32 %v1093, %v1096
    %vm1098 = vcmp.lt.s32.totalorder %v1097, 0
    %v1099 = vsub.s32 0, %v1097
    %v1100 = vsel %vm1098, %v1099, %v1097
    %v1101 = vclz %v1100
    %v1102 = vsub.s32 %v1101, 2
    %vm1103 = vcmp.gt.s32.totalorder 0, %v1102
    %v1104 = vsel %vm1103, 0, %v1102
    %v1105 = vsub.s32 32, %v1104
    %v1106 = vshll.u32 %v1097, %v1104
    %v1107 = vshrl.u32 %v1089, %v1105
    %v1108 = vor.u32 %v1106, %v1107
    %v1109 = vsub.s32 4294967266, %v1104
    %v1110 = vadd.s32 %v1109, 127
    %v1111 = vshll.u32 %v1110, 23
    %v1112 = vor.u32 4788187, %v1111
    %v1113 = vand.u32 2147483647, %v1112
    %v1115 = vcvt.s32.f32 %v1108
    %v1116 = vmul.f32 %v1115, %v1113
    %v1117 = vxor.u32 %v1116, 2147483648
    %v1118 = vsel %vm1035, %v1117, %v1116
    %v1119 = vsub.s32 4, %v1095
    %v1120 = vsel %vm1035, %v1119, %v1095
    %v1121 = vsel %vm1034, %v193, %v1118
    %v1122 = vsel %vm1034, 0, %v1120
    %v1123 = vcosq.f32.pop %v1121
    %v1124 = vsinq.f32.pop %v1121
    %vm1125 = vweird.f32 %v193
    %v1126 = vadd.s32 %v1122, 3
    %v1127 = vand.u32 %v1126, 3
    %vm1128 = vcmp.lt.s32.totalorder %v1127, 2
    %vm1129 = vcmp.eq.s32.totalorder %v1127, 0
    %v1130 = vxor.u32 %v1124, 2147483648
    %v1131 = vsel %vm1129, %v1123, %v1130
    %vm1132 = vcmp.eq.s32.totalorder %v1127, 2
    %v1133 = vxor.u32 %v1123, 2147483648
    %v1134 = vsel %vm1132, %v1133, %v1124
    %v1135 = vsel %vm1128, %v1131, %v1134
    %v1136 = vsel %vm1125, nan, %v1135
    %v1137 = vand.u32 2147483647, %v194
    %vm1138 = vcmp.le.f32.partialorder %v1137, 0.7853982
    %vm1139 = vcmp.lt.s32.totalorder %v194, 0
    %v1140 = vand.u32 %v194, 2139095040
    %v1141 = vshrl.u32 %v1140, 23
    %v1142 = vsub.s32 %v1141, 127
    %v1143 = vand.u32 2147483647, %v194
    %v1144 = vand.u32 %v1143, 8388607
    %v1145 = vor.u32 %v1144, 8388608
    %v1146 = vsub.s32 0, %v1145
    %v1147 = vadd.s32 %v1142, 1
    %vm1148 = vcmp.gt.s32.totalorder %v1147, 0
    %v1149 = vsel %vm1148, %v1147, 0
    %v1150 = vshrl.u32 %v1149, 5
    %v1151 = vand.u32 %v1149, 31
    %v1152 = vsub.s32 32, %v1151
    %v1153 = vshrl.u32 683565275, %v1152
    %v1154 = vshll.u32 683565275, %v1151
    %v1155 = vshrl.u32 2475754826, %v1152
    %v1156 = vor.u32 %v1154, %v1155
    %v1157 = vshll.u32 2475754826, %v1151
    %v1158 = vshrl.u32 2131351028, %v1152
    %v1159 = vor.u32 %v1157, %v1158
    %v1160 = vshll.u32 2131351028, %v1151
    %v1161 = vshrl.u32 2102212464, %v1152
    %v1162 = vor.u32 %v1160, %v1161
    %v1163 = vshll.u32 2102212464, %v1151
    %v1164 = vshrl.u32 920167782, %v1152
    %v1165 = vor.u32 %v1163, %v1164
    %v1166 = vshll.u32 920167782, %v1151
    %v1167 = vshrl.u32 1326507024, %v1152
    %v1168 = vor.u32 %v1166, %v1167
    %vm1169 = vcmp.lt.s32.totalorder %v1150, 1
    %vm1170 = vcmp.lt.s32.totalorder %v1150, 2
    %vm1171 = vcmp.lt.s32.totalorder %v1150, 3
    %vm1172 = vcmp.lt.s32.totalorder %v1150, 4
    %v1173 = vsel %vm1169, %v1153, %v1156
    %v1174 = vsel %vm1172, %v1162, 2102212464
    %v1175 = vsel %vm1171, %v1159, %v1174
    %v1176 = vsel %vm1170, %v1173, %v1175
    %v1177 = vsel %vm1169, %v1156, %v1159
    %v1178 = vsel %vm1172, %v1165, 920167782
    %v1179 = vsel %vm1171, %v1162, %v1178
    %v1180 = vsel %vm1170, %v1177, %v1179
    %v1181 = vsel %vm1169, %v1159, %v1162
    %v1182 = vsel %vm1172, %v1168, 1326507024
    %v1183 = vsel %vm1171, %v1165, %v1182
    %v1184 = vsel %vm1170, %v1181, %v1183
    %v1185 = vshll.u32 %v1145, 8
    %v1186 = vmul.u32.u64.compose %v1185, %v1184
    %v1187 = vextract.low.u32 %v1186
    %v1188 = vextract.high.u32 %v1186
    %v1189 = vmul.u32.u64.compose %v1185, %v1180
    %v1190 = vextract.low.u32 %v1189
    %v1191 = vextract.high.u32 %v1189
    %v1192 = vmul.u32 %v1185, %v1176
    %v1193 = vadd.s32 %v1188, %v1190
    %vm1194 = vc.u32 %v1188, %v1190
    %v1195 = vadd.s32 %v1191, 1
    %v1196 = vsel %vm1194, %v1195, %v1191
    %v1197 = vadd.s32 %v1192, %v1196
    %v1198 = vadd.s32 %v1197, 536870912
    %v1199 = vshrl.u32 %v1198, 30
    %v1200 = vshll.u32 %v1199, 30
    %v1201 = vsub.s32 %v1197, %v1200
    %vm1202 = vcmp.lt.s32.totalorder %v1201, 0
    %v1203 = vsub.s32 0, %v1201
    %v1204 = vsel %vm1202, %v1203, %v1201
    %v1205 = vclz %v1204
    %v1206 = vsub.s32 %v1205, 2
    %vm1207 = vcmp.gt.s32.totalorder 0, %v1206
    %v1208 = vsel %vm1207, 0, %v1206
    %v1209 = vsub.s32 32, %v1208
    %v1210 = vshll.u32 %v1201, %v1208
    %v1211 = vshrl.u32 %v1193, %v1209
    %v1212 = vor.u32 %v1210, %v1211
    %v1213 = vsub.s32 4294967266, %v1208
    %v1214 = vadd.s32 %v1213, 127
    %v1215 = vshll.u32 %v1214, 23
    %v1216 = vor.u32 4788187, %v1215
    %v1217 = vand.u32 2147483647, %v1216
    %v1219 = vcvt.s32.f32 %v1212
    %v1220 = vmul.f32 %v1219, %v1217
    %v1221 = vxor.u32 %v1220, 2147483648
    %v1222 = vsel %vm1139, %v1221, %v1220
    %v1223 = vsub.s32 4, %v1199
    %v1224 = vsel %vm1139, %v1223, %v1199
    %v1225 = vsel %vm1138, %v194, %v1222
    %v1226 = vsel %vm1138, 0, %v1224
    %v1227 = vcosq.f32.pop %v1225
    %v1228 = vsinq.f32.pop %v1225
    %vm1229 = vweird.f32 %v194
    %v1230 = vadd.s32 %v1226, 3
    %v1231 = vand.u32 %v1230, 3
    %vm1232 = vcmp.lt.s32.totalorder %v1231, 2
    %vm1233 = vcmp.eq.s32.totalorder %v1231, 0
    %v1234 = vxor.u32 %v1228, 2147483648
    %v1235 = vsel %vm1233, %v1227, %v1234
    %vm1236 = vcmp.eq.s32.totalorder %v1231, 2
    %v1237 = vxor.u32 %v1227, 2147483648
    %v1238 = vsel %vm1236, %v1237, %v1228
    %v1239 = vsel %vm1232, %v1235, %v1238
    %v1240 = vsel %vm1229, nan, %v1239
    %v1241 = vand.u32 2147483647, %v195
    %vm1242 = vcmp.le.f32.partialorder %v1241, 0.7853982
    %vm1243 = vcmp.lt.s32.totalorder %v195, 0
    %v1244 = vand.u32 %v195, 2139095040
    %v1245 = vshrl.u32 %v1244, 23
    %v1246 = vsub.s32 %v1245, 127
    %v1247 = vand.u32 2147483647, %v195
    %v1248 = vand.u32 %v1247, 8388607
    %v1249 = vor.u32 %v1248, 8388608
    %v1250 = vsub.s32 0, %v1249
    %v1251 = vadd.s32 %v1246, 1
    %vm1252 = vcmp.gt.s32.totalorder %v1251, 0
    %v1253 = vsel %vm1252, %v1251, 0
    %v1254 = vshrl.u32 %v1253, 5
    %v1255 = vand.u32 %v1253, 31
    %v1256 = vsub.s32 32, %v1255
    %v1257 = vshrl.u32 683565275, %v1256
    %v1258 = vshll.u32 683565275, %v1255
    %v1259 = vshrl.u32 2475754826, %v1256
    %v1260 = vor.u32 %v1258, %v1259
    %v1261 = vshll.u32 2475754826, %v1255
    %v1262 = vshrl.u32 2131351028, %v1256
    %v1263 = vor.u32 %v1261, %v1262
    %v1264 = vshll.u32 2131351028, %v1255
    %v1265 = vshrl.u32 2102212464, %v1256
    %v1266 = vor.u32 %v1264, %v1265
    %v1267 = vshll.u32 2102212464, %v1255
    %v1268 = vshrl.u32 920167782, %v1256
    %v1269 = vor.u32 %v1267, %v1268
    %v1270 = vshll.u32 920167782, %v1255
    %v1271 = vshrl.u32 1326507024, %v1256
    %v1272 = vor.u32 %v1270, %v1271
    %vm1273 = vcmp.lt.s32.totalorder %v1254, 1
    %vm1274 = vcmp.lt.s32.totalorder %v1254, 2
    %vm1275 = vcmp.lt.s32.totalorder %v1254, 3
    %vm1276 = vcmp.lt.s32.totalorder %v1254, 4
    %v1277 = vsel %vm1273, %v1257, %v1260
    %v1278 = vsel %vm1276, %v1266, 2102212464
    %v1279 = vsel %vm1275, %v1263, %v1278
    %v1280 = vsel %vm1274, %v1277, %v1279
    %v1281 = vsel %vm1273, %v1260, %v1263
    %v1282 = vsel %vm1276, %v1269, 920167782
    %v1283 = vsel %vm1275, %v1266, %v1282
    %v1284 = vsel %vm1274, %v1281, %v1283
    %v1285 = vsel %vm1273, %v1263, %v1266
    %v1286 = vsel %vm1276, %v1272, 1326507024
    %v1287 = vsel %vm1275, %v1269, %v1286
    %v1288 = vsel %vm1274, %v1285, %v1287
    %v1289 = vshll.u32 %v1249, 8
    %v1290 = vmul.u32.u64.compose %v1289, %v1288
    %v1291 = vextract.low.u32 %v1290
    %v1292 = vextract.high.u32 %v1290
    %v1293 = vmul.u32.u64.compose %v1289, %v1284
    %v1294 = vextract.low.u32 %v1293
    %v1295 = vextract.high.u32 %v1293
    %v1296 = vmul.u32 %v1289, %v1280
    %v1297 = vadd.s32 %v1292, %v1294
    %vm1298 = vc.u32 %v1292, %v1294
    %v1299 = vadd.s32 %v1295, 1
    %v1300 = vsel %vm1298, %v1299, %v1295
    %v1301 = vadd.s32 %v1296, %v1300
    %v1302 = vadd.s32 %v1301, 536870912
    %v1303 = vshrl.u32 %v1302, 30
    %v1304 = vshll.u32 %v1303, 30
    %v1305 = vsub.s32 %v1301, %v1304
    %vm1306 = vcmp.lt.s32.totalorder %v1305, 0
    %v1307 = vsub.s32 0, %v1305
    %v1308 = vsel %vm1306, %v1307, %v1305
    %v1309 = vclz %v1308
    %v1310 = vsub.s32 %v1309, 2
    %vm1311 = vcmp.gt.s32.totalorder 0, %v1310
    %v1312 = vsel %vm1311, 0, %v1310
    %v1313 = vsub.s32 32, %v1312
    %v1314 = vshll.u32 %v1305, %v1312
    %v1315 = vshrl.u32 %v1297, %v1313
    %v1316 = vor.u32 %v1314, %v1315
    %v1317 = vsub.s32 4294967266, %v1312
    %v1318 = vadd.s32 %v1317, 127
    %v1319 = vshll.u32 %v1318, 23
    %v1320 = vor.u32 4788187, %v1319
    %v1321 = vand.u32 2147483647, %v1320
    %v1323 = vcvt.s32.f32 %v1316
    %v1324 = vmul.f32 %v1323, %v1321
    %v1325 = vxor.u32 %v1324, 2147483648
    %v1326 = vsel %vm1243, %v1325, %v1324
    %v1327 = vsub.s32 4, %v1303
    %v1328 = vsel %vm1243, %v1327, %v1303
    %v1329 = vsel %vm1242, %v195, %v1326
    %v1330 = vsel %vm1242, 0, %v1328
    %v1331 = vcosq.f32.pop %v1329
    %v1332 = vsinq.f32.pop %v1329
    %vm1333 = vweird.f32 %v195
    %v1334 = vadd.s32 %v1330, 3
    %v1335 = vand.u32 %v1334, 3
    %vm1336 = vcmp.lt.s32.totalorder %v1335, 2
    %vm1337 = vcmp.eq.s32.totalorder %v1335, 0
    %v1338 = vxor.u32 %v1332, 2147483648
    %v1339 = vsel %vm1337, %v1331, %v1338
    %vm1340 = vcmp.eq.s32.totalorder %v1335, 2
    %v1341 = vxor.u32 %v1331, 2147483648
    %v1342 = vsel %vm1340, %v1341, %v1332
    %v1343 = vsel %vm1336, %v1339, %v1342
    %v1344 = vsel %vm1333, nan, %v1343
    %v1345 = vand.u32 2147483647, %v196
    %vm1346 = vcmp.le.f32.partialorder %v1345, 0.7853982
    %vm1347 = vcmp.lt.s32.totalorder %v196, 0
    %v1348 = vand.u32 %v196, 2139095040
    %v1349 = vshrl.u32 %v1348, 23
    %v1350 = vsub.s32 %v1349, 127
    %v1351 = vand.u32 2147483647, %v196
    %v1352 = vand.u32 %v1351, 8388607
    %v1353 = vor.u32 %v1352, 8388608
    %v1354 = vsub.s32 0, %v1353
    %v1355 = vadd.s32 %v1350, 1
    %vm1356 = vcmp.gt.s32.totalorder %v1355, 0
    %v1357 = vsel %vm1356, %v1355, 0
    %v1358 = vshrl.u32 %v1357, 5
    %v1359 = vand.u32 %v1357, 31
    %v1360 = vsub.s32 32, %v1359
    %v1361 = vshrl.u32 683565275, %v1360
    %v1362 = vshll.u32 683565275, %v1359
    %v1363 = vshrl.u32 2475754826, %v1360
    %v1364 = vor.u32 %v1362, %v1363
    %v1365 = vshll.u32 2475754826, %v1359
    %v1366 = vshrl.u32 2131351028, %v1360
    %v1367 = vor.u32 %v1365, %v1366
    %v1368 = vshll.u32 2131351028, %v1359
    %v1369 = vshrl.u32 2102212464, %v1360
    %v1370 = vor.u32 %v1368, %v1369
    %v1371 = vshll.u32 2102212464, %v1359
    %v1372 = vshrl.u32 920167782, %v1360
    %v1373 = vor.u32 %v1371, %v1372
    %v1374 = vshll.u32 920167782, %v1359
    %v1375 = vshrl.u32 1326507024, %v1360
    %v1376 = vor.u32 %v1374, %v1375
    %vm1377 = vcmp.lt.s32.totalorder %v1358, 1
    %vm1378 = vcmp.lt.s32.totalorder %v1358, 2
    %vm1379 = vcmp.lt.s32.totalorder %v1358, 3
    %vm1380 = vcmp.lt.s32.totalorder %v1358, 4
    %v1381 = vsel %vm1377, %v1361, %v1364
    %v1382 = vsel %vm1380, %v1370, 2102212464
    %v1383 = vsel %vm1379, %v1367, %v1382
    %v1384 = vsel %vm1378, %v1381, %v1383
    %v1385 = vsel %vm1377, %v1364, %v1367
    %v1386 = vsel %vm1380, %v1373, 920167782
    %v1387 = vsel %vm1379, %v1370, %v1386
    %v1388 = vsel %vm1378, %v1385, %v1387
    %v1389 = vsel %vm1377, %v1367, %v1370
    %v1390 = vsel %vm1380, %v1376, 1326507024
    %v1391 = vsel %vm1379, %v1373, %v1390
    %v1392 = vsel %vm1378, %v1389, %v1391
    %v1393 = vshll.u32 %v1353, 8
    %v1394 = vmul.u32.u64.compose %v1393, %v1392
    %v1395 = vextract.low.u32 %v1394
    %v1396 = vextract.high.u32 %v1394
    %v1397 = vmul.u32.u64.compose %v1393, %v1388
    %v1398 = vextract.low.u32 %v1397
    %v1399 = vextract.high.u32 %v1397
    %v1400 = vmul.u32 %v1393, %v1384
    %v1401 = vadd.s32 %v1396, %v1398
    %vm1402 = vc.u32 %v1396, %v1398
    %v1403 = vadd.s32 %v1399, 1
    %v1404 = vsel %vm1402, %v1403, %v1399
    %v1405 = vadd.s32 %v1400, %v1404
    %v1406 = vadd.s32 %v1405, 536870912
    %v1407 = vshrl.u32 %v1406, 30
    %v1408 = vshll.u32 %v1407, 30
    %v1409 = vsub.s32 %v1405, %v1408
    %vm1410 = vcmp.lt.s32.totalorder %v1409, 0
    %v1411 = vsub.s32 0, %v1409
    %v1412 = vsel %vm1410, %v1411, %v1409
    %v1413 = vclz %v1412
    %v1414 = vsub.s32 %v1413, 2
    %vm1415 = vcmp.gt.s32.totalorder 0, %v1414
    %v1416 = vsel %vm1415, 0, %v1414
    %v1417 = vsub.s32 32, %v1416
    %v1418 = vshll.u32 %v1409, %v1416
    %v1419 = vshrl.u32 %v1401, %v1417
    %v1420 = vor.u32 %v1418, %v1419
    %v1421 = vsub.s32 4294967266, %v1416
    %v1422 = vadd.s32 %v1421, 127
    %v1423 = vshll.u32 %v1422, 23
    %v1424 = vor.u32 4788187, %v1423
    %v1425 = vand.u32 2147483647, %v1424
    %v1427 = vcvt.s32.f32 %v1420
    %v1428 = vmul.f32 %v1427, %v1425
    %v1429 = vxor.u32 %v1428, 2147483648
    %v1430 = vsel %vm1347, %v1429, %v1428
    %v1431 = vsub.s32 4, %v1407
    %v1432 = vsel %vm1347, %v1431, %v1407
    %v1433 = vsel %vm1346, %v196, %v1430
    %v1434 = vsel %vm1346, 0, %v1432
    %v1435 = vcosq.f32.pop %v1433
    %v1436 = vsinq.f32.pop %v1433
    %vm1437 = vweird.f32 %v196
    %v1438 = vadd.s32 %v1434, 3
    %v1439 = vand.u32 %v1438, 3
    %vm1440 = vcmp.lt.s32.totalorder %v1439, 2
    %vm1441 = vcmp.eq.s32.totalorder %v1439, 0
    %v1442 = vxor.u32 %v1436, 2147483648
    %v1443 = vsel %vm1441, %v1435, %v1442
    %vm1444 = vcmp.eq.s32.totalorder %v1439, 2
    %v1445 = vxor.u32 %v1435, 2147483648
    %v1446 = vsel %vm1444, %v1445, %v1436
    %v1447 = vsel %vm1440, %v1443, %v1446
    %v1448 = vsel %vm1437, nan, %v1447
    %v1449 = vand.u32 2147483647, %v197
    %vm1450 = vcmp.le.f32.partialorder %v1449, 0.7853982
    %vm1451 = vcmp.lt.s32.totalorder %v197, 0
    %v1452 = vand.u32 %v197, 2139095040
    %v1453 = vshrl.u32 %v1452, 23
    %v1454 = vsub.s32 %v1453, 127
    %v1455 = vand.u32 2147483647, %v197
    %v1456 = vand.u32 %v1455, 8388607
    %v1457 = vor.u32 %v1456, 8388608
    %v1458 = vsub.s32 0, %v1457
    %v1459 = vadd.s32 %v1454, 1
    %vm1460 = vcmp.gt.s32.totalorder %v1459, 0
    %v1461 = vsel %vm1460, %v1459, 0
    %v1462 = vshrl.u32 %v1461, 5
    %v1463 = vand.u32 %v1461, 31
    %v1464 = vsub.s32 32, %v1463
    %v1465 = vshrl.u32 683565275, %v1464
    %v1466 = vshll.u32 683565275, %v1463
    %v1467 = vshrl.u32 2475754826, %v1464
    %v1468 = vor.u32 %v1466, %v1467
    %v1469 = vshll.u32 2475754826, %v1463
    %v1470 = vshrl.u32 2131351028, %v1464
    %v1471 = vor.u32 %v1469, %v1470
    %v1472 = vshll.u32 2131351028, %v1463
    %v1473 = vshrl.u32 2102212464, %v1464
    %v1474 = vor.u32 %v1472, %v1473
    %v1475 = vshll.u32 2102212464, %v1463
    %v1476 = vshrl.u32 920167782, %v1464
    %v1477 = vor.u32 %v1475, %v1476
    %v1478 = vshll.u32 920167782, %v1463
    %v1479 = vshrl.u32 1326507024, %v1464
    %v1480 = vor.u32 %v1478, %v1479
    %vm1481 = vcmp.lt.s32.totalorder %v1462, 1
    %vm1482 = vcmp.lt.s32.totalorder %v1462, 2
    %vm1483 = vcmp.lt.s32.totalorder %v1462, 3
    %vm1484 = vcmp.lt.s32.totalorder %v1462, 4
    %v1485 = vsel %vm1481, %v1465, %v1468
    %v1486 = vsel %vm1484, %v1474, 2102212464
    %v1487 = vsel %vm1483, %v1471, %v1486
    %v1488 = vsel %vm1482, %v1485, %v1487
    %v1489 = vsel %vm1481, %v1468, %v1471
    %v1490 = vsel %vm1484, %v1477, 920167782
    %v1491 = vsel %vm1483, %v1474, %v1490
    %v1492 = vsel %vm1482, %v1489, %v1491
    %v1493 = vsel %vm1481, %v1471, %v1474
    %v1494 = vsel %vm1484, %v1480, 1326507024
    %v1495 = vsel %vm1483, %v1477, %v1494
    %v1496 = vsel %vm1482, %v1493, %v1495
    %v1497 = vshll.u32 %v1457, 8
    %v1498 = vmul.u32.u64.compose %v1497, %v1496
    %v1499 = vextract.low.u32 %v1498
    %v1500 = vextract.high.u32 %v1498
    %v1501 = vmul.u32.u64.compose %v1497, %v1492
    %v1502 = vextract.low.u32 %v1501
    %v1503 = vextract.high.u32 %v1501
    %v1504 = vmul.u32 %v1497, %v1488
    %v1505 = vadd.s32 %v1500, %v1502
    %vm1506 = vc.u32 %v1500, %v1502
    %v1507 = vadd.s32 %v1503, 1
    %v1508 = vsel %vm1506, %v1507, %v1503
    %v1509 = vadd.s32 %v1504, %v1508
    %v1510 = vadd.s32 %v1509, 536870912
    %v1511 = vshrl.u32 %v1510, 30
    %v1512 = vshll.u32 %v1511, 30
    %v1513 = vsub.s32 %v1509, %v1512
    %vm1514 = vcmp.lt.s32.totalorder %v1513, 0
    %v1515 = vsub.s32 0, %v1513
    %v1516 = vsel %vm1514, %v1515, %v1513
    %v1517 = vclz %v1516
    %v1518 = vsub.s32 %v1517, 2
    %vm1519 = vcmp.gt.s32.totalorder 0, %v1518
    %v1520 = vsel %vm1519, 0, %v1518
    %v1521 = vsub.s32 32, %v1520
    %v1522 = vshll.u32 %v1513, %v1520
    %v1523 = vshrl.u32 %v1505, %v1521
    %v1524 = vor.u32 %v1522, %v1523
    %v1525 = vsub.s32 4294967266, %v1520
    %v1526 = vadd.s32 %v1525, 127
    %v1527 = vshll.u32 %v1526, 23
    %v1528 = vor.u32 4788187, %v1527
    %v1529 = vand.u32 2147483647, %v1528
    %v1531 = vcvt.s32.f32 %v1524
    %v1532 = vmul.f32 %v1531, %v1529
    %v1533 = vxor.u32 %v1532, 2147483648
    %v1534 = vsel %vm1451, %v1533, %v1532
    %v1535 = vsub.s32 4, %v1511
    %v1536 = vsel %vm1451, %v1535, %v1511
    %v1537 = vsel %vm1450, %v197, %v1534
    %v1538 = vsel %vm1450, 0, %v1536
    %v1539 = vcosq.f32.pop %v1537
    %v1540 = vsinq.f32.pop %v1537
    %vm1541 = vweird.f32 %v197
    %v1542 = vadd.s32 %v1538, 3
    %v1543 = vand.u32 %v1542, 3
    %vm1544 = vcmp.lt.s32.totalorder %v1543, 2
    %vm1545 = vcmp.eq.s32.totalorder %v1543, 0
    %v1546 = vxor.u32 %v1540, 2147483648
    %v1547 = vsel %vm1545, %v1539, %v1546
    %vm1548 = vcmp.eq.s32.totalorder %v1543, 2
    %v1549 = vxor.u32 %v1539, 2147483648
    %v1550 = vsel %vm1548, %v1549, %v1540
    %v1551 = vsel %vm1544, %v1547, %v1550
    %v1552 = vsel %vm1541, nan, %v1551
    %v1553 = vand.u32 2147483647, %v198
    %vm1554 = vcmp.le.f32.partialorder %v1553, 0.7853982
    %vm1555 = vcmp.lt.s32.totalorder %v198, 0
    %v1556 = vand.u32 %v198, 2139095040
    %v1557 = vshrl.u32 %v1556, 23
    %v1558 = vsub.s32 %v1557, 127
    %v1559 = vand.u32 2147483647, %v198
    %v1560 = vand.u32 %v1559, 8388607
    %v1561 = vor.u32 %v1560, 8388608
    %v1562 = vsub.s32 0, %v1561
    %v1563 = vadd.s32 %v1558, 1
    %vm1564 = vcmp.gt.s32.totalorder %v1563, 0
    %v1565 = vsel %vm1564, %v1563, 0
    %v1566 = vshrl.u32 %v1565, 5
    %v1567 = vand.u32 %v1565, 31
    %v1568 = vsub.s32 32, %v1567
    %v1569 = vshrl.u32 683565275, %v1568
    %v1570 = vshll.u32 683565275, %v1567
    %v1571 = vshrl.u32 2475754826, %v1568
    %v1572 = vor.u32 %v1570, %v1571
    %v1573 = vshll.u32 2475754826, %v1567
    %v1574 = vshrl.u32 2131351028, %v1568
    %v1575 = vor.u32 %v1573, %v1574
    %v1576 = vshll.u32 2131351028, %v1567
    %v1577 = vshrl.u32 2102212464, %v1568
    %v1578 = vor.u32 %v1576, %v1577
    %v1579 = vshll.u32 2102212464, %v1567
    %v1580 = vshrl.u32 920167782, %v1568
    %v1581 = vor.u32 %v1579, %v1580
    %v1582 = vshll.u32 920167782, %v1567
    %v1583 = vshrl.u32 1326507024, %v1568
    %v1584 = vor.u32 %v1582, %v1583
    %vm1585 = vcmp.lt.s32.totalorder %v1566, 1
    %vm1586 = vcmp.lt.s32.totalorder %v1566, 2
    %vm1587 = vcmp.lt.s32.totalorder %v1566, 3
    %vm1588 = vcmp.lt.s32.totalorder %v1566, 4
    %v1589 = vsel %vm1585, %v1569, %v1572
    %v1590 = vsel %vm1588, %v1578, 2102212464
    %v1591 = vsel %vm1587, %v1575, %v1590
    %v1592 = vsel %vm1586, %v1589, %v1591
    %v1593 = vsel %vm1585, %v1572, %v1575
    %v1594 = vsel %vm1588, %v1581, 920167782
    %v1595 = vsel %vm1587, %v1578, %v1594
    %v1596 = vsel %vm1586, %v1593, %v1595
    %v1597 = vsel %vm1585, %v1575, %v1578
    %v1598 = vsel %vm1588, %v1584, 1326507024
    %v1599 = vsel %vm1587, %v1581, %v1598
    %v1600 = vsel %vm1586, %v1597, %v1599
    %v1601 = vshll.u32 %v1561, 8
    %v1602 = vmul.u32.u64.compose %v1601, %v1600
    %v1603 = vextract.low.u32 %v1602
    %v1604 = vextract.high.u32 %v1602
    %v1605 = vmul.u32.u64.compose %v1601, %v1596
    %v1606 = vextract.low.u32 %v1605
    %v1607 = vextract.high.u32 %v1605
    %v1608 = vmul.u32 %v1601, %v1592
    %v1609 = vadd.s32 %v1604, %v1606
    %vm1610 = vc.u32 %v1604, %v1606
    %v1611 = vadd.s32 %v1607, 1
    %v1612 = vsel %vm1610, %v1611, %v1607
    %v1613 = vadd.s32 %v1608, %v1612
    %v1614 = vadd.s32 %v1613, 536870912
    %v1615 = vshrl.u32 %v1614, 30
    %v1616 = vshll.u32 %v1615, 30
    %v1617 = vsub.s32 %v1613, %v1616
    %vm1618 = vcmp.lt.s32.totalorder %v1617, 0
    %v1619 = vsub.s32 0, %v1617
    %v1620 = vsel %vm1618, %v1619, %v1617
    %v1621 = vclz %v1620
    %v1622 = vsub.s32 %v1621, 2
    %vm1623 = vcmp.gt.s32.totalorder 0, %v1622
    %v1624 = vsel %vm1623, 0, %v1622
    %v1625 = vsub.s32 32, %v1624
    %v1626 = vshll.u32 %v1617, %v1624
    %v1627 = vshrl.u32 %v1609, %v1625
    %v1628 = vor.u32 %v1626, %v1627
    %v1629 = vsub.s32 4294967266, %v1624
    %v1630 = vadd.s32 %v1629, 127
    %v1631 = vshll.u32 %v1630, 23
    %v1632 = vor.u32 4788187, %v1631
    %v1633 = vand.u32 2147483647, %v1632
    %v1635 = vcvt.s32.f32 %v1628
    %v1636 = vmul.f32 %v1635, %v1633
    %v1637 = vxor.u32 %v1636, 2147483648
    %v1638 = vsel %vm1555, %v1637, %v1636
    %v1639 = vsub.s32 4, %v1615
    %v1640 = vsel %vm1555, %v1639, %v1615
    %v1641 = vsel %vm1554, %v198, %v1638
    %v1642 = vsel %vm1554, 0, %v1640
    %v1643 = vcosq.f32.pop %v1641
    %v1644 = vsinq.f32.pop %v1641
    %vm1645 = vweird.f32 %v198
    %v1646 = vadd.s32 %v1642, 3
    %v1647 = vand.u32 %v1646, 3
    %vm1648 = vcmp.lt.s32.totalorder %v1647, 2
    %vm1649 = vcmp.eq.s32.totalorder %v1647, 0
    %v1650 = vxor.u32 %v1644, 2147483648
    %v1651 = vsel %vm1649, %v1643, %v1650
    %vm1652 = vcmp.eq.s32.totalorder %v1647, 2
    %v1653 = vxor.u32 %v1643, 2147483648
    %v1654 = vsel %vm1652, %v1653, %v1644
    %v1655 = vsel %vm1648, %v1651, %v1654
    %v1656 = vsel %vm1645, nan, %v1655
    %v1657 = vand.u32 2147483647, %v199
    %vm1658 = vcmp.le.f32.partialorder %v1657, 0.7853982
    %vm1659 = vcmp.lt.s32.totalorder %v199, 0
    %v1660 = vand.u32 %v199, 2139095040
    %v1661 = vshrl.u32 %v1660, 23
    %v1662 = vsub.s32 %v1661, 127
    %v1663 = vand.u32 2147483647, %v199
    %v1664 = vand.u32 %v1663, 8388607
    %v1665 = vor.u32 %v1664, 8388608
    %v1666 = vsub.s32 0, %v1665
    %v1667 = vadd.s32 %v1662, 1
    %vm1668 = vcmp.gt.s32.totalorder %v1667, 0
    %v1669 = vsel %vm1668, %v1667, 0
    %v1670 = vshrl.u32 %v1669, 5
    %v1671 = vand.u32 %v1669, 31
    %v1672 = vsub.s32 32, %v1671
    %v1673 = vshrl.u32 683565275, %v1672
    %v1674 = vshll.u32 683565275, %v1671
    %v1675 = vshrl.u32 2475754826, %v1672
    %v1676 = vor.u32 %v1674, %v1675
    %v1677 = vshll.u32 2475754826, %v1671
    %v1678 = vshrl.u32 2131351028, %v1672
    %v1679 = vor.u32 %v1677, %v1678
    %v1680 = vshll.u32 2131351028, %v1671
    %v1681 = vshrl.u32 2102212464, %v1672
    %v1682 = vor.u32 %v1680, %v1681
    %v1683 = vshll.u32 2102212464, %v1671
    %v1684 = vshrl.u32 920167782, %v1672
    %v1685 = vor.u32 %v1683, %v1684
    %v1686 = vshll.u32 920167782, %v1671
    %v1687 = vshrl.u32 1326507024, %v1672
    %v1688 = vor.u32 %v1686, %v1687
    %vm1689 = vcmp.lt.s32.totalorder %v1670, 1
    %vm1690 = vcmp.lt.s32.totalorder %v1670, 2
    %vm1691 = vcmp.lt.s32.totalorder %v1670, 3
    %vm1692 = vcmp.lt.s32.totalorder %v1670, 4
    %v1693 = vsel %vm1689, %v1673, %v1676
    %v1694 = vsel %vm1692, %v1682, 2102212464
    %v1695 = vsel %vm1691, %v1679, %v1694
    %v1696 = vsel %vm1690, %v1693, %v1695
    %v1697 = vsel %vm1689, %v1676, %v1679
    %v1698 = vsel %vm1692, %v1685, 920167782
    %v1699 = vsel %vm1691, %v1682, %v1698
    %v1700 = vsel %vm1690, %v1697, %v1699
    %v1701 = vsel %vm1689, %v1679, %v1682
    %v1702 = vsel %vm1692, %v1688, 1326507024
    %v1703 = vsel %vm1691, %v1685, %v1702
    %v1704 = vsel %vm1690, %v1701, %v1703
    %v1705 = vshll.u32 %v1665, 8
    %v1706 = vmul.u32.u64.compose %v1705, %v1704
    %v1707 = vextract.low.u32 %v1706
    %v1708 = vextract.high.u32 %v1706
    %v1709 = vmul.u32.u64.compose %v1705, %v1700
    %v1710 = vextract.low.u32 %v1709
    %v1711 = vextract.high.u32 %v1709
    %v1712 = vmul.u32 %v1705, %v1696
    %v1713 = vadd.s32 %v1708, %v1710
    %vm1714 = vc.u32 %v1708, %v1710
    %v1715 = vadd.s32 %v1711, 1
    %v1716 = vsel %vm1714, %v1715, %v1711
    %v1717 = vadd.s32 %v1712, %v1716
    %v1718 = vadd.s32 %v1717, 536870912
    %v1719 = vshrl.u32 %v1718, 30
    %v1720 = vshll.u32 %v1719, 30
    %v1721 = vsub.s32 %v1717, %v1720
    %vm1722 = vcmp.lt.s32.totalorder %v1721, 0
    %v1723 = vsub.s32 0, %v1721
    %v1724 = vsel %vm1722, %v1723, %v1721
    %v1725 = vclz %v1724
    %v1726 = vsub.s32 %v1725, 2
    %vm1727 = vcmp.gt.s32.totalorder 0, %v1726
    %v1728 = vsel %vm1727, 0, %v1726
    %v1729 = vsub.s32 32, %v1728
    %v1730 = vshll.u32 %v1721, %v1728
    %v1731 = vshrl.u32 %v1713, %v1729
    %v1732 = vor.u32 %v1730, %v1731
    %v1733 = vsub.s32 4294967266, %v1728
    %v1734 = vadd.s32 %v1733, 127
    %v1735 = vshll.u32 %v1734, 23
    %v1736 = vor.u32 4788187, %v1735
    %v1737 = vand.u32 2147483647, %v1736
    %v1739 = vcvt.s32.f32 %v1732
    %v1740 = vmul.f32 %v1739, %v1737
    %v1741 = vxor.u32 %v1740, 2147483648
    %v1742 = vsel %vm1659, %v1741, %v1740
    %v1743 = vsub.s32 4, %v1719
    %v1744 = vsel %vm1659, %v1743, %v1719
    %v1745 = vsel %vm1658, %v199, %v1742
    %v1746 = vsel %vm1658, 0, %v1744
    %v1747 = vcosq.f32.pop %v1745
    %v1748 = vsinq.f32.pop %v1745
    %vm1749 = vweird.f32 %v199
    %v1750 = vadd.s32 %v1746, 3
    %v1751 = vand.u32 %v1750, 3
    %vm1752 = vcmp.lt.s32.totalorder %v1751, 2
    %vm1753 = vcmp.eq.s32.totalorder %v1751, 0
    %v1754 = vxor.u32 %v1748, 2147483648
    %v1755 = vsel %vm1753, %v1747, %v1754
    %vm1756 = vcmp.eq.s32.totalorder %v1751, 2
    %v1757 = vxor.u32 %v1747, 2147483648
    %v1758 = vsel %vm1756, %v1757, %v1748
    %v1759 = vsel %vm1752, %v1755, %v1758
    %v1760 = vsel %vm1749, nan, %v1759
    %v1761 = vand.u32 2147483647, %v200
    %vm1762 = vcmp.le.f32.partialorder %v1761, 0.7853982
    %vm1763 = vcmp.lt.s32.totalorder %v200, 0
    %v1764 = vand.u32 %v200, 2139095040
    %v1765 = vshrl.u32 %v1764, 23
    %v1766 = vsub.s32 %v1765, 127
    %v1767 = vand.u32 2147483647, %v200
    %v1768 = vand.u32 %v1767, 8388607
    %v1769 = vor.u32 %v1768, 8388608
    %v1770 = vsub.s32 0, %v1769
    %v1771 = vadd.s32 %v1766, 1
    %vm1772 = vcmp.gt.s32.totalorder %v1771, 0
    %v1773 = vsel %vm1772, %v1771, 0
    %v1774 = vshrl.u32 %v1773, 5
    %v1775 = vand.u32 %v1773, 31
    %v1776 = vsub.s32 32, %v1775
    %v1777 = vshrl.u32 683565275, %v1776
    %v1778 = vshll.u32 683565275, %v1775
    %v1779 = vshrl.u32 2475754826, %v1776
    %v1780 = vor.u32 %v1778, %v1779
    %v1781 = vshll.u32 2475754826, %v1775
    %v1782 = vshrl.u32 2131351028, %v1776
    %v1783 = vor.u32 %v1781, %v1782
    %v1784 = vshll.u32 2131351028, %v1775
    %v1785 = vshrl.u32 2102212464, %v1776
    %v1786 = vor.u32 %v1784, %v1785
    %v1787 = vshll.u32 2102212464, %v1775
    %v1788 = vshrl.u32 920167782, %v1776
    %v1789 = vor.u32 %v1787, %v1788
    %v1790 = vshll.u32 920167782, %v1775
    %v1791 = vshrl.u32 1326507024, %v1776
    %v1792 = vor.u32 %v1790, %v1791
    %vm1793 = vcmp.lt.s32.totalorder %v1774, 1
    %vm1794 = vcmp.lt.s32.totalorder %v1774, 2
    %vm1795 = vcmp.lt.s32.totalorder %v1774, 3
    %vm1796 = vcmp.lt.s32.totalorder %v1774, 4
    %v1797 = vsel %vm1793, %v1777, %v1780
    %v1798 = vsel %vm1796, %v1786, 2102212464
    %v1799 = vsel %vm1795, %v1783, %v1798
    %v1800 = vsel %vm1794, %v1797, %v1799
    %v1801 = vsel %vm1793, %v1780, %v1783
    %v1802 = vsel %vm1796, %v1789, 920167782
    %v1803 = vsel %vm1795, %v1786, %v1802
    %v1804 = vsel %vm1794, %v1801, %v1803
    %v1805 = vsel %vm1793, %v1783, %v1786
    %v1806 = vsel %vm1796, %v1792, 1326507024
    %v1807 = vsel %vm1795, %v1789, %v1806
    %v1808 = vsel %vm1794, %v1805, %v1807
    %v1809 = vshll.u32 %v1769, 8
    %v1810 = vmul.u32.u64.compose %v1809, %v1808
    %v1811 = vextract.low.u32 %v1810
    %v1812 = vextract.high.u32 %v1810
    %v1813 = vmul.u32.u64.compose %v1809, %v1804
    %v1814 = vextract.low.u32 %v1813
    %v1815 = vextract.high.u32 %v1813
    %v1816 = vmul.u32 %v1809, %v1800
    %v1817 = vadd.s32 %v1812, %v1814
    %vm1818 = vc.u32 %v1812, %v1814
    %v1819 = vadd.s32 %v1815, 1
    %v1820 = vsel %vm1818, %v1819, %v1815
    %v1821 = vadd.s32 %v1816, %v1820
    %v1822 = vadd.s32 %v1821, 536870912
    %v1823 = vshrl.u32 %v1822, 30
    %v1824 = vshll.u32 %v1823, 30
    %v1825 = vsub.s32 %v1821, %v1824
    %vm1826 = vcmp.lt.s32.totalorder %v1825, 0
    %v1827 = vsub.s32 0, %v1825
    %v1828 = vsel %vm1826, %v1827, %v1825
    %v1829 = vclz %v1828
    %v1830 = vsub.s32 %v1829, 2
    %vm1831 = vcmp.gt.s32.totalorder 0, %v1830
    %v1832 = vsel %vm1831, 0, %v1830
    %v1833 = vsub.s32 32, %v1832
    %v1834 = vshll.u32 %v1825, %v1832
    %v1835 = vshrl.u32 %v1817, %v1833
    %v1836 = vor.u32 %v1834, %v1835
    %v1837 = vsub.s32 4294967266, %v1832
    %v1838 = vadd.s32 %v1837, 127
    %v1839 = vshll.u32 %v1838, 23
    %v1840 = vor.u32 4788187, %v1839
    %v1841 = vand.u32 2147483647, %v1840
    %v1843 = vcvt.s32.f32 %v1836
    %v1844 = vmul.f32 %v1843, %v1841
    %v1845 = vxor.u32 %v1844, 2147483648
    %v1846 = vsel %vm1763, %v1845, %v1844
    %v1847 = vsub.s32 4, %v1823
    %v1848 = vsel %vm1763, %v1847, %v1823
    %v1849 = vsel %vm1762, %v200, %v1846
    %v1850 = vsel %vm1762, 0, %v1848
    %v1851 = vcosq.f32.pop %v1849
    %v1852 = vsinq.f32.pop %v1849
    %vm1853 = vweird.f32 %v200
    %v1854 = vadd.s32 %v1850, 3
    %v1855 = vand.u32 %v1854, 3
    %vm1856 = vcmp.lt.s32.totalorder %v1855, 2
    %vm1857 = vcmp.eq.s32.totalorder %v1855, 0
    %v1858 = vxor.u32 %v1852, 2147483648
    %v1859 = vsel %vm1857, %v1851, %v1858
    %vm1860 = vcmp.eq.s32.totalorder %v1855, 2
    %v1861 = vxor.u32 %v1851, 2147483648
    %v1862 = vsel %vm1860, %v1861, %v1852
    %v1863 = vsel %vm1856, %v1859, %v1862
    %v1864 = vsel %vm1853, nan, %v1863
    %v1865 = vand.u32 2147483647, %v185
    %vm1866 = vcmp.le.f32.partialorder %v1865, 0.7853982
    %vm1867 = vcmp.lt.s32.totalorder %v185, 0
    %v1868 = vand.u32 %v185, 2139095040
    %v1869 = vshrl.u32 %v1868, 23
    %v1870 = vsub.s32 %v1869, 127
    %v1871 = vand.u32 2147483647, %v185
    %v1872 = vand.u32 %v1871, 8388607
    %v1873 = vor.u32 %v1872, 8388608
    %v1874 = vsub.s32 0, %v1873
    %v1875 = vadd.s32 %v1870, 1
    %vm1876 = vcmp.gt.s32.totalorder %v1875, 0
    %v1877 = vsel %vm1876, %v1875, 0
    %v1878 = vshrl.u32 %v1877, 5
    %v1879 = vand.u32 %v1877, 31
    %v1880 = vsub.s32 32, %v1879
    %v1881 = vshrl.u32 683565275, %v1880
    %v1882 = vshll.u32 683565275, %v1879
    %v1883 = vshrl.u32 2475754826, %v1880
    %v1884 = vor.u32 %v1882, %v1883
    %v1885 = vshll.u32 2475754826, %v1879
    %v1886 = vshrl.u32 2131351028, %v1880
    %v1887 = vor.u32 %v1885, %v1886
    %v1888 = vshll.u32 2131351028, %v1879
    %v1889 = vshrl.u32 2102212464, %v1880
    %v1890 = vor.u32 %v1888, %v1889
    %v1891 = vshll.u32 2102212464, %v1879
    %v1892 = vshrl.u32 920167782, %v1880
    %v1893 = vor.u32 %v1891, %v1892
    %v1894 = vshll.u32 920167782, %v1879
    %v1895 = vshrl.u32 1326507024, %v1880
    %v1896 = vor.u32 %v1894, %v1895
    %vm1897 = vcmp.lt.s32.totalorder %v1878, 1
    %vm1898 = vcmp.lt.s32.totalorder %v1878, 2
    %vm1899 = vcmp.lt.s32.totalorder %v1878, 3
    %vm1900 = vcmp.lt.s32.totalorder %v1878, 4
    %v1901 = vsel %vm1897, %v1881, %v1884
    %v1902 = vsel %vm1900, %v1890, 2102212464
    %v1903 = vsel %vm1899, %v1887, %v1902
    %v1904 = vsel %vm1898, %v1901, %v1903
    %v1905 = vsel %vm1897, %v1884, %v1887
    %v1906 = vsel %vm1900, %v1893, 920167782
    %v1907 = vsel %vm1899, %v1890, %v1906
    %v1908 = vsel %vm1898, %v1905, %v1907
    %v1909 = vsel %vm1897, %v1887, %v1890
    %v1910 = vsel %vm1900, %v1896, 1326507024
    %v1911 = vsel %vm1899, %v1893, %v1910
    %v1912 = vsel %vm1898, %v1909, %v1911
    %v1913 = vshll.u32 %v1873, 8
    %v1914 = vmul.u32.u64.compose %v1913, %v1912
    %v1915 = vextract.low.u32 %v1914
    %v1916 = vextract.high.u32 %v1914
    %v1917 = vmul.u32.u64.compose %v1913, %v1908
    %v1918 = vextract.low.u32 %v1917
    %v1919 = vextract.high.u32 %v1917
    %v1920 = vmul.u32 %v1913, %v1904
    %v1921 = vadd.s32 %v1916, %v1918
    %vm1922 = vc.u32 %v1916, %v1918
    %v1923 = vadd.s32 %v1919, 1
    %v1924 = vsel %vm1922, %v1923, %v1919
    %v1925 = vadd.s32 %v1920, %v1924
    %v1926 = vadd.s32 %v1925, 536870912
    %v1927 = vshrl.u32 %v1926, 30
    %v1928 = vshll.u32 %v1927, 30
    %v1929 = vsub.s32 %v1925, %v1928
    %vm1930 = vcmp.lt.s32.totalorder %v1929, 0
    %v1931 = vsub.s32 0, %v1929
    %v1932 = vsel %vm1930, %v1931, %v1929
    %v1933 = vclz %v1932
    %v1934 = vsub.s32 %v1933, 2
    %vm1935 = vcmp.gt.s32.totalorder 0, %v1934
    %v1936 = vsel %vm1935, 0, %v1934
    %v1937 = vsub.s32 32, %v1936
    %v1938 = vshll.u32 %v1929, %v1936
    %v1939 = vshrl.u32 %v1921, %v1937
    %v1940 = vor.u32 %v1938, %v1939
    %v1941 = vsub.s32 4294967266, %v1936
    %v1942 = vadd.s32 %v1941, 127
    %v1943 = vshll.u32 %v1942, 23
    %v1944 = vor.u32 4788187, %v1943
    %v1945 = vand.u32 2147483647, %v1944
    %v1947 = vcvt.s32.f32 %v1940
    %v1948 = vmul.f32 %v1947, %v1945
    %v1949 = vxor.u32 %v1948, 2147483648
    %v1950 = vsel %vm1867, %v1949, %v1948
    %v1951 = vsub.s32 4, %v1927
    %v1952 = vsel %vm1867, %v1951, %v1927
    %v1953 = vsel %vm1866, %v185, %v1950
    %v1954 = vsel %vm1866, 0, %v1952
    %v1955 = vcosq.f32.pop %v1953
    %v1956 = vsinq.f32.pop %v1953
    %vm1957 = vweird.f32 %v185
    %v1958 = vand.u32 %v1954, 3
    %vm1959 = vcmp.lt.s32.totalorder %v1958, 2
    %vm1960 = vcmp.eq.s32.totalorder %v1958, 0
    %v1961 = vxor.u32 %v1956, 2147483648
    %v1962 = vsel %vm1960, %v1955, %v1961
    %vm1963 = vcmp.eq.s32.totalorder %v1958, 2
    %v1964 = vxor.u32 %v1955, 2147483648
    %v1965 = vsel %vm1963, %v1964, %v1956
    %v1966 = vsel %vm1959, %v1962, %v1965
    %v1967 = vsel %vm1957, nan, %v1966
    %v1968 = vand.u32 2147483647, %v186
    %vm1969 = vcmp.le.f32.partialorder %v1968, 0.7853982
    %vm1970 = vcmp.lt.s32.totalorder %v186, 0
    %v1971 = vand.u32 %v186, 2139095040
    %v1972 = vshrl.u32 %v1971, 23
    %v1973 = vsub.s32 %v1972, 127
    %v1974 = vand.u32 2147483647, %v186
    %v1975 = vand.u32 %v1974, 8388607
    %v1976 = vor.u32 %v1975, 8388608
    %v1977 = vsub.s32 0, %v1976
    %v1978 = vadd.s32 %v1973, 1
    %vm1979 = vcmp.gt.s32.totalorder %v1978, 0
    %v1980 = vsel %vm1979, %v1978, 0
    %v1981 = vshrl.u32 %v1980, 5
    %v1982 = vand.u32 %v1980, 31
    %v1983 = vsub.s32 32, %v1982
    %v1984 = vshrl.u32 683565275, %v1983
    %v1985 = vshll.u32 683565275, %v1982
    %v1986 = vshrl.u32 2475754826, %v1983
    %v1987 = vor.u32 %v1985, %v1986
    %v1988 = vshll.u32 2475754826, %v1982
    %v1989 = vshrl.u32 2131351028, %v1983
    %v1990 = vor.u32 %v1988, %v1989
    %v1991 = vshll.u32 2131351028, %v1982
    %v1992 = vshrl.u32 2102212464, %v1983
    %v1993 = vor.u32 %v1991, %v1992
    %v1994 = vshll.u32 2102212464, %v1982
    %v1995 = vshrl.u32 920167782, %v1983
    %v1996 = vor.u32 %v1994, %v1995
    %v1997 = vshll.u32 920167782, %v1982
    %v1998 = vshrl.u32 1326507024, %v1983
    %v1999 = vor.u32 %v1997, %v1998
    %vm2000 = vcmp.lt.s32.totalorder %v1981, 1
    %vm2001 = vcmp.lt.s32.totalorder %v1981, 2
    %vm2002 = vcmp.lt.s32.totalorder %v1981, 3
    %vm2003 = vcmp.lt.s32.totalorder %v1981, 4
    %v2004 = vsel %vm2000, %v1984, %v1987
    %v2005 = vsel %vm2003, %v1993, 2102212464
    %v2006 = vsel %vm2002, %v1990, %v2005
    %v2007 = vsel %vm2001, %v2004, %v2006
    %v2008 = vsel %vm2000, %v1987, %v1990
    %v2009 = vsel %vm2003, %v1996, 920167782
    %v2010 = vsel %vm2002, %v1993, %v2009
    %v2011 = vsel %vm2001, %v2008, %v2010
    %v2012 = vsel %vm2000, %v1990, %v1993
    %v2013 = vsel %vm2003, %v1999, 1326507024
    %v2014 = vsel %vm2002, %v1996, %v2013
    %v2015 = vsel %vm2001, %v2012, %v2014
    %v2016 = vshll.u32 %v1976, 8
    %v2017 = vmul.u32.u64.compose %v2016, %v2015
    %v2018 = vextract.low.u32 %v2017
    %v2019 = vextract.high.u32 %v2017
    %v2020 = vmul.u32.u64.compose %v2016, %v2011
    %v2021 = vextract.low.u32 %v2020
    %v2022 = vextract.high.u32 %v2020
    %v2023 = vmul.u32 %v2016, %v2007
    %v2024 = vadd.s32 %v2019, %v2021
    %vm2025 = vc.u32 %v2019, %v2021
    %v2026 = vadd.s32 %v2022, 1
    %v2027 = vsel %vm2025, %v2026, %v2022
    %v2028 = vadd.s32 %v2023, %v2027
    %v2029 = vadd.s32 %v2028, 536870912
    %v2030 = vshrl.u32 %v2029, 30
    %v2031 = vshll.u32 %v2030, 30
    %v2032 = vsub.s32 %v2028, %v2031
    %vm2033 = vcmp.lt.s32.totalorder %v2032, 0
    %v2034 = vsub.s32 0, %v2032
    %v2035 = vsel %vm2033, %v2034, %v2032
    %v2036 = vclz %v2035
    %v2037 = vsub.s32 %v2036, 2
    %vm2038 = vcmp.gt.s32.totalorder 0, %v2037
    %v2039 = vsel %vm2038, 0, %v2037
    %v2040 = vsub.s32 32, %v2039
    %v2041 = vshll.u32 %v2032, %v2039
    %v2042 = vshrl.u32 %v2024, %v2040
    %v2043 = vor.u32 %v2041, %v2042
    %v2044 = vsub.s32 4294967266, %v2039
    %v2045 = vadd.s32 %v2044, 127
    %v2046 = vshll.u32 %v2045, 23
    %v2047 = vor.u32 4788187, %v2046
    %v2048 = vand.u32 2147483647, %v2047
    %v2050 = vcvt.s32.f32 %v2043
    %v2051 = vmul.f32 %v2050, %v2048
    %v2052 = vxor.u32 %v2051, 2147483648
    %v2053 = vsel %vm1970, %v2052, %v2051
    %v2054 = vsub.s32 4, %v2030
    %v2055 = vsel %vm1970, %v2054, %v2030
    %v2056 = vsel %vm1969, %v186, %v2053
    %v2057 = vsel %vm1969, 0, %v2055
    %v2058 = vcosq.f32.pop %v2056
    %v2059 = vsinq.f32.pop %v2056
    %vm2060 = vweird.f32 %v186
    %v2061 = vand.u32 %v2057, 3
    %vm2062 = vcmp.lt.s32.totalorder %v2061, 2
    %vm2063 = vcmp.eq.s32.totalorder %v2061, 0
    %v2064 = vxor.u32 %v2059, 2147483648
    %v2065 = vsel %vm2063, %v2058, %v2064
    %vm2066 = vcmp.eq.s32.totalorder %v2061, 2
    %v2067 = vxor.u32 %v2058, 2147483648
    %v2068 = vsel %vm2066, %v2067, %v2059
    %v2069 = vsel %vm2062, %v2065, %v2068
    %v2070 = vsel %vm2060, nan, %v2069
    %v2071 = vand.u32 2147483647, %v187
    %vm2072 = vcmp.le.f32.partialorder %v2071, 0.7853982
    %vm2073 = vcmp.lt.s32.totalorder %v187, 0
    %v2074 = vand.u32 %v187, 2139095040
    %v2075 = vshrl.u32 %v2074, 23
    %v2076 = vsub.s32 %v2075, 127
    %v2077 = vand.u32 2147483647, %v187
    %v2078 = vand.u32 %v2077, 8388607
    %v2079 = vor.u32 %v2078, 8388608
    %v2080 = vsub.s32 0, %v2079
    %v2081 = vadd.s32 %v2076, 1
    %vm2082 = vcmp.gt.s32.totalorder %v2081, 0
    %v2083 = vsel %vm2082, %v2081, 0
    %v2084 = vshrl.u32 %v2083, 5
    %v2085 = vand.u32 %v2083, 31
    %v2086 = vsub.s32 32, %v2085
    %v2087 = vshrl.u32 683565275, %v2086
    %v2088 = vshll.u32 683565275, %v2085
    %v2089 = vshrl.u32 2475754826, %v2086
    %v2090 = vor.u32 %v2088, %v2089
    %v2091 = vshll.u32 2475754826, %v2085
    %v2092 = vshrl.u32 2131351028, %v2086
    %v2093 = vor.u32 %v2091, %v2092
    %v2094 = vshll.u32 2131351028, %v2085
    %v2095 = vshrl.u32 2102212464, %v2086
    %v2096 = vor.u32 %v2094, %v2095
    %v2097 = vshll.u32 2102212464, %v2085
    %v2098 = vshrl.u32 920167782, %v2086
    %v2099 = vor.u32 %v2097, %v2098
    %v2100 = vshll.u32 920167782, %v2085
    %v2101 = vshrl.u32 1326507024, %v2086
    %v2102 = vor.u32 %v2100, %v2101
    %vm2103 = vcmp.lt.s32.totalorder %v2084, 1
    %vm2104 = vcmp.lt.s32.totalorder %v2084, 2
    %vm2105 = vcmp.lt.s32.totalorder %v2084, 3
    %vm2106 = vcmp.lt.s32.totalorder %v2084, 4
    %v2107 = vsel %vm2103, %v2087, %v2090
    %v2108 = vsel %vm2106, %v2096, 2102212464
    %v2109 = vsel %vm2105, %v2093, %v2108
    %v2110 = vsel %vm2104, %v2107, %v2109
    %v2111 = vsel %vm2103, %v2090, %v2093
    %v2112 = vsel %vm2106, %v2099, 920167782
    %v2113 = vsel %vm2105, %v2096, %v2112
    %v2114 = vsel %vm2104, %v2111, %v2113
    %v2115 = vsel %vm2103, %v2093, %v2096
    %v2116 = vsel %vm2106, %v2102, 1326507024
    %v2117 = vsel %vm2105, %v2099, %v2116
    %v2118 = vsel %vm2104, %v2115, %v2117
    %v2119 = vshll.u32 %v2079, 8
    %v2120 = vmul.u32.u64.compose %v2119, %v2118
    %v2121 = vextract.low.u32 %v2120
    %v2122 = vextract.high.u32 %v2120
    %v2123 = vmul.u32.u64.compose %v2119, %v2114
    %v2124 = vextract.low.u32 %v2123
    %v2125 = vextract.high.u32 %v2123
    %v2126 = vmul.u32 %v2119, %v2110
    %v2127 = vadd.s32 %v2122, %v2124
    %vm2128 = vc.u32 %v2122, %v2124
    %v2129 = vadd.s32 %v2125, 1
    %v2130 = vsel %vm2128, %v2129, %v2125
    %v2131 = vadd.s32 %v2126, %v2130
    %v2132 = vadd.s32 %v2131, 536870912
    %v2133 = vshrl.u32 %v2132, 30
    %v2134 = vshll.u32 %v2133, 30
    %v2135 = vsub.s32 %v2131, %v2134
    %vm2136 = vcmp.lt.s32.totalorder %v2135, 0
    %v2137 = vsub.s32 0, %v2135
    %v2138 = vsel %vm2136, %v2137, %v2135
    %v2139 = vclz %v2138
    %v2140 = vsub.s32 %v2139, 2
    %vm2141 = vcmp.gt.s32.totalorder 0, %v2140
    %v2142 = vsel %vm2141, 0, %v2140
    %v2143 = vsub.s32 32, %v2142
    %v2144 = vshll.u32 %v2135, %v2142
    %v2145 = vshrl.u32 %v2127, %v2143
    %v2146 = vor.u32 %v2144, %v2145
    %v2147 = vsub.s32 4294967266, %v2142
    %v2148 = vadd.s32 %v2147, 127
    %v2149 = vshll.u32 %v2148, 23
    %v2150 = vor.u32 4788187, %v2149
    %v2151 = vand.u32 2147483647, %v2150
    %v2153 = vcvt.s32.f32 %v2146
    %v2154 = vmul.f32 %v2153, %v2151
    %v2155 = vxor.u32 %v2154, 2147483648
    %v2156 = vsel %vm2073, %v2155, %v2154
    %v2157 = vsub.s32 4, %v2133
    %v2158 = vsel %vm2073, %v2157, %v2133
    %v2159 = vsel %vm2072, %v187, %v2156
    %v2160 = vsel %vm2072, 0, %v2158
    %v2161 = vcosq.f32.pop %v2159
    %v2162 = vsinq.f32.pop %v2159
    %vm2163 = vweird.f32 %v187
    %v2164 = vand.u32 %v2160, 3
    %vm2165 = vcmp.lt.s32.totalorder %v2164, 2
    %vm2166 = vcmp.eq.s32.totalorder %v2164, 0
    %v2167 = vxor.u32 %v2162, 2147483648
    %v2168 = vsel %vm2166, %v2161, %v2167
    %vm2169 = vcmp.eq.s32.totalorder %v2164, 2
    %v2170 = vxor.u32 %v2161, 2147483648
    %v2171 = vsel %vm2169, %v2170, %v2162
    %v2172 = vsel %vm2165, %v2168, %v2171
    %v2173 = vsel %vm2163, nan, %v2172
    %v2174 = vand.u32 2147483647, %v188
    %vm2175 = vcmp.le.f32.partialorder %v2174, 0.7853982
    %vm2176 = vcmp.lt.s32.totalorder %v188, 0
    %v2177 = vand.u32 %v188, 2139095040
    %v2178 = vshrl.u32 %v2177, 23
    %v2179 = vsub.s32 %v2178, 127
    %v2180 = vand.u32 2147483647, %v188
    %v2181 = vand.u32 %v2180, 8388607
    %v2182 = vor.u32 %v2181, 8388608
    %v2183 = vsub.s32 0, %v2182
    %v2184 = vadd.s32 %v2179, 1
    %vm2185 = vcmp.gt.s32.totalorder %v2184, 0
    %v2186 = vsel %vm2185, %v2184, 0
    %v2187 = vshrl.u32 %v2186, 5
    %v2188 = vand.u32 %v2186, 31
    %v2189 = vsub.s32 32, %v2188
    %v2190 = vshrl.u32 683565275, %v2189
    %v2191 = vshll.u32 683565275, %v2188
    %v2192 = vshrl.u32 2475754826, %v2189
    %v2193 = vor.u32 %v2191, %v2192
    %v2194 = vshll.u32 2475754826, %v2188
    %v2195 = vshrl.u32 2131351028, %v2189
    %v2196 = vor.u32 %v2194, %v2195
    %v2197 = vshll.u32 2131351028, %v2188
    %v2198 = vshrl.u32 2102212464, %v2189
    %v2199 = vor.u32 %v2197, %v2198
    %v2200 = vshll.u32 2102212464, %v2188
    %v2201 = vshrl.u32 920167782, %v2189
    %v2202 = vor.u32 %v2200, %v2201
    %v2203 = vshll.u32 920167782, %v2188
    %v2204 = vshrl.u32 1326507024, %v2189
    %v2205 = vor.u32 %v2203, %v2204
    %vm2206 = vcmp.lt.s32.totalorder %v2187, 1
    %vm2207 = vcmp.lt.s32.totalorder %v2187, 2
    %vm2208 = vcmp.lt.s32.totalorder %v2187, 3
    %vm2209 = vcmp.lt.s32.totalorder %v2187, 4
    %v2210 = vsel %vm2206, %v2190, %v2193
    %v2211 = vsel %vm2209, %v2199, 2102212464
    %v2212 = vsel %vm2208, %v2196, %v2211
    %v2213 = vsel %vm2207, %v2210, %v2212
    %v2214 = vsel %vm2206, %v2193, %v2196
    %v2215 = vsel %vm2209, %v2202, 920167782
    %v2216 = vsel %vm2208, %v2199, %v2215
    %v2217 = vsel %vm2207, %v2214, %v2216
    %v2218 = vsel %vm2206, %v2196, %v2199
    %v2219 = vsel %vm2209, %v2205, 1326507024
    %v2220 = vsel %vm2208, %v2202, %v2219
    %v2221 = vsel %vm2207, %v2218, %v2220
    %v2222 = vshll.u32 %v2182, 8
    %v2223 = vmul.u32.u64.compose %v2222, %v2221
    %v2224 = vextract.low.u32 %v2223
    %v2225 = vextract.high.u32 %v2223
    %v2226 = vmul.u32.u64.compose %v2222, %v2217
    %v2227 = vextract.low.u32 %v2226
    %v2228 = vextract.high.u32 %v2226
    %v2229 = vmul.u32 %v2222, %v2213
    %v2230 = vadd.s32 %v2225, %v2227
    %vm2231 = vc.u32 %v2225, %v2227
    %v2232 = vadd.s32 %v2228, 1
    %v2233 = vsel %vm2231, %v2232, %v2228
    %v2234 = vadd.s32 %v2229, %v2233
    %v2235 = vadd.s32 %v2234, 536870912
    %v2236 = vshrl.u32 %v2235, 30
    %v2237 = vshll.u32 %v2236, 30
    %v2238 = vsub.s32 %v2234, %v2237
    %vm2239 = vcmp.lt.s32.totalorder %v2238, 0
    %v2240 = vsub.s32 0, %v2238
    %v2241 = vsel %vm2239, %v2240, %v2238
    %v2242 = vclz %v2241
    %v2243 = vsub.s32 %v2242, 2
    %vm2244 = vcmp.gt.s32.totalorder 0, %v2243
    %v2245 = vsel %vm2244, 0, %v2243
    %v2246 = vsub.s32 32, %v2245
    %v2247 = vshll.u32 %v2238, %v2245
    %v2248 = vshrl.u32 %v2230, %v2246
    %v2249 = vor.u32 %v2247, %v2248
    %v2250 = vsub.s32 4294967266, %v2245
    %v2251 = vadd.s32 %v2250, 127
    %v2252 = vshll.u32 %v2251, 23
    %v2253 = vor.u32 4788187, %v2252
    %v2254 = vand.u32 2147483647, %v2253
    %v2256 = vcvt.s32.f32 %v2249
    %v2257 = vmul.f32 %v2256, %v2254
    %v2258 = vxor.u32 %v2257, 2147483648
    %v2259 = vsel %vm2176, %v2258, %v2257
    %v2260 = vsub.s32 4, %v2236
    %v2261 = vsel %vm2176, %v2260, %v2236
    %v2262 = vsel %vm2175, %v188, %v2259
    %v2263 = vsel %vm2175, 0, %v2261
    %v2264 = vcosq.f32.pop %v2262
    %v2265 = vsinq.f32.pop %v2262
    %vm2266 = vweird.f32 %v188
    %v2267 = vand.u32 %v2263, 3
    %vm2268 = vcmp.lt.s32.totalorder %v2267, 2
    %vm2269 = vcmp.eq.s32.totalorder %v2267, 0
    %v2270 = vxor.u32 %v2265, 2147483648
    %v2271 = vsel %vm2269, %v2264, %v2270
    %vm2272 = vcmp.eq.s32.totalorder %v2267, 2
    %v2273 = vxor.u32 %v2264, 2147483648
    %v2274 = vsel %vm2272, %v2273, %v2265
    %v2275 = vsel %vm2268, %v2271, %v2274
    %v2276 = vsel %vm2266, nan, %v2275
    %v2277 = vand.u32 2147483647, %v189
    %vm2278 = vcmp.le.f32.partialorder %v2277, 0.7853982
    %vm2279 = vcmp.lt.s32.totalorder %v189, 0
    %v2280 = vand.u32 %v189, 2139095040
    %v2281 = vshrl.u32 %v2280, 23
    %v2282 = vsub.s32 %v2281, 127
    %v2283 = vand.u32 2147483647, %v189
    %v2284 = vand.u32 %v2283, 8388607
    %v2285 = vor.u32 %v2284, 8388608
    %v2286 = vsub.s32 0, %v2285
    %v2287 = vadd.s32 %v2282, 1
    %vm2288 = vcmp.gt.s32.totalorder %v2287, 0
    %v2289 = vsel %vm2288, %v2287, 0
    %v2290 = vshrl.u32 %v2289, 5
    %v2291 = vand.u32 %v2289, 31
    %v2292 = vsub.s32 32, %v2291
    %v2293 = vshrl.u32 683565275, %v2292
    %v2294 = vshll.u32 683565275, %v2291
    %v2295 = vshrl.u32 2475754826, %v2292
    %v2296 = vor.u32 %v2294, %v2295
    %v2297 = vshll.u32 2475754826, %v2291
    %v2298 = vshrl.u32 2131351028, %v2292
    %v2299 = vor.u32 %v2297, %v2298
    %v2300 = vshll.u32 2131351028, %v2291
    %v2301 = vshrl.u32 2102212464, %v2292
    %v2302 = vor.u32 %v2300, %v2301
    %v2303 = vshll.u32 2102212464, %v2291
    %v2304 = vshrl.u32 920167782, %v2292
    %v2305 = vor.u32 %v2303, %v2304
    %v2306 = vshll.u32 920167782, %v2291
    %v2307 = vshrl.u32 1326507024, %v2292
    %v2308 = vor.u32 %v2306, %v2307
    %vm2309 = vcmp.lt.s32.totalorder %v2290, 1
    %vm2310 = vcmp.lt.s32.totalorder %v2290, 2
    %vm2311 = vcmp.lt.s32.totalorder %v2290, 3
    %vm2312 = vcmp.lt.s32.totalorder %v2290, 4
    %v2313 = vsel %vm2309, %v2293, %v2296
    %v2314 = vsel %vm2312, %v2302, 2102212464
    %v2315 = vsel %vm2311, %v2299, %v2314
    %v2316 = vsel %vm2310, %v2313, %v2315
    %v2317 = vsel %vm2309, %v2296, %v2299
    %v2318 = vsel %vm2312, %v2305, 920167782
    %v2319 = vsel %vm2311, %v2302, %v2318
    %v2320 = vsel %vm2310, %v2317, %v2319
    %v2321 = vsel %vm2309, %v2299, %v2302
    %v2322 = vsel %vm2312, %v2308, 1326507024
    %v2323 = vsel %vm2311, %v2305, %v2322
    %v2324 = vsel %vm2310, %v2321, %v2323
    %v2325 = vshll.u32 %v2285, 8
    %v2326 = vmul.u32.u64.compose %v2325, %v2324
    %v2327 = vextract.low.u32 %v2326
    %v2328 = vextract.high.u32 %v2326
    %v2329 = vmul.u32.u64.compose %v2325, %v2320
    %v2330 = vextract.low.u32 %v2329
    %v2331 = vextract.high.u32 %v2329
    %v2332 = vmul.u32 %v2325, %v2316
    %v2333 = vadd.s32 %v2328, %v2330
    %vm2334 = vc.u32 %v2328, %v2330
    %v2335 = vadd.s32 %v2331, 1
    %v2336 = vsel %vm2334, %v2335, %v2331
    %v2337 = vadd.s32 %v2332, %v2336
    %v2338 = vadd.s32 %v2337, 536870912
    %v2339 = vshrl.u32 %v2338, 30
    %v2340 = vshll.u32 %v2339, 30
    %v2341 = vsub.s32 %v2337, %v2340
    %vm2342 = vcmp.lt.s32.totalorder %v2341, 0
    %v2343 = vsub.s32 0, %v2341
    %v2344 = vsel %vm2342, %v2343, %v2341
    %v2345 = vclz %v2344
    %v2346 = vsub.s32 %v2345, 2
    %vm2347 = vcmp.gt.s32.totalorder 0, %v2346
    %v2348 = vsel %vm2347, 0, %v2346
    %v2349 = vsub.s32 32, %v2348
    %v2350 = vshll.u32 %v2341, %v2348
    %v2351 = vshrl.u32 %v2333, %v2349
    %v2352 = vor.u32 %v2350, %v2351
    %v2353 = vsub.s32 4294967266, %v2348
    %v2354 = vadd.s32 %v2353, 127
    %v2355 = vshll.u32 %v2354, 23
    %v2356 = vor.u32 4788187, %v2355
    %v2357 = vand.u32 2147483647, %v2356
    %v2359 = vcvt.s32.f32 %v2352
    %v2360 = vmul.f32 %v2359, %v2357
    %v2361 = vxor.u32 %v2360, 2147483648
    %v2362 = vsel %vm2279, %v2361, %v2360
    %v2363 = vsub.s32 4, %v2339
    %v2364 = vsel %vm2279, %v2363, %v2339
    %v2365 = vsel %vm2278, %v189, %v2362
    %v2366 = vsel %vm2278, 0, %v2364
    %v2367 = vcosq.f32.pop %v2365
    %v2368 = vsinq.f32.pop %v2365
    %vm2369 = vweird.f32 %v189
    %v2370 = vand.u32 %v2366, 3
    %vm2371 = vcmp.lt.s32.totalorder %v2370, 2
    %vm2372 = vcmp.eq.s32.totalorder %v2370, 0
    %v2373 = vxor.u32 %v2368, 2147483648
    %v2374 = vsel %vm2372, %v2367, %v2373
    %vm2375 = vcmp.eq.s32.totalorder %v2370, 2
    %v2376 = vxor.u32 %v2367, 2147483648
    %v2377 = vsel %vm2375, %v2376, %v2368
    %v2378 = vsel %vm2371, %v2374, %v2377
    %v2379 = vsel %vm2369, nan, %v2378
    %v2380 = vand.u32 2147483647, %v190
    %vm2381 = vcmp.le.f32.partialorder %v2380, 0.7853982
    %vm2382 = vcmp.lt.s32.totalorder %v190, 0
    %v2383 = vand.u32 %v190, 2139095040
    %v2384 = vshrl.u32 %v2383, 23
    %v2385 = vsub.s32 %v2384, 127
    %v2386 = vand.u32 2147483647, %v190
    %v2387 = vand.u32 %v2386, 8388607
    %v2388 = vor.u32 %v2387, 8388608
    %v2389 = vsub.s32 0, %v2388
    %v2390 = vadd.s32 %v2385, 1
    %vm2391 = vcmp.gt.s32.totalorder %v2390, 0
    %v2392 = vsel %vm2391, %v2390, 0
    %v2393 = vshrl.u32 %v2392, 5
    %v2394 = vand.u32 %v2392, 31
    %v2395 = vsub.s32 32, %v2394
    %v2396 = vshrl.u32 683565275, %v2395
    %v2397 = vshll.u32 683565275, %v2394
    %v2398 = vshrl.u32 2475754826, %v2395
    %v2399 = vor.u32 %v2397, %v2398
    %v2400 = vshll.u32 2475754826, %v2394
    %v2401 = vshrl.u32 2131351028, %v2395
    %v2402 = vor.u32 %v2400, %v2401
    %v2403 = vshll.u32 2131351028, %v2394
    %v2404 = vshrl.u32 2102212464, %v2395
    %v2405 = vor.u32 %v2403, %v2404
    %v2406 = vshll.u32 2102212464, %v2394
    %v2407 = vshrl.u32 920167782, %v2395
    %v2408 = vor.u32 %v2406, %v2407
    %v2409 = vshll.u32 920167782, %v2394
    %v2410 = vshrl.u32 1326507024, %v2395
    %v2411 = vor.u32 %v2409, %v2410
    %vm2412 = vcmp.lt.s32.totalorder %v2393, 1
    %vm2413 = vcmp.lt.s32.totalorder %v2393, 2
    %vm2414 = vcmp.lt.s32.totalorder %v2393, 3
    %vm2415 = vcmp.lt.s32.totalorder %v2393, 4
    %v2416 = vsel %vm2412, %v2396, %v2399
    %v2417 = vsel %vm2415, %v2405, 2102212464
    %v2418 = vsel %vm2414, %v2402, %v2417
    %v2419 = vsel %vm2413, %v2416, %v2418
    %v2420 = vsel %vm2412, %v2399, %v2402
    %v2421 = vsel %vm2415, %v2408, 920167782
    %v2422 = vsel %vm2414, %v2405, %v2421
    %v2423 = vsel %vm2413, %v2420, %v2422
    %v2424 = vsel %vm2412, %v2402, %v2405
    %v2425 = vsel %vm2415, %v2411, 1326507024
    %v2426 = vsel %vm2414, %v2408, %v2425
    %v2427 = vsel %vm2413, %v2424, %v2426
    %v2428 = vshll.u32 %v2388, 8
    %v2429 = vmul.u32.u64.compose %v2428, %v2427
    %v2430 = vextract.low.u32 %v2429
    %v2431 = vextract.high.u32 %v2429
    %v2432 = vmul.u32.u64.compose %v2428, %v2423
    %v2433 = vextract.low.u32 %v2432
    %v2434 = vextract.high.u32 %v2432
    %v2435 = vmul.u32 %v2428, %v2419
    %v2436 = vadd.s32 %v2431, %v2433
    %vm2437 = vc.u32 %v2431, %v2433
    %v2438 = vadd.s32 %v2434, 1
    %v2439 = vsel %vm2437, %v2438, %v2434
    %v2440 = vadd.s32 %v2435, %v2439
    %v2441 = vadd.s32 %v2440, 536870912
    %v2442 = vshrl.u32 %v2441, 30
    %v2443 = vshll.u32 %v2442, 30
    %v2444 = vsub.s32 %v2440, %v2443
    %vm2445 = vcmp.lt.s32.totalorder %v2444, 0
    %v2446 = vsub.s32 0, %v2444
    %v2447 = vsel %vm2445, %v2446, %v2444
    %v2448 = vclz %v2447
    %v2449 = vsub.s32 %v2448, 2
    %vm2450 = vcmp.gt.s32.totalorder 0, %v2449
    %v2451 = vsel %vm2450, 0, %v2449
    %v2452 = vsub.s32 32, %v2451
    %v2453 = vshll.u32 %v2444, %v2451
    %v2454 = vshrl.u32 %v2436, %v2452
    %v2455 = vor.u32 %v2453, %v2454
    %v2456 = vsub.s32 4294967266, %v2451
    %v2457 = vadd.s32 %v2456, 127
    %v2458 = vshll.u32 %v2457, 23
    %v2459 = vor.u32 4788187, %v2458
    %v2460 = vand.u32 2147483647, %v2459
    %v2462 = vcvt.s32.f32 %v2455
    %v2463 = vmul.f32 %v2462, %v2460
    %v2464 = vxor.u32 %v2463, 2147483648
    %v2465 = vsel %vm2382, %v2464, %v2463
    %v2466 = vsub.s32 4, %v2442
    %v2467 = vsel %vm2382, %v2466, %v2442
    %v2468 = vsel %vm2381, %v190, %v2465
    %v2469 = vsel %vm2381, 0, %v2467
    %v2470 = vcosq.f32.pop %v2468
    %v2471 = vsinq.f32.pop %v2468
    %vm2472 = vweird.f32 %v190
    %v2473 = vand.u32 %v2469, 3
    %vm2474 = vcmp.lt.s32.totalorder %v2473, 2
    %vm2475 = vcmp.eq.s32.totalorder %v2473, 0
    %v2476 = vxor.u32 %v2471, 2147483648
    %v2477 = vsel %vm2475, %v2470, %v2476
    %vm2478 = vcmp.eq.s32.totalorder %v2473, 2
    %v2479 = vxor.u32 %v2470, 2147483648
    %v2480 = vsel %vm2478, %v2479, %v2471
    %v2481 = vsel %vm2474, %v2477, %v2480
    %v2482 = vsel %vm2472, nan, %v2481
    %v2483 = vand.u32 2147483647, %v191
    %vm2484 = vcmp.le.f32.partialorder %v2483, 0.7853982
    %vm2485 = vcmp.lt.s32.totalorder %v191, 0
    %v2486 = vand.u32 %v191, 2139095040
    %v2487 = vshrl.u32 %v2486, 23
    %v2488 = vsub.s32 %v2487, 127
    %v2489 = vand.u32 2147483647, %v191
    %v2490 = vand.u32 %v2489, 8388607
    %v2491 = vor.u32 %v2490, 8388608
    %v2492 = vsub.s32 0, %v2491
    %v2493 = vadd.s32 %v2488, 1
    %vm2494 = vcmp.gt.s32.totalorder %v2493, 0
    %v2495 = vsel %vm2494, %v2493, 0
    %v2496 = vshrl.u32 %v2495, 5
    %v2497 = vand.u32 %v2495, 31
    %v2498 = vsub.s32 32, %v2497
    %v2499 = vshrl.u32 683565275, %v2498
    %v2500 = vshll.u32 683565275, %v2497
    %v2501 = vshrl.u32 2475754826, %v2498
    %v2502 = vor.u32 %v2500, %v2501
    %v2503 = vshll.u32 2475754826, %v2497
    %v2504 = vshrl.u32 2131351028, %v2498
    %v2505 = vor.u32 %v2503, %v2504
    %v2506 = vshll.u32 2131351028, %v2497
    %v2507 = vshrl.u32 2102212464, %v2498
    %v2508 = vor.u32 %v2506, %v2507
    %v2509 = vshll.u32 2102212464, %v2497
    %v2510 = vshrl.u32 920167782, %v2498
    %v2511 = vor.u32 %v2509, %v2510
    %v2512 = vshll.u32 920167782, %v2497
    %v2513 = vshrl.u32 1326507024, %v2498
    %v2514 = vor.u32 %v2512, %v2513
    %vm2515 = vcmp.lt.s32.totalorder %v2496, 1
    %vm2516 = vcmp.lt.s32.totalorder %v2496, 2
    %vm2517 = vcmp.lt.s32.totalorder %v2496, 3
    %vm2518 = vcmp.lt.s32.totalorder %v2496, 4
    %v2519 = vsel %vm2515, %v2499, %v2502
    %v2520 = vsel %vm2518, %v2508, 2102212464
    %v2521 = vsel %vm2517, %v2505, %v2520
    %v2522 = vsel %vm2516, %v2519, %v2521
    %v2523 = vsel %vm2515, %v2502, %v2505
    %v2524 = vsel %vm2518, %v2511, 920167782
    %v2525 = vsel %vm2517, %v2508, %v2524
    %v2526 = vsel %vm2516, %v2523, %v2525
    %v2527 = vsel %vm2515, %v2505, %v2508
    %v2528 = vsel %vm2518, %v2514, 1326507024
    %v2529 = vsel %vm2517, %v2511, %v2528
    %v2530 = vsel %vm2516, %v2527, %v2529
    %v2531 = vshll.u32 %v2491, 8
    %v2532 = vmul.u32.u64.compose %v2531, %v2530
    %v2533 = vextract.low.u32 %v2532
    %v2534 = vextract.high.u32 %v2532
    %v2535 = vmul.u32.u64.compose %v2531, %v2526
    %v2536 = vextract.low.u32 %v2535
    %v2537 = vextract.high.u32 %v2535
    %v2538 = vmul.u32 %v2531, %v2522
    %v2539 = vadd.s32 %v2534, %v2536
    %vm2540 = vc.u32 %v2534, %v2536
    %v2541 = vadd.s32 %v2537, 1
    %v2542 = vsel %vm2540, %v2541, %v2537
    %v2543 = vadd.s32 %v2538, %v2542
    %v2544 = vadd.s32 %v2543, 536870912
    %v2545 = vshrl.u32 %v2544, 30
    %v2546 = vshll.u32 %v2545, 30
    %v2547 = vsub.s32 %v2543, %v2546
    %vm2548 = vcmp.lt.s32.totalorder %v2547, 0
    %v2549 = vsub.s32 0, %v2547
    %v2550 = vsel %vm2548, %v2549, %v2547
    %v2551 = vclz %v2550
    %v2552 = vsub.s32 %v2551, 2
    %vm2553 = vcmp.gt.s32.totalorder 0, %v2552
    %v2554 = vsel %vm2553, 0, %v2552
    %v2555 = vsub.s32 32, %v2554
    %v2556 = vshll.u32 %v2547, %v2554
    %v2557 = vshrl.u32 %v2539, %v2555
    %v2558 = vor.u32 %v2556, %v2557
    %v2559 = vsub.s32 4294967266, %v2554
    %v2560 = vadd.s32 %v2559, 127
    %v2561 = vshll.u32 %v2560, 23
    %v2562 = vor.u32 4788187, %v2561
    %v2563 = vand.u32 2147483647, %v2562
    %v2565 = vcvt.s32.f32 %v2558
    %v2566 = vmul.f32 %v2565, %v2563
    %v2567 = vxor.u32 %v2566, 2147483648
    %v2568 = vsel %vm2485, %v2567, %v2566
    %v2569 = vsub.s32 4, %v2545
    %v2570 = vsel %vm2485, %v2569, %v2545
    %v2571 = vsel %vm2484, %v191, %v2568
    %v2572 = vsel %vm2484, 0, %v2570
    %v2573 = vcosq.f32.pop %v2571
    %v2574 = vsinq.f32.pop %v2571
    %vm2575 = vweird.f32 %v191
    %v2576 = vand.u32 %v2572, 3
    %vm2577 = vcmp.lt.s32.totalorder %v2576, 2
    %vm2578 = vcmp.eq.s32.totalorder %v2576, 0
    %v2579 = vxor.u32 %v2574, 2147483648
    %v2580 = vsel %vm2578, %v2573, %v2579
    %vm2581 = vcmp.eq.s32.totalorder %v2576, 2
    %v2582 = vxor.u32 %v2573, 2147483648
    %v2583 = vsel %vm2581, %v2582, %v2574
    %v2584 = vsel %vm2577, %v2580, %v2583
    %v2585 = vsel %vm2575, nan, %v2584
    %v2586 = vand.u32 2147483647, %v192
    %vm2587 = vcmp.le.f32.partialorder %v2586, 0.7853982
    %vm2588 = vcmp.lt.s32.totalorder %v192, 0
    %v2589 = vand.u32 %v192, 2139095040
    %v2590 = vshrl.u32 %v2589, 23
    %v2591 = vsub.s32 %v2590, 127
    %v2592 = vand.u32 2147483647, %v192
    %v2593 = vand.u32 %v2592, 8388607
    %v2594 = vor.u32 %v2593, 8388608
    %v2595 = vsub.s32 0, %v2594
    %v2596 = vadd.s32 %v2591, 1
    %vm2597 = vcmp.gt.s32.totalorder %v2596, 0
    %v2598 = vsel %vm2597, %v2596, 0
    %v2599 = vshrl.u32 %v2598, 5
    %v2600 = vand.u32 %v2598, 31
    %v2601 = vsub.s32 32, %v2600
    %v2602 = vshrl.u32 683565275, %v2601
    %v2603 = vshll.u32 683565275, %v2600
    %v2604 = vshrl.u32 2475754826, %v2601
    %v2605 = vor.u32 %v2603, %v2604
    %v2606 = vshll.u32 2475754826, %v2600
    %v2607 = vshrl.u32 2131351028, %v2601
    %v2608 = vor.u32 %v2606, %v2607
    %v2609 = vshll.u32 2131351028, %v2600
    %v2610 = vshrl.u32 2102212464, %v2601
    %v2611 = vor.u32 %v2609, %v2610
    %v2612 = vshll.u32 2102212464, %v2600
    %v2613 = vshrl.u32 920167782, %v2601
    %v2614 = vor.u32 %v2612, %v2613
    %v2615 = vshll.u32 920167782, %v2600
    %v2616 = vshrl.u32 1326507024, %v2601
    %v2617 = vor.u32 %v2615, %v2616
    %vm2618 = vcmp.lt.s32.totalorder %v2599, 1
    %vm2619 = vcmp.lt.s32.totalorder %v2599, 2
    %vm2620 = vcmp.lt.s32.totalorder %v2599, 3
    %vm2621 = vcmp.lt.s32.totalorder %v2599, 4
    %v2622 = vsel %vm2618, %v2602, %v2605
    %v2623 = vsel %vm2621, %v2611, 2102212464
    %v2624 = vsel %vm2620, %v2608, %v2623
    %v2625 = vsel %vm2619, %v2622, %v2624
    %v2626 = vsel %vm2618, %v2605, %v2608
    %v2627 = vsel %vm2621, %v2614, 920167782
    %v2628 = vsel %vm2620, %v2611, %v2627
    %v2629 = vsel %vm2619, %v2626, %v2628
    %v2630 = vsel %vm2618, %v2608, %v2611
    %v2631 = vsel %vm2621, %v2617, 1326507024
    %v2632 = vsel %vm2620, %v2614, %v2631
    %v2633 = vsel %vm2619, %v2630, %v2632
    %v2634 = vshll.u32 %v2594, 8
    %v2635 = vmul.u32.u64.compose %v2634, %v2633
    %v2636 = vextract.low.u32 %v2635
    %v2637 = vextract.high.u32 %v2635
    %v2638 = vmul.u32.u64.compose %v2634, %v2629
    %v2639 = vextract.low.u32 %v2638
    %v2640 = vextract.high.u32 %v2638
    %v2641 = vmul.u32 %v2634, %v2625
    %v2642 = vadd.s32 %v2637, %v2639
    %vm2643 = vc.u32 %v2637, %v2639
    %v2644 = vadd.s32 %v2640, 1
    %v2645 = vsel %vm2643, %v2644, %v2640
    %v2646 = vadd.s32 %v2641, %v2645
    %v2647 = vadd.s32 %v2646, 536870912
    %v2648 = vshrl.u32 %v2647, 30
    %v2649 = vshll.u32 %v2648, 30
    %v2650 = vsub.s32 %v2646, %v2649
    %vm2651 = vcmp.lt.s32.totalorder %v2650, 0
    %v2652 = vsub.s32 0, %v2650
    %v2653 = vsel %vm2651, %v2652, %v2650
    %v2654 = vclz %v2653
    %v2655 = vsub.s32 %v2654, 2
    %vm2656 = vcmp.gt.s32.totalorder 0, %v2655
    %v2657 = vsel %vm2656, 0, %v2655
    %v2658 = vsub.s32 32, %v2657
    %v2659 = vshll.u32 %v2650, %v2657
    %v2660 = vshrl.u32 %v2642, %v2658
    %v2661 = vor.u32 %v2659, %v2660
    %v2662 = vsub.s32 4294967266, %v2657
    %v2663 = vadd.s32 %v2662, 127
    %v2664 = vshll.u32 %v2663, 23
    %v2665 = vor.u32 4788187, %v2664
    %v2666 = vand.u32 2147483647, %v2665
    %v2668 = vcvt.s32.f32 %v2661
    %v2669 = vmul.f32 %v2668, %v2666
    %v2670 = vxor.u32 %v2669, 2147483648
    %v2671 = vsel %vm2588, %v2670, %v2669
    %v2672 = vsub.s32 4, %v2648
    %v2673 = vsel %vm2588, %v2672, %v2648
    %v2674 = vsel %vm2587, %v192, %v2671
    %v2675 = vsel %vm2587, 0, %v2673
    %v2676 = vcosq.f32.pop %v2674
    %v2677 = vsinq.f32.pop %v2674
    %vm2678 = vweird.f32 %v192
    %v2679 = vand.u32 %v2675, 3
    %vm2680 = vcmp.lt.s32.totalorder %v2679, 2
    %vm2681 = vcmp.eq.s32.totalorder %v2679, 0
    %v2682 = vxor.u32 %v2677, 2147483648
    %v2683 = vsel %vm2681, %v2676, %v2682
    %vm2684 = vcmp.eq.s32.totalorder %v2679, 2
    %v2685 = vxor.u32 %v2676, 2147483648
    %v2686 = vsel %vm2684, %v2685, %v2677
    %v2687 = vsel %vm2680, %v2683, %v2686
    %v2688 = vsel %vm2678, nan, %v2687
    %v2689 = vand.u32 2147483647, %v193
    %vm2690 = vcmp.le.f32.partialorder %v2689, 0.7853982
    %vm2691 = vcmp.lt.s32.totalorder %v193, 0
    %v2692 = vand.u32 %v193, 2139095040
    %v2693 = vshrl.u32 %v2692, 23
    %v2694 = vsub.s32 %v2693, 127
    %v2695 = vand.u32 2147483647, %v193
    %v2696 = vand.u32 %v2695, 8388607
    %v2697 = vor.u32 %v2696, 8388608
    %v2698 = vsub.s32 0, %v2697
    %v2699 = vadd.s32 %v2694, 1
    %vm2700 = vcmp.gt.s32.totalorder %v2699, 0
    %v2701 = vsel %vm2700, %v2699, 0
    %v2702 = vshrl.u32 %v2701, 5
    %v2703 = vand.u32 %v2701, 31
    %v2704 = vsub.s32 32, %v2703
    %v2705 = vshrl.u32 683565275, %v2704
    %v2706 = vshll.u32 683565275, %v2703
    %v2707 = vshrl.u32 2475754826, %v2704
    %v2708 = vor.u32 %v2706, %v2707
    %v2709 = vshll.u32 2475754826, %v2703
    %v2710 = vshrl.u32 2131351028, %v2704
    %v2711 = vor.u32 %v2709, %v2710
    %v2712 = vshll.u32 2131351028, %v2703
    %v2713 = vshrl.u32 2102212464, %v2704
    %v2714 = vor.u32 %v2712, %v2713
    %v2715 = vshll.u32 2102212464, %v2703
    %v2716 = vshrl.u32 920167782, %v2704
    %v2717 = vor.u32 %v2715, %v2716
    %v2718 = vshll.u32 920167782, %v2703
    %v2719 = vshrl.u32 1326507024, %v2704
    %v2720 = vor.u32 %v2718, %v2719
    %vm2721 = vcmp.lt.s32.totalorder %v2702, 1
    %vm2722 = vcmp.lt.s32.totalorder %v2702, 2
    %vm2723 = vcmp.lt.s32.totalorder %v2702, 3
    %vm2724 = vcmp.lt.s32.totalorder %v2702, 4
    %v2725 = vsel %vm2721, %v2705, %v2708
    %v2726 = vsel %vm2724, %v2714, 2102212464
    %v2727 = vsel %vm2723, %v2711, %v2726
    %v2728 = vsel %vm2722, %v2725, %v2727
    %v2729 = vsel %vm2721, %v2708, %v2711
    %v2730 = vsel %vm2724, %v2717, 920167782
    %v2731 = vsel %vm2723, %v2714, %v2730
    %v2732 = vsel %vm2722, %v2729, %v2731
    %v2733 = vsel %vm2721, %v2711, %v2714
    %v2734 = vsel %vm2724, %v2720, 1326507024
    %v2735 = vsel %vm2723, %v2717, %v2734
    %v2736 = vsel %vm2722, %v2733, %v2735
    %v2737 = vshll.u32 %v2697, 8
    %v2738 = vmul.u32.u64.compose %v2737, %v2736
    %v2739 = vextract.low.u32 %v2738
    %v2740 = vextract.high.u32 %v2738
    %v2741 = vmul.u32.u64.compose %v2737, %v2732
    %v2742 = vextract.low.u32 %v2741
    %v2743 = vextract.high.u32 %v2741
    %v2744 = vmul.u32 %v2737, %v2728
    %v2745 = vadd.s32 %v2740, %v2742
    %vm2746 = vc.u32 %v2740, %v2742
    %v2747 = vadd.s32 %v2743, 1
    %v2748 = vsel %vm2746, %v2747, %v2743
    %v2749 = vadd.s32 %v2744, %v2748
    %v2750 = vadd.s32 %v2749, 536870912
    %v2751 = vshrl.u32 %v2750, 30
    %v2752 = vshll.u32 %v2751, 30
    %v2753 = vsub.s32 %v2749, %v2752
    %vm2754 = vcmp.lt.s32.totalorder %v2753, 0
    %v2755 = vsub.s32 0, %v2753
    %v2756 = vsel %vm2754, %v2755, %v2753
    %v2757 = vclz %v2756
    %v2758 = vsub.s32 %v2757, 2
    %vm2759 = vcmp.gt.s32.totalorder 0, %v2758
    %v2760 = vsel %vm2759, 0, %v2758
    %v2761 = vsub.s32 32, %v2760
    %v2762 = vshll.u32 %v2753, %v2760
    %v2763 = vshrl.u32 %v2745, %v2761
    %v2764 = vor.u32 %v2762, %v2763
    %v2765 = vsub.s32 4294967266, %v2760
    %v2766 = vadd.s32 %v2765, 127
    %v2767 = vshll.u32 %v2766, 23
    %v2768 = vor.u32 4788187, %v2767
    %v2769 = vand.u32 2147483647, %v2768
    %v2771 = vcvt.s32.f32 %v2764
    %v2772 = vmul.f32 %v2771, %v2769
    %v2773 = vxor.u32 %v2772, 2147483648
    %v2774 = vsel %vm2691, %v2773, %v2772
    %v2775 = vsub.s32 4, %v2751
    %v2776 = vsel %vm2691, %v2775, %v2751
    %v2777 = vsel %vm2690, %v193, %v2774
    %v2778 = vsel %vm2690, 0, %v2776
    %v2779 = vcosq.f32.pop %v2777
    %v2780 = vsinq.f32.pop %v2777
    %vm2781 = vweird.f32 %v193
    %v2782 = vand.u32 %v2778, 3
    %vm2783 = vcmp.lt.s32.totalorder %v2782, 2
    %vm2784 = vcmp.eq.s32.totalorder %v2782, 0
    %v2785 = vxor.u32 %v2780, 2147483648
    %v2786 = vsel %vm2784, %v2779, %v2785
    %vm2787 = vcmp.eq.s32.totalorder %v2782, 2
    %v2788 = vxor.u32 %v2779, 2147483648
    %v2789 = vsel %vm2787, %v2788, %v2780
    %v2790 = vsel %vm2783, %v2786, %v2789
    %v2791 = vsel %vm2781, nan, %v2790
    %v2792 = vand.u32 2147483647, %v194
    %vm2793 = vcmp.le.f32.partialorder %v2792, 0.7853982
    %vm2794 = vcmp.lt.s32.totalorder %v194, 0
    %v2795 = vand.u32 %v194, 2139095040
    %v2796 = vshrl.u32 %v2795, 23
    %v2797 = vsub.s32 %v2796, 127
    %v2798 = vand.u32 2147483647, %v194
    %v2799 = vand.u32 %v2798, 8388607
    %v2800 = vor.u32 %v2799, 8388608
    %v2801 = vsub.s32 0, %v2800
    %v2802 = vadd.s32 %v2797, 1
    %vm2803 = vcmp.gt.s32.totalorder %v2802, 0
    %v2804 = vsel %vm2803, %v2802, 0
    %v2805 = vshrl.u32 %v2804, 5
    %v2806 = vand.u32 %v2804, 31
    %v2807 = vsub.s32 32, %v2806
    %v2808 = vshrl.u32 683565275, %v2807
    %v2809 = vshll.u32 683565275, %v2806
    %v2810 = vshrl.u32 2475754826, %v2807
    %v2811 = vor.u32 %v2809, %v2810
    %v2812 = vshll.u32 2475754826, %v2806
    %v2813 = vshrl.u32 2131351028, %v2807
    %v2814 = vor.u32 %v2812, %v2813
    %v2815 = vshll.u32 2131351028, %v2806
    %v2816 = vshrl.u32 2102212464, %v2807
    %v2817 = vor.u32 %v2815, %v2816
    %v2818 = vshll.u32 2102212464, %v2806
    %v2819 = vshrl.u32 920167782, %v2807
    %v2820 = vor.u32 %v2818, %v2819
    %v2821 = vshll.u32 920167782, %v2806
    %v2822 = vshrl.u32 1326507024, %v2807
    %v2823 = vor.u32 %v2821, %v2822
    %vm2824 = vcmp.lt.s32.totalorder %v2805, 1
    %vm2825 = vcmp.lt.s32.totalorder %v2805, 2
    %vm2826 = vcmp.lt.s32.totalorder %v2805, 3
    %vm2827 = vcmp.lt.s32.totalorder %v2805, 4
    %v2828 = vsel %vm2824, %v2808, %v2811
    %v2829 = vsel %vm2827, %v2817, 2102212464
    %v2830 = vsel %vm2826, %v2814, %v2829
    %v2831 = vsel %vm2825, %v2828, %v2830
    %v2832 = vsel %vm2824, %v2811, %v2814
    %v2833 = vsel %vm2827, %v2820, 920167782
    %v2834 = vsel %vm2826, %v2817, %v2833
    %v2835 = vsel %vm2825, %v2832, %v2834
    %v2836 = vsel %vm2824, %v2814, %v2817
    %v2837 = vsel %vm2827, %v2823, 1326507024
    %v2838 = vsel %vm2826, %v2820, %v2837
    %v2839 = vsel %vm2825, %v2836, %v2838
    %v2840 = vshll.u32 %v2800, 8
    %v2841 = vmul.u32.u64.compose %v2840, %v2839
    %v2842 = vextract.low.u32 %v2841
    %v2843 = vextract.high.u32 %v2841
    %v2844 = vmul.u32.u64.compose %v2840, %v2835
    %v2845 = vextract.low.u32 %v2844
    %v2846 = vextract.high.u32 %v2844
    %v2847 = vmul.u32 %v2840, %v2831
    %v2848 = vadd.s32 %v2843, %v2845
    %vm2849 = vc.u32 %v2843, %v2845
    %v2850 = vadd.s32 %v2846, 1
    %v2851 = vsel %vm2849, %v2850, %v2846
    %v2852 = vadd.s32 %v2847, %v2851
    %v2853 = vadd.s32 %v2852, 536870912
    %v2854 = vshrl.u32 %v2853, 30
    %v2855 = vshll.u32 %v2854, 30
    %v2856 = vsub.s32 %v2852, %v2855
    %vm2857 = vcmp.lt.s32.totalorder %v2856, 0
    %v2858 = vsub.s32 0, %v2856
    %v2859 = vsel %vm2857, %v2858, %v2856
    %v2860 = vclz %v2859
    %v2861 = vsub.s32 %v2860, 2
    %vm2862 = vcmp.gt.s32.totalorder 0, %v2861
    %v2863 = vsel %vm2862, 0, %v2861
    %v2864 = vsub.s32 32, %v2863
    %v2865 = vshll.u32 %v2856, %v2863
    %v2866 = vshrl.u32 %v2848, %v2864
    %v2867 = vor.u32 %v2865, %v2866
    %v2868 = vsub.s32 4294967266, %v2863
    %v2869 = vadd.s32 %v2868, 127
    %v2870 = vshll.u32 %v2869, 23
    %v2871 = vor.u32 4788187, %v2870
    %v2872 = vand.u32 2147483647, %v2871
    %v2874 = vcvt.s32.f32 %v2867
    %v2875 = vmul.f32 %v2874, %v2872
    %v2876 = vxor.u32 %v2875, 2147483648
    %v2877 = vsel %vm2794, %v2876, %v2875
    %v2878 = vsub.s32 4, %v2854
    %v2879 = vsel %vm2794, %v2878, %v2854
    %v2880 = vsel %vm2793, %v194, %v2877
    %v2881 = vsel %vm2793, 0, %v2879
    %v2882 = vcosq.f32.pop %v2880
    %v2883 = vsinq.f32.pop %v2880
    %vm2884 = vweird.f32 %v194
    %v2885 = vand.u32 %v2881, 3
    %vm2886 = vcmp.lt.s32.totalorder %v2885, 2
    %vm2887 = vcmp.eq.s32.totalorder %v2885, 0
    %v2888 = vxor.u32 %v2883, 2147483648
    %v2889 = vsel %vm2887, %v2882, %v2888
    %vm2890 = vcmp.eq.s32.totalorder %v2885, 2
    %v2891 = vxor.u32 %v2882, 2147483648
    %v2892 = vsel %vm2890, %v2891, %v2883
    %v2893 = vsel %vm2886, %v2889, %v2892
    %v2894 = vsel %vm2884, nan, %v2893
    %v2895 = vand.u32 2147483647, %v195
    %vm2896 = vcmp.le.f32.partialorder %v2895, 0.7853982
    %vm2897 = vcmp.lt.s32.totalorder %v195, 0
    %v2898 = vand.u32 %v195, 2139095040
    %v2899 = vshrl.u32 %v2898, 23
    %v2900 = vsub.s32 %v2899, 127
    %v2901 = vand.u32 2147483647, %v195
    %v2902 = vand.u32 %v2901, 8388607
    %v2903 = vor.u32 %v2902, 8388608
    %v2904 = vsub.s32 0, %v2903
    %v2905 = vadd.s32 %v2900, 1
    %vm2906 = vcmp.gt.s32.totalorder %v2905, 0
    %v2907 = vsel %vm2906, %v2905, 0
    %v2908 = vshrl.u32 %v2907, 5
    %v2909 = vand.u32 %v2907, 31
    %v2910 = vsub.s32 32, %v2909
    %v2911 = vshrl.u32 683565275, %v2910
    %v2912 = vshll.u32 683565275, %v2909
    %v2913 = vshrl.u32 2475754826, %v2910
    %v2914 = vor.u32 %v2912, %v2913
    %v2915 = vshll.u32 2475754826, %v2909
    %v2916 = vshrl.u32 2131351028, %v2910
    %v2917 = vor.u32 %v2915, %v2916
    %v2918 = vshll.u32 2131351028, %v2909
    %v2919 = vshrl.u32 2102212464, %v2910
    %v2920 = vor.u32 %v2918, %v2919
    %v2921 = vshll.u32 2102212464, %v2909
    %v2922 = vshrl.u32 920167782, %v2910
    %v2923 = vor.u32 %v2921, %v2922
    %v2924 = vshll.u32 920167782, %v2909
    %v2925 = vshrl.u32 1326507024, %v2910
    %v2926 = vor.u32 %v2924, %v2925
    %vm2927 = vcmp.lt.s32.totalorder %v2908, 1
    %vm2928 = vcmp.lt.s32.totalorder %v2908, 2
    %vm2929 = vcmp.lt.s32.totalorder %v2908, 3
    %vm2930 = vcmp.lt.s32.totalorder %v2908, 4
    %v2931 = vsel %vm2927, %v2911, %v2914
    %v2932 = vsel %vm2930, %v2920, 2102212464
    %v2933 = vsel %vm2929, %v2917, %v2932
    %v2934 = vsel %vm2928, %v2931, %v2933
    %v2935 = vsel %vm2927, %v2914, %v2917
    %v2936 = vsel %vm2930, %v2923, 920167782
    %v2937 = vsel %vm2929, %v2920, %v2936
    %v2938 = vsel %vm2928, %v2935, %v2937
    %v2939 = vsel %vm2927, %v2917, %v2920
    %v2940 = vsel %vm2930, %v2926, 1326507024
    %v2941 = vsel %vm2929, %v2923, %v2940
    %v2942 = vsel %vm2928, %v2939, %v2941
    %v2943 = vshll.u32 %v2903, 8
    %v2944 = vmul.u32.u64.compose %v2943, %v2942
    %v2945 = vextract.low.u32 %v2944
    %v2946 = vextract.high.u32 %v2944
    %v2947 = vmul.u32.u64.compose %v2943, %v2938
    %v2948 = vextract.low.u32 %v2947
    %v2949 = vextract.high.u32 %v2947
    %v2950 = vmul.u32 %v2943, %v2934
    %v2951 = vadd.s32 %v2946, %v2948
    %vm2952 = vc.u32 %v2946, %v2948
    %v2953 = vadd.s32 %v2949, 1
    %v2954 = vsel %vm2952, %v2953, %v2949
    %v2955 = vadd.s32 %v2950, %v2954
    %v2956 = vadd.s32 %v2955, 536870912
    %v2957 = vshrl.u32 %v2956, 30
    %v2958 = vshll.u32 %v2957, 30
    %v2959 = vsub.s32 %v2955, %v2958
    %vm2960 = vcmp.lt.s32.totalorder %v2959, 0
    %v2961 = vsub.s32 0, %v2959
    %v2962 = vsel %vm2960, %v2961, %v2959
    %v2963 = vclz %v2962
    %v2964 = vsub.s32 %v2963, 2
    %vm2965 = vcmp.gt.s32.totalorder 0, %v2964
    %v2966 = vsel %vm2965, 0, %v2964
    %v2967 = vsub.s32 32, %v2966
    %v2968 = vshll.u32 %v2959, %v2966
    %v2969 = vshrl.u32 %v2951, %v2967
    %v2970 = vor.u32 %v2968, %v2969
    %v2971 = vsub.s32 4294967266, %v2966
    %v2972 = vadd.s32 %v2971, 127
    %v2973 = vshll.u32 %v2972, 23
    %v2974 = vor.u32 4788187, %v2973
    %v2975 = vand.u32 2147483647, %v2974
    %v2977 = vcvt.s32.f32 %v2970
    %v2978 = vmul.f32 %v2977, %v2975
    %v2979 = vxor.u32 %v2978, 2147483648
    %v2980 = vsel %vm2897, %v2979, %v2978
    %v2981 = vsub.s32 4, %v2957
    %v2982 = vsel %vm2897, %v2981, %v2957
    %v2983 = vsel %vm2896, %v195, %v2980
    %v2984 = vsel %vm2896, 0, %v2982
    %v2985 = vcosq.f32.pop %v2983
    %v2986 = vsinq.f32.pop %v2983
    %vm2987 = vweird.f32 %v195
    %v2988 = vand.u32 %v2984, 3
    %vm2989 = vcmp.lt.s32.totalorder %v2988, 2
    %vm2990 = vcmp.eq.s32.totalorder %v2988, 0
    %v2991 = vxor.u32 %v2986, 2147483648
    %v2992 = vsel %vm2990, %v2985, %v2991
    %vm2993 = vcmp.eq.s32.totalorder %v2988, 2
    %v2994 = vxor.u32 %v2985, 2147483648
    %v2995 = vsel %vm2993, %v2994, %v2986
    %v2996 = vsel %vm2989, %v2992, %v2995
    %v2997 = vsel %vm2987, nan, %v2996
    %v2998 = vand.u32 2147483647, %v196
    %vm2999 = vcmp.le.f32.partialorder %v2998, 0.7853982
    %vm3000 = vcmp.lt.s32.totalorder %v196, 0
    %v3001 = vand.u32 %v196, 2139095040
    %v3002 = vshrl.u32 %v3001, 23
    %v3003 = vsub.s32 %v3002, 127
    %v3004 = vand.u32 2147483647, %v196
    %v3005 = vand.u32 %v3004, 8388607
    %v3006 = vor.u32 %v3005, 8388608
    %v3007 = vsub.s32 0, %v3006
    %v3008 = vadd.s32 %v3003, 1
    %vm3009 = vcmp.gt.s32.totalorder %v3008, 0
    %v3010 = vsel %vm3009, %v3008, 0
    %v3011 = vshrl.u32 %v3010, 5
    %v3012 = vand.u32 %v3010, 31
    %v3013 = vsub.s32 32, %v3012
    %v3014 = vshrl.u32 683565275, %v3013
    %v3015 = vshll.u32 683565275, %v3012
    %v3016 = vshrl.u32 2475754826, %v3013
    %v3017 = vor.u32 %v3015, %v3016
    %v3018 = vshll.u32 2475754826, %v3012
    %v3019 = vshrl.u32 2131351028, %v3013
    %v3020 = vor.u32 %v3018, %v3019
    %v3021 = vshll.u32 2131351028, %v3012
    %v3022 = vshrl.u32 2102212464, %v3013
    %v3023 = vor.u32 %v3021, %v3022
    %v3024 = vshll.u32 2102212464, %v3012
    %v3025 = vshrl.u32 920167782, %v3013
    %v3026 = vor.u32 %v3024, %v3025
    %v3027 = vshll.u32 920167782, %v3012
    %v3028 = vshrl.u32 1326507024, %v3013
    %v3029 = vor.u32 %v3027, %v3028
    %vm3030 = vcmp.lt.s32.totalorder %v3011, 1
    %vm3031 = vcmp.lt.s32.totalorder %v3011, 2
    %vm3032 = vcmp.lt.s32.totalorder %v3011, 3
    %vm3033 = vcmp.lt.s32.totalorder %v3011, 4
    %v3034 = vsel %vm3030, %v3014, %v3017
    %v3035 = vsel %vm3033, %v3023, 2102212464
    %v3036 = vsel %vm3032, %v3020, %v3035
    %v3037 = vsel %vm3031, %v3034, %v3036
    %v3038 = vsel %vm3030, %v3017, %v3020
    %v3039 = vsel %vm3033, %v3026, 920167782
    %v3040 = vsel %vm3032, %v3023, %v3039
    %v3041 = vsel %vm3031, %v3038, %v3040
    %v3042 = vsel %vm3030, %v3020, %v3023
    %v3043 = vsel %vm3033, %v3029, 1326507024
    %v3044 = vsel %vm3032, %v3026, %v3043
    %v3045 = vsel %vm3031, %v3042, %v3044
    %v3046 = vshll.u32 %v3006, 8
    %v3047 = vmul.u32.u64.compose %v3046, %v3045
    %v3048 = vextract.low.u32 %v3047
    %v3049 = vextract.high.u32 %v3047
    %v3050 = vmul.u32.u64.compose %v3046, %v3041
    %v3051 = vextract.low.u32 %v3050
    %v3052 = vextract.high.u32 %v3050
    %v3053 = vmul.u32 %v3046, %v3037
    %v3054 = vadd.s32 %v3049, %v3051
    %vm3055 = vc.u32 %v3049, %v3051
    %v3056 = vadd.s32 %v3052, 1
    %v3057 = vsel %vm3055, %v3056, %v3052
    %v3058 = vadd.s32 %v3053, %v3057
    %v3059 = vadd.s32 %v3058, 536870912
    %v3060 = vshrl.u32 %v3059, 30
    %v3061 = vshll.u32 %v3060, 30
    %v3062 = vsub.s32 %v3058, %v3061
    %vm3063 = vcmp.lt.s32.totalorder %v3062, 0
    %v3064 = vsub.s32 0, %v3062
    %v3065 = vsel %vm3063, %v3064, %v3062
    %v3066 = vclz %v3065
    %v3067 = vsub.s32 %v3066, 2
    %vm3068 = vcmp.gt.s32.totalorder 0, %v3067
    %v3069 = vsel %vm3068, 0, %v3067
    %v3070 = vsub.s32 32, %v3069
    %v3071 = vshll.u32 %v3062, %v3069
    %v3072 = vshrl.u32 %v3054, %v3070
    %v3073 = vor.u32 %v3071, %v3072
    %v3074 = vsub.s32 4294967266, %v3069
    %v3075 = vadd.s32 %v3074, 127
    %v3076 = vshll.u32 %v3075, 23
    %v3077 = vor.u32 4788187, %v3076
    %v3078 = vand.u32 2147483647, %v3077
    %v3080 = vcvt.s32.f32 %v3073
    %v3081 = vmul.f32 %v3080, %v3078
    %v3082 = vxor.u32 %v3081, 2147483648
    %v3083 = vsel %vm3000, %v3082, %v3081
    %v3084 = vsub.s32 4, %v3060
    %v3085 = vsel %vm3000, %v3084, %v3060
    %v3086 = vsel %vm2999, %v196, %v3083
    %v3087 = vsel %vm2999, 0, %v3085
    %v3088 = vcosq.f32.pop %v3086
    %v3089 = vsinq.f32.pop %v3086
    %vm3090 = vweird.f32 %v196
    %v3091 = vand.u32 %v3087, 3
    %vm3092 = vcmp.lt.s32.totalorder %v3091, 2
    %vm3093 = vcmp.eq.s32.totalorder %v3091, 0
    %v3094 = vxor.u32 %v3089, 2147483648
    %v3095 = vsel %vm3093, %v3088, %v3094
    %vm3096 = vcmp.eq.s32.totalorder %v3091, 2
    %v3097 = vxor.u32 %v3088, 2147483648
    %v3098 = vsel %vm3096, %v3097, %v3089
    %v3099 = vsel %vm3092, %v3095, %v3098
    %v3100 = vsel %vm3090, nan, %v3099
    %v3101 = vand.u32 2147483647, %v197
    %vm3102 = vcmp.le.f32.partialorder %v3101, 0.7853982
    %vm3103 = vcmp.lt.s32.totalorder %v197, 0
    %v3104 = vand.u32 %v197, 2139095040
    %v3105 = vshrl.u32 %v3104, 23
    %v3106 = vsub.s32 %v3105, 127
    %v3107 = vand.u32 2147483647, %v197
    %v3108 = vand.u32 %v3107, 8388607
    %v3109 = vor.u32 %v3108, 8388608
    %v3110 = vsub.s32 0, %v3109
    %v3111 = vadd.s32 %v3106, 1
    %vm3112 = vcmp.gt.s32.totalorder %v3111, 0
    %v3113 = vsel %vm3112, %v3111, 0
    %v3114 = vshrl.u32 %v3113, 5
    %v3115 = vand.u32 %v3113, 31
    %v3116 = vsub.s32 32, %v3115
    %v3117 = vshrl.u32 683565275, %v3116
    %v3118 = vshll.u32 683565275, %v3115
    %v3119 = vshrl.u32 2475754826, %v3116
    %v3120 = vor.u32 %v3118, %v3119
    %v3121 = vshll.u32 2475754826, %v3115
    %v3122 = vshrl.u32 2131351028, %v3116
    %v3123 = vor.u32 %v3121, %v3122
    %v3124 = vshll.u32 2131351028, %v3115
    %v3125 = vshrl.u32 2102212464, %v3116
    %v3126 = vor.u32 %v3124, %v3125
    %v3127 = vshll.u32 2102212464, %v3115
    %v3128 = vshrl.u32 920167782, %v3116
    %v3129 = vor.u32 %v3127, %v3128
    %v3130 = vshll.u32 920167782, %v3115
    %v3131 = vshrl.u32 1326507024, %v3116
    %v3132 = vor.u32 %v3130, %v3131
    %vm3133 = vcmp.lt.s32.totalorder %v3114, 1
    %vm3134 = vcmp.lt.s32.totalorder %v3114, 2
    %vm3135 = vcmp.lt.s32.totalorder %v3114, 3
    %vm3136 = vcmp.lt.s32.totalorder %v3114, 4
    %v3137 = vsel %vm3133, %v3117, %v3120
    %v3138 = vsel %vm3136, %v3126, 2102212464
    %v3139 = vsel %vm3135, %v3123, %v3138
    %v3140 = vsel %vm3134, %v3137, %v3139
    %v3141 = vsel %vm3133, %v3120, %v3123
    %v3142 = vsel %vm3136, %v3129, 920167782
    %v3143 = vsel %vm3135, %v3126, %v3142
    %v3144 = vsel %vm3134, %v3141, %v3143
    %v3145 = vsel %vm3133, %v3123, %v3126
    %v3146 = vsel %vm3136, %v3132, 1326507024
    %v3147 = vsel %vm3135, %v3129, %v3146
    %v3148 = vsel %vm3134, %v3145, %v3147
    %v3149 = vshll.u32 %v3109, 8
    %v3150 = vmul.u32.u64.compose %v3149, %v3148
    %v3151 = vextract.low.u32 %v3150
    %v3152 = vextract.high.u32 %v3150
    %v3153 = vmul.u32.u64.compose %v3149, %v3144
    %v3154 = vextract.low.u32 %v3153
    %v3155 = vextract.high.u32 %v3153
    %v3156 = vmul.u32 %v3149, %v3140
    %v3157 = vadd.s32 %v3152, %v3154
    %vm3158 = vc.u32 %v3152, %v3154
    %v3159 = vadd.s32 %v3155, 1
    %v3160 = vsel %vm3158, %v3159, %v3155
    %v3161 = vadd.s32 %v3156, %v3160
    %v3162 = vadd.s32 %v3161, 536870912
    %v3163 = vshrl.u32 %v3162, 30
    %v3164 = vshll.u32 %v3163, 30
    %v3165 = vsub.s32 %v3161, %v3164
    %vm3166 = vcmp.lt.s32.totalorder %v3165, 0
    %v3167 = vsub.s32 0, %v3165
    %v3168 = vsel %vm3166, %v3167, %v3165
    %v3169 = vclz %v3168
    %v3170 = vsub.s32 %v3169, 2
    %vm3171 = vcmp.gt.s32.totalorder 0, %v3170
    %v3172 = vsel %vm3171, 0, %v3170
    %v3173 = vsub.s32 32, %v3172
    %v3174 = vshll.u32 %v3165, %v3172
    %v3175 = vshrl.u32 %v3157, %v3173
    %v3176 = vor.u32 %v3174, %v3175
    %v3177 = vsub.s32 4294967266, %v3172
    %v3178 = vadd.s32 %v3177, 127
    %v3179 = vshll.u32 %v3178, 23
    %v3180 = vor.u32 4788187, %v3179
    %v3181 = vand.u32 2147483647, %v3180
    %v3183 = vcvt.s32.f32 %v3176
    %v3184 = vmul.f32 %v3183, %v3181
    %v3185 = vxor.u32 %v3184, 2147483648
    %v3186 = vsel %vm3103, %v3185, %v3184
    %v3187 = vsub.s32 4, %v3163
    %v3188 = vsel %vm3103, %v3187, %v3163
    %v3189 = vsel %vm3102, %v197, %v3186
    %v3190 = vsel %vm3102, 0, %v3188
    %v3191 = vcosq.f32.pop %v3189
    %v3192 = vsinq.f32.pop %v3189
    %vm3193 = vweird.f32 %v197
    %v3194 = vand.u32 %v3190, 3
    %vm3195 = vcmp.lt.s32.totalorder %v3194, 2
    %vm3196 = vcmp.eq.s32.totalorder %v3194, 0
    %v3197 = vxor.u32 %v3192, 2147483648
    %v3198 = vsel %vm3196, %v3191, %v3197
    %vm3199 = vcmp.eq.s32.totalorder %v3194, 2
    %v3200 = vxor.u32 %v3191, 2147483648
    %v3201 = vsel %vm3199, %v3200, %v3192
    %v3202 = vsel %vm3195, %v3198, %v3201
    %v3203 = vsel %vm3193, nan, %v3202
    %v3204 = vand.u32 2147483647, %v198
    %vm3205 = vcmp.le.f32.partialorder %v3204, 0.7853982
    %vm3206 = vcmp.lt.s32.totalorder %v198, 0
    %v3207 = vand.u32 %v198, 2139095040
    %v3208 = vshrl.u32 %v3207, 23
    %v3209 = vsub.s32 %v3208, 127
    %v3210 = vand.u32 2147483647, %v198
    %v3211 = vand.u32 %v3210, 8388607
    %v3212 = vor.u32 %v3211, 8388608
    %v3213 = vsub.s32 0, %v3212
    %v3214 = vadd.s32 %v3209, 1
    %vm3215 = vcmp.gt.s32.totalorder %v3214, 0
    %v3216 = vsel %vm3215, %v3214, 0
    %v3217 = vshrl.u32 %v3216, 5
    %v3218 = vand.u32 %v3216, 31
    %v3219 = vsub.s32 32, %v3218
    %v3220 = vshrl.u32 683565275, %v3219
    %v3221 = vshll.u32 683565275, %v3218
    %v3222 = vshrl.u32 2475754826, %v3219
    %v3223 = vor.u32 %v3221, %v3222
    %v3224 = vshll.u32 2475754826, %v3218
    %v3225 = vshrl.u32 2131351028, %v3219
    %v3226 = vor.u32 %v3224, %v3225
    %v3227 = vshll.u32 2131351028, %v3218
    %v3228 = vshrl.u32 2102212464, %v3219
    %v3229 = vor.u32 %v3227, %v3228
    %v3230 = vshll.u32 2102212464, %v3218
    %v3231 = vshrl.u32 920167782, %v3219
    %v3232 = vor.u32 %v3230, %v3231
    %v3233 = vshll.u32 920167782, %v3218
    %v3234 = vshrl.u32 1326507024, %v3219
    %v3235 = vor.u32 %v3233, %v3234
    %vm3236 = vcmp.lt.s32.totalorder %v3217, 1
    %vm3237 = vcmp.lt.s32.totalorder %v3217, 2
    %vm3238 = vcmp.lt.s32.totalorder %v3217, 3
    %vm3239 = vcmp.lt.s32.totalorder %v3217, 4
    %v3240 = vsel %vm3236, %v3220, %v3223
    %v3241 = vsel %vm3239, %v3229, 2102212464
    %v3242 = vsel %vm3238, %v3226, %v3241
    %v3243 = vsel %vm3237, %v3240, %v3242
    %v3244 = vsel %vm3236, %v3223, %v3226
    %v3245 = vsel %vm3239, %v3232, 920167782
    %v3246 = vsel %vm3238, %v3229, %v3245
    %v3247 = vsel %vm3237, %v3244, %v3246
    %v3248 = vsel %vm3236, %v3226, %v3229
    %v3249 = vsel %vm3239, %v3235, 1326507024
    %v3250 = vsel %vm3238, %v3232, %v3249
    %v3251 = vsel %vm3237, %v3248, %v3250
    %v3252 = vshll.u32 %v3212, 8
    %v3253 = vmul.u32.u64.compose %v3252, %v3251
    %v3254 = vextract.low.u32 %v3253
    %v3255 = vextract.high.u32 %v3253
    %v3256 = vmul.u32.u64.compose %v3252, %v3247
    %v3257 = vextract.low.u32 %v3256
    %v3258 = vextract.high.u32 %v3256
    %v3259 = vmul.u32 %v3252, %v3243
    %v3260 = vadd.s32 %v3255, %v3257
    %vm3261 = vc.u32 %v3255, %v3257
    %v3262 = vadd.s32 %v3258, 1
    %v3263 = vsel %vm3261, %v3262, %v3258
    %v3264 = vadd.s32 %v3259, %v3263
    %v3265 = vadd.s32 %v3264, 536870912
    %v3266 = vshrl.u32 %v3265, 30
    %v3267 = vshll.u32 %v3266, 30
    %v3268 = vsub.s32 %v3264, %v3267
    %vm3269 = vcmp.lt.s32.totalorder %v3268, 0
    %v3270 = vsub.s32 0, %v3268
    %v3271 = vsel %vm3269, %v3270, %v3268
    %v3272 = vclz %v3271
    %v3273 = vsub.s32 %v3272, 2
    %vm3274 = vcmp.gt.s32.totalorder 0, %v3273
    %v3275 = vsel %vm3274, 0, %v3273
    %v3276 = vsub.s32 32, %v3275
    %v3277 = vshll.u32 %v3268, %v3275
    %v3278 = vshrl.u32 %v3260, %v3276
    %v3279 = vor.u32 %v3277, %v3278
    %v3280 = vsub.s32 4294967266, %v3275
    %v3281 = vadd.s32 %v3280, 127
    %v3282 = vshll.u32 %v3281, 23
    %v3283 = vor.u32 4788187, %v3282
    %v3284 = vand.u32 2147483647, %v3283
    %v3286 = vcvt.s32.f32 %v3279
    %v3287 = vmul.f32 %v3286, %v3284
    %v3288 = vxor.u32 %v3287, 2147483648
    %v3289 = vsel %vm3206, %v3288, %v3287
    %v3290 = vsub.s32 4, %v3266
    %v3291 = vsel %vm3206, %v3290, %v3266
    %v3292 = vsel %vm3205, %v198, %v3289
    %v3293 = vsel %vm3205, 0, %v3291
    %v3294 = vcosq.f32.pop %v3292
    %v3295 = vsinq.f32.pop %v3292
    %vm3296 = vweird.f32 %v198
    %v3297 = vand.u32 %v3293, 3
    %vm3298 = vcmp.lt.s32.totalorder %v3297, 2
    %vm3299 = vcmp.eq.s32.totalorder %v3297, 0
    %v3300 = vxor.u32 %v3295, 2147483648
    %v3301 = vsel %vm3299, %v3294, %v3300
    %vm3302 = vcmp.eq.s32.totalorder %v3297, 2
    %v3303 = vxor.u32 %v3294, 2147483648
    %v3304 = vsel %vm3302, %v3303, %v3295
    %v3305 = vsel %vm3298, %v3301, %v3304
    %v3306 = vsel %vm3296, nan, %v3305
    %v3307 = vand.u32 2147483647, %v199
    %vm3308 = vcmp.le.f32.partialorder %v3307, 0.7853982
    %vm3309 = vcmp.lt.s32.totalorder %v199, 0
    %v3310 = vand.u32 %v199, 2139095040
    %v3311 = vshrl.u32 %v3310, 23
    %v3312 = vsub.s32 %v3311, 127
    %v3313 = vand.u32 2147483647, %v199
    %v3314 = vand.u32 %v3313, 8388607
    %v3315 = vor.u32 %v3314, 8388608
    %v3316 = vsub.s32 0, %v3315
    %v3317 = vadd.s32 %v3312, 1
    %vm3318 = vcmp.gt.s32.totalorder %v3317, 0
    %v3319 = vsel %vm3318, %v3317, 0
    %v3320 = vshrl.u32 %v3319, 5
    %v3321 = vand.u32 %v3319, 31
    %v3322 = vsub.s32 32, %v3321
    %v3323 = vshrl.u32 683565275, %v3322
    %v3324 = vshll.u32 683565275, %v3321
    %v3325 = vshrl.u32 2475754826, %v3322
    %v3326 = vor.u32 %v3324, %v3325
    %v3327 = vshll.u32 2475754826, %v3321
    %v3328 = vshrl.u32 2131351028, %v3322
    %v3329 = vor.u32 %v3327, %v3328
    %v3330 = vshll.u32 2131351028, %v3321
    %v3331 = vshrl.u32 2102212464, %v3322
    %v3332 = vor.u32 %v3330, %v3331
    %v3333 = vshll.u32 2102212464, %v3321
    %v3334 = vshrl.u32 920167782, %v3322
    %v3335 = vor.u32 %v3333, %v3334
    %v3336 = vshll.u32 920167782, %v3321
    %v3337 = vshrl.u32 1326507024, %v3322
    %v3338 = vor.u32 %v3336, %v3337
    %vm3339 = vcmp.lt.s32.totalorder %v3320, 1
    %vm3340 = vcmp.lt.s32.totalorder %v3320, 2
    %vm3341 = vcmp.lt.s32.totalorder %v3320, 3
    %vm3342 = vcmp.lt.s32.totalorder %v3320, 4
    %v3343 = vsel %vm3339, %v3323, %v3326
    %v3344 = vsel %vm3342, %v3332, 2102212464
    %v3345 = vsel %vm3341, %v3329, %v3344
    %v3346 = vsel %vm3340, %v3343, %v3345
    %v3347 = vsel %vm3339, %v3326, %v3329
    %v3348 = vsel %vm3342, %v3335, 920167782
    %v3349 = vsel %vm3341, %v3332, %v3348
    %v3350 = vsel %vm3340, %v3347, %v3349
    %v3351 = vsel %vm3339, %v3329, %v3332
    %v3352 = vsel %vm3342, %v3338, 1326507024
    %v3353 = vsel %vm3341, %v3335, %v3352
    %v3354 = vsel %vm3340, %v3351, %v3353
    %v3355 = vshll.u32 %v3315, 8
    %v3356 = vmul.u32.u64.compose %v3355, %v3354
    %v3357 = vextract.low.u32 %v3356
    %v3358 = vextract.high.u32 %v3356
    %v3359 = vmul.u32.u64.compose %v3355, %v3350
    %v3360 = vextract.low.u32 %v3359
    %v3361 = vextract.high.u32 %v3359
    %v3362 = vmul.u32 %v3355, %v3346
    %v3363 = vadd.s32 %v3358, %v3360
    %vm3364 = vc.u32 %v3358, %v3360
    %v3365 = vadd.s32 %v3361, 1
    %v3366 = vsel %vm3364, %v3365, %v3361
    %v3367 = vadd.s32 %v3362, %v3366
    %v3368 = vadd.s32 %v3367, 536870912
    %v3369 = vshrl.u32 %v3368, 30
    %v3370 = vshll.u32 %v3369, 30
    %v3371 = vsub.s32 %v3367, %v3370
    %vm3372 = vcmp.lt.s32.totalorder %v3371, 0
    %v3373 = vsub.s32 0, %v3371
    %v3374 = vsel %vm3372, %v3373, %v3371
    %v3375 = vclz %v3374
    %v3376 = vsub.s32 %v3375, 2
    %vm3377 = vcmp.gt.s32.totalorder 0, %v3376
    %v3378 = vsel %vm3377, 0, %v3376
    %v3379 = vsub.s32 32, %v3378
    %v3380 = vshll.u32 %v3371, %v3378
    %v3381 = vshrl.u32 %v3363, %v3379
    %v3382 = vor.u32 %v3380, %v3381
    %v3383 = vsub.s32 4294967266, %v3378
    %v3384 = vadd.s32 %v3383, 127
    %v3385 = vshll.u32 %v3384, 23
    %v3386 = vor.u32 4788187, %v3385
    %v3387 = vand.u32 2147483647, %v3386
    %v3389 = vcvt.s32.f32 %v3382
    %v3390 = vmul.f32 %v3389, %v3387
    %v3391 = vxor.u32 %v3390, 2147483648
    %v3392 = vsel %vm3309, %v3391, %v3390
    %v3393 = vsub.s32 4, %v3369
    %v3394 = vsel %vm3309, %v3393, %v3369
    %v3395 = vsel %vm3308, %v199, %v3392
    %v3396 = vsel %vm3308, 0, %v3394
    %v3397 = vcosq.f32.pop %v3395
    %v3398 = vsinq.f32.pop %v3395
    %vm3399 = vweird.f32 %v199
    %v3400 = vand.u32 %v3396, 3
    %vm3401 = vcmp.lt.s32.totalorder %v3400, 2
    %vm3402 = vcmp.eq.s32.totalorder %v3400, 0
    %v3403 = vxor.u32 %v3398, 2147483648
    %v3404 = vsel %vm3402, %v3397, %v3403
    %vm3405 = vcmp.eq.s32.totalorder %v3400, 2
    %v3406 = vxor.u32 %v3397, 2147483648
    %v3407 = vsel %vm3405, %v3406, %v3398
    %v3408 = vsel %vm3401, %v3404, %v3407
    %v3409 = vsel %vm3399, nan, %v3408
    %v3410 = vand.u32 2147483647, %v200
    %vm3411 = vcmp.le.f32.partialorder %v3410, 0.7853982
    %vm3412 = vcmp.lt.s32.totalorder %v200, 0
    %v3413 = vand.u32 %v200, 2139095040
    %v3414 = vshrl.u32 %v3413, 23
    %v3415 = vsub.s32 %v3414, 127
    %v3416 = vand.u32 2147483647, %v200
    %v3417 = vand.u32 %v3416, 8388607
    %v3418 = vor.u32 %v3417, 8388608
    %v3419 = vsub.s32 0, %v3418
    %v3420 = vadd.s32 %v3415, 1
    %vm3421 = vcmp.gt.s32.totalorder %v3420, 0
    %v3422 = vsel %vm3421, %v3420, 0
    %v3423 = vshrl.u32 %v3422, 5
    %v3424 = vand.u32 %v3422, 31
    %v3425 = vsub.s32 32, %v3424
    %v3426 = vshrl.u32 683565275, %v3425
    %v3427 = vshll.u32 683565275, %v3424
    %v3428 = vshrl.u32 2475754826, %v3425
    %v3429 = vor.u32 %v3427, %v3428
    %v3430 = vshll.u32 2475754826, %v3424
    %v3431 = vshrl.u32 2131351028, %v3425
    %v3432 = vor.u32 %v3430, %v3431
    %v3433 = vshll.u32 2131351028, %v3424
    %v3434 = vshrl.u32 2102212464, %v3425
    %v3435 = vor.u32 %v3433, %v3434
    %v3436 = vshll.u32 2102212464, %v3424
    %v3437 = vshrl.u32 920167782, %v3425
    %v3438 = vor.u32 %v3436, %v3437
    %v3439 = vshll.u32 920167782, %v3424
    %v3440 = vshrl.u32 1326507024, %v3425
    %v3441 = vor.u32 %v3439, %v3440
    %vm3442 = vcmp.lt.s32.totalorder %v3423, 1
    %vm3443 = vcmp.lt.s32.totalorder %v3423, 2
    %vm3444 = vcmp.lt.s32.totalorder %v3423, 3
    %vm3445 = vcmp.lt.s32.totalorder %v3423, 4
    %v3446 = vsel %vm3442, %v3426, %v3429
    %v3447 = vsel %vm3445, %v3435, 2102212464
    %v3448 = vsel %vm3444, %v3432, %v3447
    %v3449 = vsel %vm3443, %v3446, %v3448
    %v3450 = vsel %vm3442, %v3429, %v3432
    %v3451 = vsel %vm3445, %v3438, 920167782
    %v3452 = vsel %vm3444, %v3435, %v3451
    %v3453 = vsel %vm3443, %v3450, %v3452
    %v3454 = vsel %vm3442, %v3432, %v3435
    %v3455 = vsel %vm3445, %v3441, 1326507024
    %v3456 = vsel %vm3444, %v3438, %v3455
    %v3457 = vsel %vm3443, %v3454, %v3456
    %v3458 = vshll.u32 %v3418, 8
    %v3459 = vmul.u32.u64.compose %v3458, %v3457
    %v3460 = vextract.low.u32 %v3459
    %v3461 = vextract.high.u32 %v3459
    %v3462 = vmul.u32.u64.compose %v3458, %v3453
    %v3463 = vextract.low.u32 %v3462
    %v3464 = vextract.high.u32 %v3462
    %v3465 = vmul.u32 %v3458, %v3449
    %v3466 = vadd.s32 %v3461, %v3463
    %vm3467 = vc.u32 %v3461, %v3463
    %v3468 = vadd.s32 %v3464, 1
    %v3469 = vsel %vm3467, %v3468, %v3464
    %v3470 = vadd.s32 %v3465, %v3469
    %v3471 = vadd.s32 %v3470, 536870912
    %v3472 = vshrl.u32 %v3471, 30
    %v3473 = vshll.u32 %v3472, 30
    %v3474 = vsub.s32 %v3470, %v3473
    %vm3475 = vcmp.lt.s32.totalorder %v3474, 0
    %v3476 = vsub.s32 0, %v3474
    %v3477 = vsel %vm3475, %v3476, %v3474
    %v3478 = vclz %v3477
    %v3479 = vsub.s32 %v3478, 2
    %vm3480 = vcmp.gt.s32.totalorder 0, %v3479
    %v3481 = vsel %vm3480, 0, %v3479
    %v3482 = vsub.s32 32, %v3481
    %v3483 = vshll.u32 %v3474, %v3481
    %v3484 = vshrl.u32 %v3466, %v3482
    %v3485 = vor.u32 %v3483, %v3484
    %v3486 = vsub.s32 4294967266, %v3481
    %v3487 = vadd.s32 %v3486, 127
    %v3488 = vshll.u32 %v3487, 23
    %v3489 = vor.u32 4788187, %v3488
    %v3490 = vand.u32 2147483647, %v3489
    %v3492 = vcvt.s32.f32 %v3485
    %v3493 = vmul.f32 %v3492, %v3490
    %v3494 = vxor.u32 %v3493, 2147483648
    %v3495 = vsel %vm3412, %v3494, %v3493
    %v3496 = vsub.s32 4, %v3472
    %v3497 = vsel %vm3412, %v3496, %v3472
    %v3498 = vsel %vm3411, %v200, %v3495
    %v3499 = vsel %vm3411, 0, %v3497
    %v3500 = vcosq.f32.pop %v3498
    %v3501 = vsinq.f32.pop %v3498
    %vm3502 = vweird.f32 %v200
    %v3503 = vand.u32 %v3499, 3
    %vm3504 = vcmp.lt.s32.totalorder %v3503, 2
    %vm3505 = vcmp.eq.s32.totalorder %v3503, 0
    %v3506 = vxor.u32 %v3501, 2147483648
    %v3507 = vsel %vm3505, %v3500, %v3506
    %vm3508 = vcmp.eq.s32.totalorder %v3503, 2
    %v3509 = vxor.u32 %v3500, 2147483648
    %v3510 = vsel %vm3508, %v3509, %v3501
    %v3511 = vsel %vm3504, %v3507, %v3510
    %v3512 = vsel %vm3502, nan, %v3511
    %v3513 = vsel %vm77, %v304, %v1967
    %v3514 = vsel %vm78, %v408, %v2070
    %v3515 = vsel %vm79, %v512, %v2173
    %v3516 = vsel %vm80, %v616, %v2276
    %v3517 = vsel %vm81, %v720, %v2379
    %v3518 = vsel %vm82, %v824, %v2482
    %v3519 = vsel %vm83, %v928, %v2585
    %v3520 = vsel %vm84, %v1032, %v2688
    %v3521 = vsel %vm85, %v1136, %v2791
    %v3522 = vsel %vm86, %v1240, %v2894
    %v3523 = vsel %vm87, %v1344, %v2997
    %v3524 = vsel %vm88, %v1448, %v3100
    %v3525 = vsel %vm89, %v1552, %v3203
    %v3526 = vsel %vm90, %v1656, %v3306
    %v3527 = vsel %vm91, %v1760, %v3409
    %v3528 = vsel %vm92, %v1864, %v3512
    %v3529 = vld [vmem:[%s4] sm:$0xf]
    %v3530 = vld [vmem:[%s4 + $0x4] sm:$0xf]
    %v3531 = vld [vmem:[%s4 + $0x8] sm:$0xf]
    %v3532 = vld [vmem:[%s4 + $0xc] sm:$0xf]
    %v3533 = vld [vmem:[%s4 + $0x10] sm:$0xf]
    %v3534 = vld [vmem:[%s4 + $0x14] sm:$0xf]
    %v3535 = vld [vmem:[%s4 + $0x18] sm:$0xf]
    %v3536 = vld [vmem:[%s4 + $0x1c] sm:$0xf]
    %v3537 = vld [vmem:[%s4 + $0x20] sm:$0xf]
    %v3538 = vld [vmem:[%s4 + $0x24] sm:$0xf]
    %v3539 = vld [vmem:[%s4 + $0x28] sm:$0xf]
    %v3540 = vld [vmem:[%s4 + $0x2c] sm:$0xf]
    %v3541 = vld [vmem:[%s4 + $0x30] sm:$0xf]
    %v3542 = vld [vmem:[%s4 + $0x34] sm:$0xf]
    %v3543 = vld [vmem:[%s4 + $0x38] sm:$0xf]
    %v3544 = vld [vmem:[%s4 + $0x3c] sm:$0xf]
    %v3545 = vpack.c.bf16 %v3514, %v3513
    %v3546 = vpack.c.bf16 %v3516, %v3515
    %v3547 = vpack.c.bf16 %v3518, %v3517
    %v3548 = vpack.c.bf16 %v3520, %v3519
    %v3549 = vpack.c.bf16 %v3522, %v3521
    %v3550 = vpack.c.bf16 %v3524, %v3523
    %v3551 = vpack.c.bf16 %v3526, %v3525
    %v3552 = vpack.c.bf16 %v3528, %v3527
    %v3553 = vld [vmem:[%s5] sm:$0xff]
    %v3554 = vld [vmem:[%s5 + $0x8] sm:$0xff]
    %v3555 = vld [vmem:[%s5 + $0x10] sm:$0xff]
    %v3556 = vld [vmem:[%s5 + $0x18] sm:$0xff]
    %v3557 = vld [vmem:[%s5 + $0x20] sm:$0xff]
    %v3558 = vld [vmem:[%s5 + $0x28] sm:$0xff]
    %v3559 = vld [vmem:[%s5 + $0x30] sm:$0xff]
    %v3560 = vld [vmem:[%s5 + $0x38] sm:$0xff]
    %v3561 = vld [vmem:[%s5 + $0x40] sm:$0xff]
    %v3562 = vld [vmem:[%s5 + $0x48] sm:$0xff]
    %v3563 = vld [vmem:[%s5 + $0x50] sm:$0xff]
    %v3564 = vld [vmem:[%s5 + $0x58] sm:$0xff]
    %v3565 = vld [vmem:[%s5 + $0x60] sm:$0xff]
    %v3566 = vld [vmem:[%s5 + $0x68] sm:$0xff]
    %v3567 = vld [vmem:[%s5 + $0x70] sm:$0xff]
    %v3568 = vld [vmem:[%s5 + $0x78] sm:$0xff]
    %3570 = vset.pattern.permute.xlu0 0
    %3571 = vperm.xlu0 %3570, %v3553
    %v3572 = vpop.permute.xlu0 %3571
    %3575 = vset.pattern.permute.xlu0 0
    %3576 = vperm.xlu0 %3575, %v3554
    %v3577 = vpop.permute.xlu0 %3576
    %3580 = vset.pattern.permute.xlu0 0
    %3581 = vperm.xlu0 %3580, %v3555
    %v3582 = vpop.permute.xlu0 %3581
    %3585 = vset.pattern.permute.xlu0 0
    %3586 = vperm.xlu0 %3585, %v3556
    %v3587 = vpop.permute.xlu0 %3586
    %3590 = vset.pattern.permute.xlu0 0
    %3591 = vperm.xlu0 %3590, %v3557
    %v3592 = vpop.permute.xlu0 %3591
    %3595 = vset.pattern.permute.xlu0 0
    %3596 = vperm.xlu0 %3595, %v3558
    %v3597 = vpop.permute.xlu0 %3596
    %3600 = vset.pattern.permute.xlu0 0
    %3601 = vperm.xlu0 %3600, %v3559
    %v3602 = vpop.permute.xlu0 %3601
    %3605 = vset.pattern.permute.xlu0 0
    %3606 = vperm.xlu0 %3605, %v3560
    %v3607 = vpop.permute.xlu0 %3606
    %3610 = vset.pattern.permute.xlu0 0
    %3611 = vperm.xlu0 %3610, %v3561
    %v3612 = vpop.permute.xlu0 %3611
    %3615 = vset.pattern.permute.xlu0 0
    %3616 = vperm.xlu0 %3615, %v3562
    %v3617 = vpop.permute.xlu0 %3616
    %3620 = vset.pattern.permute.xlu0 0
    %3621 = vperm.xlu0 %3620, %v3563
    %v3622 = vpop.permute.xlu0 %3621
    %3625 = vset.pattern.permute.xlu0 0
    %3626 = vperm.xlu0 %3625, %v3564
    %v3627 = vpop.permute.xlu0 %3626
    %3630 = vset.pattern.permute.xlu0 0
    %3631 = vperm.xlu0 %3630, %v3565
    %v3632 = vpop.permute.xlu0 %3631
    %3635 = vset.pattern.permute.xlu0 0
    %3636 = vperm.xlu0 %3635, %v3566
    %v3637 = vpop.permute.xlu0 %3636
    %3640 = vset.pattern.permute.xlu0 0
    %3641 = vperm.xlu0 %3640, %v3567
    %v3642 = vpop.permute.xlu0 %3641
    %3645 = vset.pattern.permute.xlu0 0
    %3646 = vperm.xlu0 %3645, %v3568
    %v3647 = vpop.permute.xlu0 %3646
    %v3665 = vunpack.c.l.b16 %v3529
    %v3666 = vunpack.c.l.b16 %v3530
    %v3667 = vunpack.c.l.b16 %v3531
    %v3668 = vunpack.c.l.b16 %v3532
    %v3669 = vunpack.c.l.b16 %v3533
    %v3670 = vunpack.c.l.b16 %v3534
    %v3671 = vunpack.c.l.b16 %v3535
    %v3672 = vunpack.c.l.b16 %v3536
    %v3673 = vunpack.c.l.b16 %v3537
    %v3674 = vunpack.c.l.b16 %v3538
    %v3675 = vunpack.c.l.b16 %v3539
    %v3676 = vunpack.c.l.b16 %v3540
    %v3677 = vunpack.c.l.b16 %v3541
    %v3678 = vunpack.c.l.b16 %v3542
    %v3679 = vunpack.c.l.b16 %v3543
    %v3680 = vunpack.c.l.b16 %v3544
    %v3681 = vpack.c.b16 %v3666, %v3665
    %v3682 = vpack.c.b16 %v3668, %v3667
    %v3683 = vpack.c.b16 %v3670, %v3669
    %v3684 = vpack.c.b16 %v3672, %v3671
    %v3685 = vpack.c.b16 %v3674, %v3673
    %v3686 = vpack.c.b16 %v3676, %v3675
    %v3687 = vpack.c.b16 %v3678, %v3677
    %v3688 = vpack.c.b16 %v3680, %v3679
    %3697 = vmatprep.subr.bf16.mxu0 0
    %3698 = vmatpush1.bf16.msra.mxu0 %v3545
    %3699 = vmatprep.subr.bf16.mxu0 0
    %3700 = vmatpush1.bf16.msra.mxu0 %v3546
    %3701 = vmatprep.subr.bf16.mxu0 0
    %3702 = vmatpush1.bf16.msra.mxu0 %v3547
    %3703 = vmatprep.subr.bf16.mxu0 0
    %3704 = vmatpush1.bf16.msra.mxu0 %v3548
    %3705 = vmatprep.subr.bf16.mxu0 0
    %3706 = vmatpush1.bf16.msra.mxu0 %v3549
    %3707 = vmatprep.subr.bf16.mxu0 0
    %3708 = vmatpush1.bf16.msra.mxu0 %v3550
    %3709 = vmatprep.subr.bf16.mxu0 0
    %3710 = vmatpush1.bf16.msra.mxu0 %v3551
    %3711 = vmatprep.subr.bf16.mxu0 0
    %3712 = vmatpush1.bf16.msra.mxu0 %v3552
    %3713 = vmatprep.subr.bf16.mxu0 0
    %3714 = vmatpush1.bf16.msra.mxu0 0
    %3715 = vmatprep.subr.bf16.mxu0 0
    %3716 = vmatpush1.bf16.msra.mxu0 0
    %3717 = vmatprep.subr.bf16.mxu0 0
    %3718 = vmatpush1.bf16.msra.mxu0 0
    %3719 = vmatprep.subr.bf16.mxu0 0
    %3720 = vmatpush1.bf16.msra.mxu0 0
    %3721 = vmatprep.subr.bf16.mxu0 0
    %3722 = vmatpush1.bf16.msra.mxu0 0
    %3723 = vmatprep.subr.bf16.mxu0 0
    %3724 = vmatpush1.bf16.msra.mxu0 0
    %3725 = vmatprep.subr.bf16.mxu0 0
    %3726 = vmatpush1.bf16.msra.mxu0 0
    %3727 = vmatprep.subr.bf16.mxu0 0
    %3728 = vmatpush1.bf16.msra.mxu0 0
    %3729 = vmatprep.mubr.bf16.mxu0 0
    %3730 = vmatmul.mubr.bf16.gmra.mrb[0].mxu0 %v3681
    %v3731 = vpop.f32.mrb[0].mxu0
    %v3732 = vadd.f32 %v3572, %v3731
    %v3733 = vpop.f32.mrb[0].mxu0
    %v3734 = vpop.f32.mrb[0].mxu0
    %v3735 = vadd.f32 %v3577, %v3734
    %v3736 = vpop.f32.mrb[0].mxu0
    %3737 = vmatprep.mubr.bf16.mxu0 0
    %3738 = vmatmul.mubr.bf16.gmra.mrb[0].mxu0 %v3682
    %v3739 = vpop.f32.mrb[0].mxu0
    %v3740 = vadd.f32 %v3582, %v3739
    %v3741 = vpop.f32.mrb[0].mxu0
    %v3742 = vpop.f32.mrb[0].mxu0
    %v3743 = vadd.f32 %v3587, %v3742
    %v3744 = vpop.f32.mrb[0].mxu0
    %3745 = vmatprep.mubr.bf16.mxu0 0
    %3746 = vmatmul.mubr.bf16.gmra.mrb[0].mxu0 %v3683
    %v3747 = vpop.f32.mrb[0].mxu0
    %v3748 = vadd.f32 %v3592, %v3747
    %v3749 = vpop.f32.mrb[0].mxu0
    %v3750 = vpop.f32.mrb[0].mxu0
    %v3751 = vadd.f32 %v3597, %v3750
    %v3752 = vpop.f32.mrb[0].mxu0
    %3753 = vmatprep.mubr.bf16.mxu0 0
    %3754 = vmatmul.mubr.bf16.gmra.mrb[0].mxu0 %v3684
    %v3755 = vpop.f32.mrb[0].mxu0
    %v3756 = vadd.f32 %v3602, %v3755
    %v3757 = vpop.f32.mrb[0].mxu0
    %v3758 = vpop.f32.mrb[0].mxu0
    %v3759 = vadd.f32 %v3607, %v3758
    %v3760 = vpop.f32.mrb[0].mxu0
    %3761 = vmatprep.mubr.bf16.mxu0 0
    %3762 = vmatmul.mubr.bf16.gmra.mrb[0].mxu0 %v3685
    %v3763 = vpop.f32.mrb[0].mxu0
    %v3764 = vadd.f32 %v3612, %v3763
    %v3765 = vpop.f32.mrb[0].mxu0
    %v3766 = vpop.f32.mrb[0].mxu0
    %v3767 = vadd.f32 %v3617, %v3766
    %v3768 = vpop.f32.mrb[0].mxu0
    %3769 = vmatprep.mubr.bf16.mxu0 0
    %3770 = vmatmul.mubr.bf16.gmra.mrb[0].mxu0 %v3686
    %v3771 = vpop.f32.mrb[0].mxu0
    %v3772 = vadd.f32 %v3622, %v3771
    %v3773 = vpop.f32.mrb[0].mxu0
    %v3774 = vpop.f32.mrb[0].mxu0
    %v3775 = vadd.f32 %v3627, %v3774
    %v3776 = vpop.f32.mrb[0].mxu0
    %3777 = vmatprep.mubr.bf16.mxu0 0
    %3778 = vmatmul.mubr.bf16.gmra.mrb[0].mxu0 %v3687
    %v3779 = vpop.f32.mrb[0].mxu0
    %v3780 = vadd.f32 %v3632, %v3779
    %v3781 = vpop.f32.mrb[0].mxu0
    %v3782 = vpop.f32.mrb[0].mxu0
    %v3783 = vadd.f32 %v3637, %v3782
    %v3784 = vpop.f32.mrb[0].mxu0
    %3785 = vmatprep.mubr.bf16.mxu0 0
    %3786 = vmatmul.mubr.bf16.gmra.mrb[0].mxu0 %v3688
    %v3787 = vpop.f32.mrb[0].mxu0
    %v3788 = vadd.f32 %v3642, %v3787
    %v3789 = vpop.f32.mrb[0].mxu0
    %v3790 = vpop.f32.mrb[0].mxu0
    %v3791 = vadd.f32 %v3647, %v3790
    %v3792 = vpop.f32.mrb[0].mxu0
    %3793 = vdwg.mxu0
    %v3794 = vld [vmem:[%s2] sm:$0xf]
    %v3795 = vld [vmem:[%s2 + $0x4] sm:$0xf]
    %v3796 = vld [vmem:[%s2 + $0x8] sm:$0xf]
    %v3797 = vld [vmem:[%s2 + $0xc] sm:$0xf]
    %v3798 = vld [vmem:[%s2 + $0x10] sm:$0xf]
    %v3799 = vld [vmem:[%s2 + $0x14] sm:$0xf]
    %v3800 = vld [vmem:[%s2 + $0x18] sm:$0xf]
    %v3801 = vld [vmem:[%s2 + $0x1c] sm:$0xf]
    %v3802 = vld [vmem:[%s2 + $0x20] sm:$0xf]
    %v3803 = vld [vmem:[%s2 + $0x24] sm:$0xf]
    %v3804 = vld [vmem:[%s2 + $0x28] sm:$0xf]
    %v3805 = vld [vmem:[%s2 + $0x2c] sm:$0xf]
    %v3806 = vld [vmem:[%s2 + $0x30] sm:$0xf]
    %v3807 = vld [vmem:[%s2 + $0x34] sm:$0xf]
    %v3808 = vld [vmem:[%s2 + $0x38] sm:$0xf]
    %v3809 = vld [vmem:[%s2 + $0x3c] sm:$0xf]
    %v3810 = vld [vmem:[%s3] sm:$0xf]
    %v3811 = vld [vmem:[%s3 + $0x4] sm:$0xf]
    %v3812 = vld [vmem:[%s3 + $0x8] sm:$0xf]
    %v3813 = vld [vmem:[%s3 + $0xc] sm:$0xf]
    %v3814 = vld [vmem:[%s3 + $0x10] sm:$0xf]
    %v3815 = vld [vmem:[%s3 + $0x14] sm:$0xf]
    %v3816 = vld [vmem:[%s3 + $0x18] sm:$0xf]
    %v3817 = vld [vmem:[%s3 + $0x1c] sm:$0xf]
    %v3818 = vld [vmem:[%s3 + $0x20] sm:$0xf]
    %v3819 = vld [vmem:[%s3 + $0x24] sm:$0xf]
    %v3820 = vld [vmem:[%s3 + $0x28] sm:$0xf]
    %v3821 = vld [vmem:[%s3 + $0x2c] sm:$0xf]
    %v3822 = vld [vmem:[%s3 + $0x30] sm:$0xf]
    %v3823 = vld [vmem:[%s3 + $0x34] sm:$0xf]
    %v3824 = vld [vmem:[%s3 + $0x38] sm:$0xf]
    %v3825 = vld [vmem:[%s3 + $0x3c] sm:$0xf]
    %v3826 = vld [vmem:[%s6] sm:$0xf]
    %v3827 = vld [vmem:[%s6 + $0x4] sm:$0xf]
    %v3828 = vld [vmem:[%s6 + $0x8] sm:$0xf]
    %v3829 = vld [vmem:[%s6 + $0xc] sm:$0xf]
    %v3830 = vld [vmem:[%s1] sm:$0xff]
    %v3831 = vld [vmem:[%s1 + $0x8] sm:$0xff]
    %v3832 = vld [vmem:[%s1 + $0x10] sm:$0xff]
    %v3833 = vld [vmem:[%s1 + $0x18] sm:$0xff]
    %v3834 = vld [vmem:[%s1 + $0x20] sm:$0xff]
    %v3835 = vld [vmem:[%s1 + $0x28] sm:$0xff]
    %v3836 = vld [vmem:[%s1 + $0x30] sm:$0xff]
    %v3837 = vld [vmem:[%s1 + $0x38] sm:$0xff]
    %v3838 = vpack.c.bf16 %v3831, %v3830
    %v3839 = vpack.c.bf16 %v3833, %v3832
    %v3840 = vpack.c.bf16 %v3835, %v3834
    %v3841 = vpack.c.bf16 %v3837, %v3836
    %v3858 = vunpack.c.l.b16 %v3794
    %v3859 = vunpack.c.l.b16 %v3795
    %v3860 = vunpack.c.l.b16 %v3796
    %v3861 = vunpack.c.l.b16 %v3797
    %v3862 = vunpack.c.l.b16 %v3798
    %v3863 = vunpack.c.l.b16 %v3799
    %v3864 = vunpack.c.l.b16 %v3800
    %v3865 = vunpack.c.l.b16 %v3801
    %v3866 = vunpack.c.l.b16 %v3802
    %v3867 = vunpack.c.l.b16 %v3803
    %v3868 = vunpack.c.l.b16 %v3804
    %v3869 = vunpack.c.l.b16 %v3805
    %v3870 = vunpack.c.l.b16 %v3806
    %v3871 = vunpack.c.l.b16 %v3807
    %v3872 = vunpack.c.l.b16 %v3808
    %v3873 = vunpack.c.l.b16 %v3809
    %v3874 = vpack.c.b16 %v3859, %v3858
    %v3875 = vpack.c.b16 %v3861, %v3860
    %v3876 = vpack.c.b16 %v3863, %v3862
    %v3877 = vpack.c.b16 %v3865, %v3864
    %v3878 = vpack.c.b16 %v3867, %v3866
    %v3879 = vpack.c.b16 %v3869, %v3868
    %v3880 = vpack.c.b16 %v3871, %v3870
    %v3881 = vpack.c.b16 %v3873, %v3872
    %3890 = vmatprep.subr.bf16.mxu0 0
    %3891 = vmatpush1.bf16.msra.mxu0 %v3874
    %3892 = vmatprep.subr.bf16.mxu0 0
    %3893 = vmatpush1.bf16.msra.mxu0 %v3875
    %3894 = vmatprep.subr.bf16.mxu0 0
    %3895 = vmatpush1.bf16.msra.mxu0 %v3876
    %3896 = vmatprep.subr.bf16.mxu0 0
    %3897 = vmatpush1.bf16.msra.mxu0 %v3877
    %3898 = vmatprep.subr.bf16.mxu0 0
    %3899 = vmatpush1.bf16.msra.mxu0 %v3878
    %3900 = vmatprep.subr.bf16.mxu0 0
    %3901 = vmatpush1.bf16.msra.mxu0 %v3879
    %3902 = vmatprep.subr.bf16.mxu0 0
    %3903 = vmatpush1.bf16.msra.mxu0 %v3880
    %3904 = vmatprep.subr.bf16.mxu0 0
    %3905 = vmatpush1.bf16.msra.mxu0 %v3881
    %3906 = vmatprep.subr.bf16.mxu0 0
    %3907 = vmatpush1.bf16.msra.mxu0 0
    %3908 = vmatprep.subr.bf16.mxu0 0
    %3909 = vmatpush1.bf16.msra.mxu0 0
    %3910 = vmatprep.subr.bf16.mxu0 0
    %3911 = vmatpush1.bf16.msra.mxu0 0
    %3912 = vmatprep.subr.bf16.mxu0 0
    %3913 = vmatpush1.bf16.msra.mxu0 0
    %3914 = vmatprep.subr.bf16.mxu0 0
    %3915 = vmatpush1.bf16.msra.mxu0 0
    %3916 = vmatprep.subr.bf16.mxu0 0
    %3917 = vmatpush1.bf16.msra.mxu0 0
    %3918 = vmatprep.subr.bf16.mxu0 0
    %3919 = vmatpush1.bf16.msra.mxu0 0
    %3920 = vmatprep.subr.bf16.mxu0 0
    %3921 = vmatpush1.bf16.msra.mxu0 0
    %3922 = vmatprep.mubr.bf16.mxu0 0
    %3923 = vmatmul.mubr.bf16.gmra.mrb[0].mxu0 %v3838
    %v3924 = vpop.f32.mrb[0].mxu0
    %v3925 = vadd.f32 0.0, %v3924
    %v3926 = vpop.f32.mrb[0].mxu0
    %v3927 = vpop.f32.mrb[0].mxu0
    %v3928 = vadd.f32 0.0, %v3927
    %v3929 = vpop.f32.mrb[0].mxu0
    %3930 = vmatprep.mubr.bf16.mxu0 0
    %3931 = vmatmul.mubr.bf16.gmra.mrb[0].mxu0 %v3839
    %v3932 = vpop.f32.mrb[0].mxu0
    %v3933 = vadd.f32 0.0, %v3932
    %v3934 = vpop.f32.mrb[0].mxu0
    %v3935 = vpop.f32.mrb[0].mxu0
    %v3936 = vadd.f32 0.0, %v3935
    %v3937 = vpop.f32.mrb[0].mxu0
    %3938 = vmatprep.mubr.bf16.mxu0 0
    %3939 = vmatmul.mubr.bf16.gmra.mrb[0].mxu0 %v3840
    %v3940 = vpop.f32.mrb[0].mxu0
    %v3941 = vadd.f32 0.0, %v3940
    %v3942 = vpop.f32.mrb[0].mxu0
    %v3943 = vpop.f32.mrb[0].mxu0
    %v3944 = vadd.f32 0.0, %v3943
    %v3945 = vpop.f32.mrb[0].mxu0
    %3946 = vmatprep.mubr.bf16.mxu0 0
    %3947 = vmatmul.mubr.bf16.gmra.mrb[0].mxu0 %v3841
    %v3948 = vpop.f32.mrb[0].mxu0
    %v3949 = vadd.f32 0.0, %v3948
    %v3950 = vpop.f32.mrb[0].mxu0
    %v3951 = vpop.f32.mrb[0].mxu0
    %v3952 = vadd.f32 0.0, %v3951
    %v3953 = vpop.f32.mrb[0].mxu0
    %3954 = vdwg.mxu0
    %v3955 = vpack.c.bf16 %v3928, %v3925
    %v3956 = vpack.c.bf16 %v3936, %v3933
    %3958 = vset.pattern.permute.xlu0 0
    %3959 = vperm.xlu0 %3958, %v3732
    %v3960 = vpop.permute.xlu0 %3959
    %3963 = vset.pattern.permute.xlu0 0
    %3964 = vperm.xlu0 %3963, %v3735
    %v3965 = vpop.permute.xlu0 %3964
    %3968 = vset.pattern.permute.xlu0 0
    %3969 = vperm.xlu0 %3968, %v3740
    %v3970 = vpop.permute.xlu0 %3969
    %3973 = vset.pattern.permute.xlu0 0
    %3974 = vperm.xlu0 %3973, %v3743
    %v3975 = vpop.permute.xlu0 %3974
    %3978 = vset.pattern.permute.xlu0 0
    %3979 = vperm.xlu0 %3978, %v3748
    %v3980 = vpop.permute.xlu0 %3979
    %3983 = vset.pattern.permute.xlu0 0
    %3984 = vperm.xlu0 %3983, %v3751
    %v3985 = vpop.permute.xlu0 %3984
    %3988 = vset.pattern.permute.xlu0 0
    %3989 = vperm.xlu0 %3988, %v3756
    %v3990 = vpop.permute.xlu0 %3989
    %3993 = vset.pattern.permute.xlu0 0
    %3994 = vperm.xlu0 %3993, %v3759
    %v3995 = vpop.permute.xlu0 %3994
    %3998 = vset.pattern.permute.xlu0 0
    %3999 = vperm.xlu0 %3998, %v3764
    %v4000 = vpop.permute.xlu0 %3999
    %4003 = vset.pattern.permute.xlu0 0
    %4004 = vperm.xlu0 %4003, %v3767
    %v4005 = vpop.permute.xlu0 %4004
    %4008 = vset.pattern.permute.xlu0 0
    %4009 = vperm.xlu0 %4008, %v3772
    %v4010 = vpop.permute.xlu0 %4009
    %4013 = vset.pattern.permute.xlu0 0
    %4014 = vperm.xlu0 %4013, %v3775
    %v4015 = vpop.permute.xlu0 %4014
    %4018 = vset.pattern.permute.xlu0 0
    %4019 = vperm.xlu0 %4018, %v3780
    %v4020 = vpop.permute.xlu0 %4019
    %4023 = vset.pattern.permute.xlu0 0
    %4024 = vperm.xlu0 %4023, %v3783
    %v4025 = vpop.permute.xlu0 %4024
    %4028 = vset.pattern.permute.xlu0 0
    %4029 = vperm.xlu0 %4028, %v3788
    %v4030 = vpop.permute.xlu0 %4029
    %4033 = vset.pattern.permute.xlu0 0
    %4034 = vperm.xlu0 %4033, %v3791
    %v4035 = vpop.permute.xlu0 %4034
    %v4053 = vunpack.c.l.b16 %v3810
    %v4054 = vunpack.c.l.b16 %v3811
    %v4055 = vunpack.c.l.b16 %v3812
    %v4056 = vunpack.c.l.b16 %v3813
    %v4057 = vunpack.c.l.b16 %v3814
    %v4058 = vunpack.c.l.b16 %v3815
    %v4059 = vunpack.c.l.b16 %v3816
    %v4060 = vunpack.c.l.b16 %v3817
    %v4061 = vunpack.c.l.b16 %v3818
    %v4062 = vunpack.c.l.b16 %v3819
    %v4063 = vunpack.c.l.b16 %v3820
    %v4064 = vunpack.c.l.b16 %v3821
    %v4065 = vunpack.c.l.b16 %v3822
    %v4066 = vunpack.c.l.b16 %v3823
    %v4067 = vunpack.c.l.b16 %v3824
    %v4068 = vunpack.c.l.b16 %v3825
    %v4069 = vpack.c.b16 %v4054, %v4053
    %v4070 = vpack.c.b16 %v4056, %v4055
    %v4071 = vpack.c.b16 %v4058, %v4057
    %v4072 = vpack.c.b16 %v4060, %v4059
    %v4073 = vpack.c.b16 %v4062, %v4061
    %v4074 = vpack.c.b16 %v4064, %v4063
    %v4075 = vpack.c.b16 %v4066, %v4065
    %v4076 = vpack.c.b16 %v4068, %v4067
    %vm4077 = vcmask 261120
    %v4079 = vsel %vm4077, %v4069, 0
    %v4082 = vsel %vm4077, %v4070, 0
    %v4085 = vsel %vm4077, %v4071, 0
    %v4088 = vsel %vm4077, %v4072, 0
    %v4091 = vsel %vm4077, %v4073, 0
    %v4094 = vsel %vm4077, %v4074, 0
    %v4097 = vsel %vm4077, %v4075, 0
    %v4100 = vsel %vm4077, %v4076, 0
    %4102 = vmatprep.subr.bf16.mxu0 0
    %4103 = vmatpush1.bf16.msra.mxu0 %v3955
    %4104 = vmatprep.subr.bf16.mxu0 0
    %4105 = vmatpush1.bf16.msra.mxu0 %v3956
    %4106 = vmatprep.subr.bf16.mxu0 0
    %4107 = vmatpush1.bf16.msra.mxu0 0
    %4108 = vmatprep.subr.bf16.mxu0 0
    %4109 = vmatpush1.bf16.msra.mxu0 0
    %4110 = vmatprep.subr.bf16.mxu0 0
    %4111 = vmatpush1.bf16.msra.mxu0 0
    %4112 = vmatprep.subr.bf16.mxu0 0
    %4113 = vmatpush1.bf16.msra.mxu0 0
    %4114 = vmatprep.subr.bf16.mxu0 0
    %4115 = vmatpush1.bf16.msra.mxu0 0
    %4116 = vmatprep.subr.bf16.mxu0 0
    %4117 = vmatpush1.bf16.msra.mxu0 0
    %4118 = vmatprep.subr.bf16.mxu0 0
    %4119 = vmatpush1.bf16.msra.mxu0 0
    %4120 = vmatprep.subr.bf16.mxu0 0
    %4121 = vmatpush1.bf16.msra.mxu0 0
    %4122 = vmatprep.subr.bf16.mxu0 0
    %4123 = vmatpush1.bf16.msra.mxu0 0
    %4124 = vmatprep.subr.bf16.mxu0 0
    %4125 = vmatpush1.bf16.msra.mxu0 0
    %4126 = vmatprep.subr.bf16.mxu0 0
    %4127 = vmatpush1.bf16.msra.mxu0 0
    %4128 = vmatprep.subr.bf16.mxu0 0
    %4129 = vmatpush1.bf16.msra.mxu0 0
    %4130 = vmatprep.subr.bf16.mxu0 0
    %4131 = vmatpush1.bf16.msra.mxu0 0
    %4132 = vmatprep.subr.bf16.mxu0 0
    %4133 = vmatpush1.bf16.msra.mxu0 0
    %4134 = vmatprep.mubr.bf16.mxu0 0
    %4135 = vmatmul.mubr.bf16.gmra.mrb[0].mxu0 %v4079
    %v4136 = vpop.f32.mrb[0].mxu0
    %v4137 = vadd.f32 %v3960, %v4136
    %v4138 = vpop.f32.mrb[0].mxu0
    %v4139 = vpop.f32.mrb[0].mxu0
    %v4140 = vadd.f32 %v3965, %v4139
    %v4141 = vpop.f32.mrb[0].mxu0
    %4142 = vmatprep.mubr.bf16.mxu0 0
    %4143 = vmatmul.mubr.bf16.gmra.mrb[0].mxu0 %v4082
    %v4144 = vpop.f32.mrb[0].mxu0
    %v4145 = vadd.f32 %v3970, %v4144
    %v4146 = vpop.f32.mrb[0].mxu0
    %v4147 = vpop.f32.mrb[0].mxu0
    %v4148 = vadd.f32 %v3975, %v4147
    %v4149 = vpop.f32.mrb[0].mxu0
    %4150 = vmatprep.mubr.bf16.mxu0 0
    %4151 = vmatmul.mubr.bf16.gmra.mrb[0].mxu0 %v4085
    %v4152 = vpop.f32.mrb[0].mxu0
    %v4153 = vadd.f32 %v3980, %v4152
    %v4154 = vpop.f32.mrb[0].mxu0
    %v4155 = vpop.f32.mrb[0].mxu0
    %v4156 = vadd.f32 %v3985, %v4155
    %v4157 = vpop.f32.mrb[0].mxu0
    %4158 = vmatprep.mubr.bf16.mxu0 0
    %4159 = vmatmul.mubr.bf16.gmra.mrb[0].mxu0 %v4088
    %v4160 = vpop.f32.mrb[0].mxu0
    %v4161 = vadd.f32 %v3990, %v4160
    %v4162 = vpop.f32.mrb[0].mxu0
    %v4163 = vpop.f32.mrb[0].mxu0
    %v4164 = vadd.f32 %v3995, %v4163
    %v4165 = vpop.f32.mrb[0].mxu0
    %4166 = vmatprep.mubr.bf16.mxu0 0
    %4167 = vmatmul.mubr.bf16.gmra.mrb[0].mxu0 %v4091
    %v4168 = vpop.f32.mrb[0].mxu0
    %v4169 = vadd.f32 %v4000, %v4168
    %v4170 = vpop.f32.mrb[0].mxu0
    %v4171 = vpop.f32.mrb[0].mxu0
    %v4172 = vadd.f32 %v4005, %v4171
    %v4173 = vpop.f32.mrb[0].mxu0
    %4174 = vmatprep.mubr.bf16.mxu0 0
    %4175 = vmatmul.mubr.bf16.gmra.mrb[0].mxu0 %v4094
    %v4176 = vpop.f32.mrb[0].mxu0
    %v4177 = vadd.f32 %v4010, %v4176
    %v4178 = vpop.f32.mrb[0].mxu0
    %v4179 = vpop.f32.mrb[0].mxu0
    %v4180 = vadd.f32 %v4015, %v4179
    %v4181 = vpop.f32.mrb[0].mxu0
    %4182 = vmatprep.mubr.bf16.mxu0 0
    %4183 = vmatmul.mubr.bf16.gmra.mrb[0].mxu0 %v4097
    %v4184 = vpop.f32.mrb[0].mxu0
    %v4185 = vadd.f32 %v4020, %v4184
    %v4186 = vpop.f32.mrb[0].mxu0
    %v4187 = vpop.f32.mrb[0].mxu0
    %v4188 = vadd.f32 %v4025, %v4187
    %v4189 = vpop.f32.mrb[0].mxu0
    %4190 = vmatprep.mubr.bf16.mxu0 0
    %4191 = vmatmul.mubr.bf16.gmra.mrb[0].mxu0 %v4100
    %v4192 = vpop.f32.mrb[0].mxu0
    %v4193 = vadd.f32 %v4030, %v4192
    %v4194 = vpop.f32.mrb[0].mxu0
    %v4195 = vpop.f32.mrb[0].mxu0
    %v4196 = vadd.f32 %v4035, %v4195
    %v4197 = vpop.f32.mrb[0].mxu0
    %4198 = vdwg.mxu0
    %v4199 = vmul.f32 %v4137, 0.5
    %v4200 = vmul.f32 %v4140, 0.5
    %v4201 = vmul.f32 %v4145, 0.5
    %v4202 = vmul.f32 %v4148, 0.5
    %v4203 = vmul.f32 %v4153, 0.5
    %v4204 = vmul.f32 %v4156, 0.5
    %v4205 = vmul.f32 %v4161, 0.5
    %v4206 = vmul.f32 %v4164, 0.5
    %v4207 = vmul.f32 %v4169, 0.5
    %v4208 = vmul.f32 %v4172, 0.5
    %v4209 = vmul.f32 %v4177, 0.5
    %v4210 = vmul.f32 %v4180, 0.5
    %v4211 = vmul.f32 %v4185, 0.5
    %v4212 = vmul.f32 %v4188, 0.5
    %v4213 = vmul.f32 %v4193, 0.5
    %v4214 = vmul.f32 %v4196, 0.5
    %v4215 = vtanh.pop %v4199
    %v4216 = vtanh.pop %v4200
    %v4217 = vtanh.pop %v4201
    %v4218 = vtanh.pop %v4202
    %v4219 = vtanh.pop %v4203
    %v4220 = vtanh.pop %v4204
    %v4221 = vtanh.pop %v4205
    %v4222 = vtanh.pop %v4206
    %v4223 = vtanh.pop %v4207
    %v4224 = vtanh.pop %v4208
    %v4225 = vtanh.pop %v4209
    %v4226 = vtanh.pop %v4210
    %v4227 = vtanh.pop %v4211
    %v4228 = vtanh.pop %v4212
    %v4229 = vtanh.pop %v4213
    %v4230 = vtanh.pop %v4214
    %v4231 = vadd.f32 %v4215, 1.0
    %v4232 = vadd.f32 %v4216, 1.0
    %v4233 = vadd.f32 %v4217, 1.0
    %v4234 = vadd.f32 %v4218, 1.0
    %v4235 = vadd.f32 %v4219, 1.0
    %v4236 = vadd.f32 %v4220, 1.0
    %v4237 = vadd.f32 %v4221, 1.0
    %v4238 = vadd.f32 %v4222, 1.0
    %v4239 = vadd.f32 %v4223, 1.0
    %v4240 = vadd.f32 %v4224, 1.0
    %v4241 = vadd.f32 %v4225, 1.0
    %v4242 = vadd.f32 %v4226, 1.0
    %v4243 = vadd.f32 %v4227, 1.0
    %v4244 = vadd.f32 %v4228, 1.0
    %v4245 = vadd.f32 %v4229, 1.0
    %v4246 = vadd.f32 %v4230, 1.0
    %v4247 = vmul.f32 %v4231, 0.5
    %v4248 = vmul.f32 %v4232, 0.5
    %v4249 = vmul.f32 %v4233, 0.5
    %v4250 = vmul.f32 %v4234, 0.5
    %v4251 = vmul.f32 %v4235, 0.5
    %v4252 = vmul.f32 %v4236, 0.5
    %v4253 = vmul.f32 %v4237, 0.5
    %v4254 = vmul.f32 %v4238, 0.5
    %v4255 = vmul.f32 %v4239, 0.5
    %v4256 = vmul.f32 %v4240, 0.5
    %v4257 = vmul.f32 %v4241, 0.5
    %v4258 = vmul.f32 %v4242, 0.5
    %v4259 = vmul.f32 %v4243, 0.5
    %v4260 = vmul.f32 %v4244, 0.5
    %v4261 = vmul.f32 %v4245, 0.5
    %v4262 = vmul.f32 %v4246, 0.5
    %v4263 = vmul.f32 %v4137, %v4247
    %v4264 = vmul.f32 %v4140, %v4248
    %v4265 = vmul.f32 %v4145, %v4249
    %v4266 = vmul.f32 %v4148, %v4250
    %v4267 = vmul.f32 %v4153, %v4251
    %v4268 = vmul.f32 %v4156, %v4252
    %v4269 = vmul.f32 %v4161, %v4253
    %v4270 = vmul.f32 %v4164, %v4254
    %v4271 = vmul.f32 %v4169, %v4255
    %v4272 = vmul.f32 %v4172, %v4256
    %v4273 = vmul.f32 %v4177, %v4257
    %v4274 = vmul.f32 %v4180, %v4258
    %v4275 = vmul.f32 %v4185, %v4259
    %v4276 = vmul.f32 %v4188, %v4260
    %v4277 = vmul.f32 %v4193, %v4261
    %v4278 = vmul.f32 %v4196, %v4262
    %v4279 = vpack.c.bf16 %v4264, %v4263
    %v4280 = vpack.c.bf16 %v4266, %v4265
    %v4281 = vpack.c.bf16 %v4268, %v4267
    %v4282 = vpack.c.bf16 %v4270, %v4269
    %v4283 = vpack.c.bf16 %v4272, %v4271
    %v4284 = vpack.c.bf16 %v4274, %v4273
    %v4285 = vpack.c.bf16 %v4276, %v4275
    %v4286 = vpack.c.bf16 %v4278, %v4277
    %v4291 = vunpack.c.l.b16 %v3826
    %v4292 = vunpack.c.l.b16 %v3827
    %v4293 = vunpack.c.l.b16 %v3828
    %v4294 = vunpack.c.l.b16 %v3829
    %v4295 = vpack.c.b16 %v4292, %v4291
    %v4296 = vpack.c.b16 %v4294, %v4293
    %4299 = vmatprep.subr.bf16.mxu0 0
    %4300 = vmatpush1.bf16.msra.mxu0 %v4279
    %4301 = vmatprep.subr.bf16.mxu0 0
    %4302 = vmatpush1.bf16.msra.mxu0 %v4280
    %4303 = vmatprep.subr.bf16.mxu0 0
    %4304 = vmatpush1.bf16.msra.mxu0 %v4281
    %4305 = vmatprep.subr.bf16.mxu0 0
    %4306 = vmatpush1.bf16.msra.mxu0 %v4282
    %4307 = vmatprep.subr.bf16.mxu0 0
    %4308 = vmatpush1.bf16.msra.mxu0 %v4283
    %4309 = vmatprep.subr.bf16.mxu0 0
    %4310 = vmatpush1.bf16.msra.mxu0 %v4284
    %4311 = vmatprep.subr.bf16.mxu0 0
    %4312 = vmatpush1.bf16.msra.mxu0 %v4285
    %4313 = vmatprep.subr.bf16.mxu0 0
    %4314 = vmatpush1.bf16.msra.mxu0 %v4286
    %4315 = vmatprep.subr.bf16.mxu0 0
    %4316 = vmatpush1.bf16.msra.mxu0 0
    %4317 = vmatprep.subr.bf16.mxu0 0
    %4318 = vmatpush1.bf16.msra.mxu0 0
    %4319 = vmatprep.subr.bf16.mxu0 0
    %4320 = vmatpush1.bf16.msra.mxu0 0
    %4321 = vmatprep.subr.bf16.mxu0 0
    %4322 = vmatpush1.bf16.msra.mxu0 0
    %4323 = vmatprep.subr.bf16.mxu0 0
    %4324 = vmatpush1.bf16.msra.mxu0 0
    %4325 = vmatprep.subr.bf16.mxu0 0
    %4326 = vmatpush1.bf16.msra.mxu0 0
    %4327 = vmatprep.subr.bf16.mxu0 0
    %4328 = vmatpush1.bf16.msra.mxu0 0
    %4329 = vmatprep.subr.bf16.mxu0 0
    %4330 = vmatpush1.bf16.msra.mxu0 0
    %4331 = vmatprep.mubr.bf16.mxu0 0
    %4332 = vmatmul.mubr.bf16.gmra.mrb[0].mxu0 %v4295
    %v4333 = vpop.f32.mrb[0].mxu0
    %v4334 = vadd.f32 0.0, %v4333
    %v4335 = vpop.f32.mrb[0].mxu0
    %v4336 = vpop.f32.mrb[0].mxu0
    %v4337 = vadd.f32 0.0, %v4336
    %v4338 = vpop.f32.mrb[0].mxu0
    %4339 = vmatprep.mubr.bf16.mxu0 0
    %4340 = vmatmul.mubr.bf16.gmra.mrb[0].mxu0 %v4296
    %v4341 = vpop.f32.mrb[0].mxu0
    %v4342 = vadd.f32 0.0, %v4341
    %v4343 = vpop.f32.mrb[0].mxu0
    %v4344 = vpop.f32.mrb[0].mxu0
    %v4345 = vadd.f32 0.0, %v4344
    %v4346 = vpop.f32.mrb[0].mxu0
    %4347 = vdwg.mxu0
    %v4348 = vpack.c.bf16 %v4337, %v4334
    %v4349 = vpack.c.bf16 %v4345, %v4342
    %v4350 = vpack.c.bf16 %v3944, %v3941
    %v4351 = vpack.c.bf16 %v3952, %v3949
    %4352 = vset.pattern.permute.xlu0 1
    %4353 = vperm.xlu0 %4352, %v3732
    %v4354 = vpop.permute.xlu0 %4353
    %4356 = vset.pattern.permute.xlu0 1
    %4357 = vperm.xlu0 %4356, %v3735
    %v4358 = vpop.permute.xlu0 %4357
    %4360 = vset.pattern.permute.xlu0 1
    %4361 = vperm.xlu0 %4360, %v3740
    %v4362 = vpop.permute.xlu0 %4361
    %4364 = vset.pattern.permute.xlu0 1
    %4365 = vperm.xlu0 %4364, %v3743
    %v4366 = vpop.permute.xlu0 %4365
    %4368 = vset.pattern.permute.xlu0 1
    %4369 = vperm.xlu0 %4368, %v3748
    %v4370 = vpop.permute.xlu0 %4369
    %4372 = vset.pattern.permute.xlu0 1
    %4373 = vperm.xlu0 %4372, %v3751
    %v4374 = vpop.permute.xlu0 %4373
    %4376 = vset.pattern.permute.xlu0 1
    %4377 = vperm.xlu0 %4376, %v3756
    %v4378 = vpop.permute.xlu0 %4377
    %4380 = vset.pattern.permute.xlu0 1
    %4381 = vperm.xlu0 %4380, %v3759
    %v4382 = vpop.permute.xlu0 %4381
    %4384 = vset.pattern.permute.xlu0 1
    %4385 = vperm.xlu0 %4384, %v3764
    %v4386 = vpop.permute.xlu0 %4385
    %4388 = vset.pattern.permute.xlu0 1
    %4389 = vperm.xlu0 %4388, %v3767
    %v4390 = vpop.permute.xlu0 %4389
    %4392 = vset.pattern.permute.xlu0 1
    %4393 = vperm.xlu0 %4392, %v3772
    %v4394 = vpop.permute.xlu0 %4393
    %4396 = vset.pattern.permute.xlu0 1
    %4397 = vperm.xlu0 %4396, %v3775
    %v4398 = vpop.permute.xlu0 %4397
    %4400 = vset.pattern.permute.xlu0 1
    %4401 = vperm.xlu0 %4400, %v3780
    %v4402 = vpop.permute.xlu0 %4401
    %4404 = vset.pattern.permute.xlu0 1
    %4405 = vperm.xlu0 %4404, %v3783
    %v4406 = vpop.permute.xlu0 %4405
    %4408 = vset.pattern.permute.xlu0 1
    %4409 = vperm.xlu0 %4408, %v3788
    %v4410 = vpop.permute.xlu0 %4409
    %4412 = vset.pattern.permute.xlu0 1
    %4413 = vperm.xlu0 %4412, %v3791
    %v4414 = vpop.permute.xlu0 %4413
    %4416 = vmatprep.subr.bf16.mxu0 0
    %4417 = vmatpush1.bf16.msra.mxu0 %v4350
    %4418 = vmatprep.subr.bf16.mxu0 0
    %4419 = vmatpush1.bf16.msra.mxu0 %v4351
    %4420 = vmatprep.subr.bf16.mxu0 0
    %4421 = vmatpush1.bf16.msra.mxu0 0
    %4422 = vmatprep.subr.bf16.mxu0 0
    %4423 = vmatpush1.bf16.msra.mxu0 0
    %4424 = vmatprep.subr.bf16.mxu0 0
    %4425 = vmatpush1.bf16.msra.mxu0 0
    %4426 = vmatprep.subr.bf16.mxu0 0
    %4427 = vmatpush1.bf16.msra.mxu0 0
    %4428 = vmatprep.subr.bf16.mxu0 0
    %4429 = vmatpush1.bf16.msra.mxu0 0
    %4430 = vmatprep.subr.bf16.mxu0 0
    %4431 = vmatpush1.bf16.msra.mxu0 0
    %4432 = vmatprep.subr.bf16.mxu0 0
    %4433 = vmatpush1.bf16.msra.mxu0 0
    %4434 = vmatprep.subr.bf16.mxu0 0
    %4435 = vmatpush1.bf16.msra.mxu0 0
    %4436 = vmatprep.subr.bf16.mxu0 0
    %4437 = vmatpush1.bf16.msra.mxu0 0
    %4438 = vmatprep.subr.bf16.mxu0 0
    %4439 = vmatpush1.bf16.msra.mxu0 0
    %4440 = vmatprep.subr.bf16.mxu0 0
    %4441 = vmatpush1.bf16.msra.mxu0 0
    %4442 = vmatprep.subr.bf16.mxu0 0
    %4443 = vmatpush1.bf16.msra.mxu0 0
    %4444 = vmatprep.subr.bf16.mxu0 0
    %4445 = vmatpush1.bf16.msra.mxu0 0
    %4446 = vmatprep.subr.bf16.mxu0 0
    %4447 = vmatpush1.bf16.msra.mxu0 0
    %4448 = vmatprep.mubr.bf16.mxu0 0
    %4449 = vmatmul.mubr.bf16.gmra.mrb[0].mxu0 %v4079
    %v4450 = vpop.f32.mrb[0].mxu0
    %v4451 = vadd.f32 %v4354, %v4450
    %v4452 = vpop.f32.mrb[0].mxu0
    %v4453 = vpop.f32.mrb[0].mxu0
    %v4454 = vadd.f32 %v4358, %v4453
    %v4455 = vpop.f32.mrb[0].mxu0
    %4456 = vmatprep.mubr.bf16.mxu0 0
    %4457 = vmatmul.mubr.bf16.gmra.mrb[0].mxu0 %v4082
    %v4458 = vpop.f32.mrb[0].mxu0
    %v4459 = vadd.f32 %v4362, %v4458
    %v4460 = vpop.f32.mrb[0].mxu0
    %v4461 = vpop.f32.mrb[0].mxu0
    %v4462 = vadd.f32 %v4366, %v4461
    %v4463 = vpop.f32.mrb[0].mxu0
    %4464 = vmatprep.mubr.bf16.mxu0 0
    %4465 = vmatmul.mubr.bf16.gmra.mrb[0].mxu0 %v4085
    %v4466 = vpop.f32.mrb[0].mxu0
    %v4467 = vadd.f32 %v4370, %v4466
    %v4468 = vpop.f32.mrb[0].mxu0
    %v4469 = vpop.f32.mrb[0].mxu0
    %v4470 = vadd.f32 %v4374, %v4469
    %v4471 = vpop.f32.mrb[0].mxu0
    %4472 = vmatprep.mubr.bf16.mxu0 0
    %4473 = vmatmul.mubr.bf16.gmra.mrb[0].mxu0 %v4088
    %v4474 = vpop.f32.mrb[0].mxu0
    %v4475 = vadd.f32 %v4378, %v4474
    %v4476 = vpop.f32.mrb[0].mxu0
    %v4477 = vpop.f32.mrb[0].mxu0
    %v4478 = vadd.f32 %v4382, %v4477
    %v4479 = vpop.f32.mrb[0].mxu0
    %4480 = vmatprep.mubr.bf16.mxu0 0
    %4481 = vmatmul.mubr.bf16.gmra.mrb[0].mxu0 %v4091
    %v4482 = vpop.f32.mrb[0].mxu0
    %v4483 = vadd.f32 %v4386, %v4482
    %v4484 = vpop.f32.mrb[0].mxu0
    %v4485 = vpop.f32.mrb[0].mxu0
    %v4486 = vadd.f32 %v4390, %v4485
    %v4487 = vpop.f32.mrb[0].mxu0
    %4488 = vmatprep.mubr.bf16.mxu0 0
    %4489 = vmatmul.mubr.bf16.gmra.mrb[0].mxu0 %v4094
    %v4490 = vpop.f32.mrb[0].mxu0
    %v4491 = vadd.f32 %v4394, %v4490
    %v4492 = vpop.f32.mrb[0].mxu0
    %v4493 = vpop.f32.mrb[0].mxu0
    %v4494 = vadd.f32 %v4398, %v4493
    %v4495 = vpop.f32.mrb[0].mxu0
    %4496 = vmatprep.mubr.bf16.mxu0 0
    %4497 = vmatmul.mubr.bf16.gmra.mrb[0].mxu0 %v4097
    %v4498 = vpop.f32.mrb[0].mxu0
    %v4499 = vadd.f32 %v4402, %v4498
    %v4500 = vpop.f32.mrb[0].mxu0
    %v4501 = vpop.f32.mrb[0].mxu0
    %v4502 = vadd.f32 %v4406, %v4501
    %v4503 = vpop.f32.mrb[0].mxu0
    %4504 = vmatprep.mubr.bf16.mxu0 0
    %4505 = vmatmul.mubr.bf16.gmra.mrb[0].mxu0 %v4100
    %v4506 = vpop.f32.mrb[0].mxu0
    %v4507 = vadd.f32 %v4410, %v4506
    %v4508 = vpop.f32.mrb[0].mxu0
    %v4509 = vpop.f32.mrb[0].mxu0
    %v4510 = vadd.f32 %v4414, %v4509
    %v4511 = vpop.f32.mrb[0].mxu0
    %4512 = vdwg.mxu0
    %v4513 = vmul.f32 %v4451, 0.5
    %v4514 = vmul.f32 %v4454, 0.5
    %v4515 = vmul.f32 %v4459, 0.5
    %v4516 = vmul.f32 %v4462, 0.5
    %v4517 = vmul.f32 %v4467, 0.5
    %v4518 = vmul.f32 %v4470, 0.5
    %v4519 = vmul.f32 %v4475, 0.5
    %v4520 = vmul.f32 %v4478, 0.5
    %v4521 = vmul.f32 %v4483, 0.5
    %v4522 = vmul.f32 %v4486, 0.5
    %v4523 = vmul.f32 %v4491, 0.5
    %v4524 = vmul.f32 %v4494, 0.5
    %v4525 = vmul.f32 %v4499, 0.5
    %v4526 = vmul.f32 %v4502, 0.5
    %v4527 = vmul.f32 %v4507, 0.5
    %v4528 = vmul.f32 %v4510, 0.5
    %v4529 = vtanh.pop %v4513
    %v4530 = vtanh.pop %v4514
    %v4531 = vtanh.pop %v4515
    %v4532 = vtanh.pop %v4516
    %v4533 = vtanh.pop %v4517
    %v4534 = vtanh.pop %v4518
    %v4535 = vtanh.pop %v4519
    %v4536 = vtanh.pop %v4520
    %v4537 = vtanh.pop %v4521
    %v4538 = vtanh.pop %v4522
    %v4539 = vtanh.pop %v4523
    %v4540 = vtanh.pop %v4524
    %v4541 = vtanh.pop %v4525
    %v4542 = vtanh.pop %v4526
    %v4543 = vtanh.pop %v4527
    %v4544 = vtanh.pop %v4528
    %v4545 = vadd.f32 %v4529, 1.0
    %v4546 = vadd.f32 %v4530, 1.0
    %v4547 = vadd.f32 %v4531, 1.0
    %v4548 = vadd.f32 %v4532, 1.0
    %v4549 = vadd.f32 %v4533, 1.0
    %v4550 = vadd.f32 %v4534, 1.0
    %v4551 = vadd.f32 %v4535, 1.0
    %v4552 = vadd.f32 %v4536, 1.0
    %v4553 = vadd.f32 %v4537, 1.0
    %v4554 = vadd.f32 %v4538, 1.0
    %v4555 = vadd.f32 %v4539, 1.0
    %v4556 = vadd.f32 %v4540, 1.0
    %v4557 = vadd.f32 %v4541, 1.0
    %v4558 = vadd.f32 %v4542, 1.0
    %v4559 = vadd.f32 %v4543, 1.0
    %v4560 = vadd.f32 %v4544, 1.0
    %v4561 = vmul.f32 %v4545, 0.5
    %v4562 = vmul.f32 %v4546, 0.5
    %v4563 = vmul.f32 %v4547, 0.5
    %v4564 = vmul.f32 %v4548, 0.5
    %v4565 = vmul.f32 %v4549, 0.5
    %v4566 = vmul.f32 %v4550, 0.5
    %v4567 = vmul.f32 %v4551, 0.5
    %v4568 = vmul.f32 %v4552, 0.5
    %v4569 = vmul.f32 %v4553, 0.5
    %v4570 = vmul.f32 %v4554, 0.5
    %v4571 = vmul.f32 %v4555, 0.5
    %v4572 = vmul.f32 %v4556, 0.5
    %v4573 = vmul.f32 %v4557, 0.5
    %v4574 = vmul.f32 %v4558, 0.5
    %v4575 = vmul.f32 %v4559, 0.5
    %v4576 = vmul.f32 %v4560, 0.5
    %v4577 = vmul.f32 %v4451, %v4561
    %v4578 = vmul.f32 %v4454, %v4562
    %v4579 = vmul.f32 %v4459, %v4563
    %v4580 = vmul.f32 %v4462, %v4564
    %v4581 = vmul.f32 %v4467, %v4565
    %v4582 = vmul.f32 %v4470, %v4566
    %v4583 = vmul.f32 %v4475, %v4567
    %v4584 = vmul.f32 %v4478, %v4568
    %v4585 = vmul.f32 %v4483, %v4569
    %v4586 = vmul.f32 %v4486, %v4570
    %v4587 = vmul.f32 %v4491, %v4571
    %v4588 = vmul.f32 %v4494, %v4572
    %v4589 = vmul.f32 %v4499, %v4573
    %v4590 = vmul.f32 %v4502, %v4574
    %v4591 = vmul.f32 %v4507, %v4575
    %v4592 = vmul.f32 %v4510, %v4576
    %v4593 = vpack.c.bf16 %v4578, %v4577
    %v4594 = vpack.c.bf16 %v4580, %v4579
    %v4595 = vpack.c.bf16 %v4582, %v4581
    %v4596 = vpack.c.bf16 %v4584, %v4583
    %v4597 = vpack.c.bf16 %v4586, %v4585
    %v4598 = vpack.c.bf16 %v4588, %v4587
    %v4599 = vpack.c.bf16 %v4590, %v4589
    %v4600 = vpack.c.bf16 %v4592, %v4591
    %4601 = vmatprep.subr.bf16.mxu0 0
    %4602 = vmatpush1.bf16.msra.mxu0 %v4593
    %4603 = vmatprep.subr.bf16.mxu0 0
    %4604 = vmatpush1.bf16.msra.mxu0 %v4594
    %4605 = vmatprep.subr.bf16.mxu0 0
    %4606 = vmatpush1.bf16.msra.mxu0 %v4595
    %4607 = vmatprep.subr.bf16.mxu0 0
    %4608 = vmatpush1.bf16.msra.mxu0 %v4596
    %4609 = vmatprep.subr.bf16.mxu0 0
    %4610 = vmatpush1.bf16.msra.mxu0 %v4597
    %4611 = vmatprep.subr.bf16.mxu0 0
    %4612 = vmatpush1.bf16.msra.mxu0 %v4598
    %4613 = vmatprep.subr.bf16.mxu0 0
    %4614 = vmatpush1.bf16.msra.mxu0 %v4599
    %4615 = vmatprep.subr.bf16.mxu0 0
    %4616 = vmatpush1.bf16.msra.mxu0 %v4600
    %4617 = vmatprep.subr.bf16.mxu0 0
    %4618 = vmatpush1.bf16.msra.mxu0 0
    %4619 = vmatprep.subr.bf16.mxu0 0
    %4620 = vmatpush1.bf16.msra.mxu0 0
    %4621 = vmatprep.subr.bf16.mxu0 0
    %4622 = vmatpush1.bf16.msra.mxu0 0
    %4623 = vmatprep.subr.bf16.mxu0 0
    %4624 = vmatpush1.bf16.msra.mxu0 0
    %4625 = vmatprep.subr.bf16.mxu0 0
    %4626 = vmatpush1.bf16.msra.mxu0 0
    %4627 = vmatprep.subr.bf16.mxu0 0
    %4628 = vmatpush1.bf16.msra.mxu0 0
    %4629 = vmatprep.subr.bf16.mxu0 0
    %4630 = vmatpush1.bf16.msra.mxu0 0
    %4631 = vmatprep.subr.bf16.mxu0 0
    %4632 = vmatpush1.bf16.msra.mxu0 0
    %4633 = vmatprep.mubr.bf16.mxu0 0
    %4634 = vmatmul.mubr.bf16.gmra.mrb[0].mxu0 %v4295
    %v4635 = vpop.f32.mrb[0].mxu0
    %v4636 = vadd.f32 0.0, %v4635
    %v4637 = vpop.f32.mrb[0].mxu0
    %v4638 = vpop.f32.mrb[0].mxu0
    %v4639 = vadd.f32 0.0, %v4638
    %v4640 = vpop.f32.mrb[0].mxu0
    %4641 = vmatprep.mubr.bf16.mxu0 0
    %4642 = vmatmul.mubr.bf16.gmra.mrb[0].mxu0 %v4296
    %v4643 = vpop.f32.mrb[0].mxu0
    %v4644 = vadd.f32 0.0, %v4643
    %v4645 = vpop.f32.mrb[0].mxu0
    %v4646 = vpop.f32.mrb[0].mxu0
    %v4647 = vadd.f32 0.0, %v4646
    %v4648 = vpop.f32.mrb[0].mxu0
    %4649 = vdwg.mxu0
    %v4650 = vpack.c.bf16 %v4639, %v4636
    %v4651 = vpack.c.bf16 %v4647, %v4644
    %4652 = vmatprep.subr.bf16.mxu0 0
    %4653 = vmatpush1.bf16.msra.mxu0 %v3874
    %4654 = vmatprep.subr.bf16.mxu0 0
    %4655 = vmatpush1.bf16.msra.mxu0 %v3875
    %4656 = vmatprep.subr.bf16.mxu0 0
    %4657 = vmatpush1.bf16.msra.mxu0 %v3876
    %4658 = vmatprep.subr.bf16.mxu0 0
    %4659 = vmatpush1.bf16.msra.mxu0 %v3877
    %4660 = vmatprep.subr.bf16.mxu0 0
    %4661 = vmatpush1.bf16.msra.mxu0 %v3878
    %4662 = vmatprep.subr.bf16.mxu0 0
    %4663 = vmatpush1.bf16.msra.mxu0 %v3879
    %4664 = vmatprep.subr.bf16.mxu0 0
    %4665 = vmatpush1.bf16.msra.mxu0 %v3880
    %4666 = vmatprep.subr.bf16.mxu0 0
    %4667 = vmatpush1.bf16.msra.mxu0 %v3881
    %4668 = vmatprep.subr.bf16.mxu0 0
    %4669 = vmatpush1.bf16.msra.mxu0 0
    %4670 = vmatprep.subr.bf16.mxu0 0
    %4671 = vmatpush1.bf16.msra.mxu0 0
    %4672 = vmatprep.subr.bf16.mxu0 0
    %4673 = vmatpush1.bf16.msra.mxu0 0
    %4674 = vmatprep.subr.bf16.mxu0 0
    %4675 = vmatpush1.bf16.msra.mxu0 0
    %4676 = vmatprep.subr.bf16.mxu0 0
    %4677 = vmatpush1.bf16.msra.mxu0 0
    %4678 = vmatprep.subr.bf16.mxu0 0
    %4679 = vmatpush1.bf16.msra.mxu0 0
    %4680 = vmatprep.subr.bf16.mxu0 0
    %4681 = vmatpush1.bf16.msra.mxu0 0
    %4682 = vmatprep.subr.bf16.mxu0 0
    %4683 = vmatpush1.bf16.msra.mxu0 0
    %4684 = vmatprep.mubr.bf16.mxu0 0
    %4685 = vmatmul.mubr.bf16.gmra.mrb[0].mxu0 %v4348
    %v4686 = vpop.f32.mrb[0].mxu0
    %v4687 = vadd.f32 0.0, %v4686
    %v4688 = vpop.f32.mrb[0].mxu0
    %v4689 = vpop.f32.mrb[0].mxu0
    %v4690 = vadd.f32 0.0, %v4689
    %v4691 = vpop.f32.mrb[0].mxu0
    %4692 = vmatprep.mubr.bf16.mxu0 0
    %4693 = vmatmul.mubr.bf16.gmra.mrb[0].mxu0 %v4349
    %v4694 = vpop.f32.mrb[0].mxu0
    %v4695 = vadd.f32 0.0, %v4694
    %v4696 = vpop.f32.mrb[0].mxu0
    %v4697 = vpop.f32.mrb[0].mxu0
    %v4698 = vadd.f32 0.0, %v4697
    %v4699 = vpop.f32.mrb[0].mxu0
    %4700 = vmatprep.mubr.bf16.mxu0 0
    %4701 = vmatmul.mubr.bf16.gmra.mrb[0].mxu0 %v4650
    %v4702 = vpop.f32.mrb[0].mxu0
    %v4703 = vadd.f32 0.0, %v4702
    %v4704 = vpop.f32.mrb[0].mxu0
    %v4705 = vpop.f32.mrb[0].mxu0
    %v4706 = vadd.f32 0.0, %v4705
    %v4707 = vpop.f32.mrb[0].mxu0
    %4708 = vmatprep.mubr.bf16.mxu0 0
    %4709 = vmatmul.mubr.bf16.gmra.mrb[0].mxu0 %v4651
    %v4710 = vpop.f32.mrb[0].mxu0
    %v4711 = vadd.f32 0.0, %v4710
    %v4712 = vpop.f32.mrb[0].mxu0
    %v4713 = vpop.f32.mrb[0].mxu0
    %v4714 = vadd.f32 0.0, %v4713
    %v4715 = vpop.f32.mrb[0].mxu0
    %4716 = vdwg.mxu0
    %v4717 = vld [vmem:[%s7] sm:$0xff]
    %v4718 = vld [vmem:[%s7 + $0x8] sm:$0xff]
    %v4719 = vld [vmem:[%s7 + $0x10] sm:$0xff]
    %v4720 = vld [vmem:[%s7 + $0x18] sm:$0xff]
    %4722 = vset.pattern.permute.xlu0 0
    %4723 = vperm.xlu0 %4722, %v4717
    %v4724 = vpop.permute.xlu0 %4723
    %4727 = vset.pattern.permute.xlu0 0
    %4728 = vperm.xlu0 %4727, %v4718
    %v4729 = vpop.permute.xlu0 %4728
    %4732 = vset.pattern.permute.xlu0 0
    %4733 = vperm.xlu0 %4732, %v4719
    %v4734 = vpop.permute.xlu0 %4733
    %4737 = vset.pattern.permute.xlu0 0
    %4738 = vperm.xlu0 %4737, %v4720
    %v4739 = vpop.permute.xlu0 %4738
    %v4741 = vadd.f32 %v4687, %v4724
    %v4742 = vadd.f32 %v4690, %v4729
    %v4743 = vadd.f32 %v4695, %v4734
    %v4744 = vadd.f32 %v4698, %v4739
    %v4745 = vadd.f32 %v4703, %v4724
    %v4746 = vadd.f32 %v4706, %v4729
    %v4747 = vadd.f32 %v4711, %v4734
    %v4748 = vadd.f32 %v4714, %v4739
    %4749 = vst [vmem:[#allocation5] sm:$0xff] %v4741
    %4750 = vst [vmem:[#allocation5 + $0x8] sm:$0xff] %v4742
    %4751 = vst [vmem:[#allocation5 + $0x10] sm:$0xff] %v4743
    %4752 = vst [vmem:[#allocation5 + $0x18] sm:$0xff] %v4744
    %4753 = vst [vmem:[#allocation5 + $0x20] sm:$0xff] %v4745
    %4754 = vst [vmem:[#allocation5 + $0x28] sm:$0xff] %v4746
    %4755 = vst [vmem:[#allocation5 + $0x30] sm:$0xff] %v4747
    %4756 = vst [vmem:[#allocation5 + $0x38] sm:$0xff] %v4748
    // Predicated region
    $region38: #{tpu_custom_call.1} parent=1 // pred_check
      _
    $region39: #{tpu_custom_call.1} parent=1 // pred_check_branch
      %4758 = sbr.rel (0) target = $region41
    $region40: #{tpu_custom_call.1} parent=1 // pred_region
      %s4760 = ssub.s32 1024, 1024
      %4761 = vsyncadd [#allocation3], %s4760
      %s4762 = sshll.u32 [#allocation5], 4
      %s4763 = int_to_ptr.vmem [resolvable:$true] %s4762
      %4768 = dma.vmem_to_hbm [thread:$0]  %s4763, 1024, %s8, [#allocation3], 128, 128, 8
    $region41: #{tpu_custom_call.1} parent=1 // pred_fallthru
      _
    // Predicated region
    $region42: #{tpu_custom_call.1} parent=1 // pred_check
      _
    $region43: #{tpu_custom_call.1} parent=1 // pred_check_branch
      %4770 = sbr.rel (0) target = $region45
    $region44: #{tpu_custom_call.1} parent=1 // pred_region
      %4771 = dma.done [#allocation3], 1024
    $region45: #{tpu_custom_call.1} parent=1 // pred_fallthru
      _
    %4772 = vsyncpa [#allocation3], 1
    %4773 = vsyncpa [#allocation4], 1

</llo_original>
